<compile_context>
chip_gen: v5e
topology: v5e:2x2
jax: 0.10.0
libtpu: 0.0.40
codegen_flags: <defaults>
</compile_context>

<pallas_src>
import math
import functools

import jax
import jax.numpy as jnp
from jax.experimental import pallas as pl
from jax.experimental.pallas import tpu as pltpu


MXU_DTYPE = jnp.bfloat16          # feed bf16 to the MXU, accumulate in f32
VMEM_LIMIT = 48 * 1024 * 1024     # explicit VMEM budget (fits v7x's 64 MiB)


def _gelu(x):
    # TODO(synk): PyTorch F.gelu defaults to exact erf-GELU; the tanh
    # approximation is used in-kernel for guaranteed Mosaic lowering.
    return jax.nn.gelu(x, approximate=True)


def _layernorm(y, g, b, eps=1e-5):
    mu = jnp.mean(y, axis=-1, keepdims=True)
    var = jnp.mean(jnp.square(y - mu), axis=-1, keepdims=True)
    return (y - mu) * jax.lax.rsqrt(var + eps) * g + b


def _pick_batch_tile(batch, seq, target_rows=256):
    """Largest batch tile with TB*S <= target_rows that divides B, while keeping
    the grid length >= 2 when possible (megacore / v7x's two TensorCores)."""
    tb = max(1, min(batch, max(1, target_rows // max(seq, 1))))
    while batch % tb:
        tb -= 1
    if batch >= 2 and batch // tb < 2:
        tb = max(1, batch // 2)
        while batch % tb:
            tb -= 1
    return tb


def _full_spec(arr):
    nd = arr.ndim
    return pl.BlockSpec(arr.shape, lambda *_: (0,) * nd)


# ----------------------- input projection (+ pos enc) ------------------------

def _inproj_kernel(x_ref, w_ref, b_ref, pos_ref, o_ref, *, scale):
    tb, s, f = x_ref.shape
    d = w_ref.shape[1]
    x2 = x_ref[...].astype(MXU_DTYPE).reshape(tb * s, f)
    y = jnp.dot(x2, w_ref[...], preferred_element_type=jnp.float32) + b_ref[...]
    o_ref[...] = (y * scale).reshape(tb, s, d) + pos_ref[...][None]


def input_projection(X, w, b, pos, scale, tb):
    B, S, F = X.shape
    D = w.shape[1]
    return pl.pallas_call(
        functools.partial(_inproj_kernel, scale=scale),
        grid=(B // tb,),
        in_specs=[
            pl.BlockSpec((tb, S, F), lambda i: (i, 0, 0)),
            _full_spec(w), _full_spec(b), _full_spec(pos),
        ],
        out_specs=pl.BlockSpec((tb, S, D), lambda i: (i, 0, 0)),
        out_shape=jax.ShapeDtypeStruct((B, S, D), jnp.float32),
        compiler_params=pltpu.CompilerParams(
            dimension_semantics=("parallel",), vmem_limit_bytes=VMEM_LIMIT),
    )(X, w, b, pos)


# ------------------- fused transformer layer (MHA + FFN) ---------------------

def _layer_kernel(x_ref, kmask_ref, omask_ref,
                  wq_ref, wk_ref, wv_ref, bq_ref, bk_ref, bv_ref,
                  wo_ref, bo_ref, g1_ref, be1_ref,
                  w1_ref, b1_ref, w2_ref, b2_ref, g2_ref, be2_ref,
                  o_ref, *, n_heads, scale, final_act):
    tb, s, d = x_ref.shape
    h = n_heads
    n = tb * h

    x = x_ref[...]                                     # (TB, S, D) f32
    x2 = x.reshape(tb * s, d)

    # ---- head-batched q/k/v projections: single batched dot per tensor -----
    xh = jnp.broadcast_to(x.astype(MXU_DTYPE)[:, None], (tb, h, s, d))
    xh = xh.reshape(n, s, d)                           # batch dim = TB*H

    def per_head(ref):                                 # (H, a, b) -> (TB*H, a, b)
        w = ref[...]
        return jnp.broadcast_to(w[None], (tb,) + w.shape).reshape(
            (n,) + w.shape[1:])

    q = jnp.einsum('nsd,ndf->nsf', xh, per_head(wq_ref),
                   preferred_element_type=jnp.float32) + per_head(bq_ref)
    k = jnp.einsum('nsd,ndf->nsf', xh, per_head(wk_ref),
                   preferred_element_type=jnp.float32) + per_head(bk_ref)
    v = jnp.einsum('nsd,ndf->nsf', xh, per_head(wv_ref),
                   preferred_element_type=jnp.float32) + per_head(bv_ref)

    # ---- scaled scores + key-padding bias + softmax (f32) ------------------
    kbias = jnp.where(kmask_ref[...] > 0.0, 0.0, -1e9)            # (TB, 1, S)
    kbias = jnp.broadcast_to(kbias[:, None], (tb, h, 1, s)).reshape(n, 1, s)
    sc = jnp.einsum('nqf,nkf->nqk', q.astype(MXU_DTYPE), k.astype(MXU_DTYPE),
                    preferred_element_type=jnp.float32) * scale + kbias
    sc = sc - jnp.max(sc, axis=-1, keepdims=True)
    p = jnp.exp(sc)
    p = p / jnp.sum(p, axis=-1, keepdims=True)         # exact normalization

    # ---- PV + per-head output projection (summed over heads) ---------------
    ov = jnp.einsum('nqk,nkf->nqf', p.astype(MXU_DTYPE), v.astype(MXU_DTYPE),
                    preferred_element_type=jnp.float32)            # (N, S, dh)
    pr = jnp.einsum('nqf,nfe->nqe', ov.astype(MXU_DTYPE), per_head(wo_ref),
                    preferred_element_type=jnp.float32)            # (N, S, D)
    attn = jnp.sum(pr.reshape(tb, h, s, d), axis=1).reshape(tb * s, d)
    attn = attn + bo_ref[...]

    # ---- residual + LayerNorm1 (post-norm) ----------------------------------
    y = _layernorm(x2 + attn, g1_ref[...], be1_ref[...])

    # ---- feed-forward: linear -> GELU -> linear (flattened TB*S rows) -------
    hmid = jnp.dot(y.astype(MXU_DTYPE), w1_ref[...],
                   preferred_element_type=jnp.float32) + b1_ref[...]
    hmid = _gelu(hmid)
    z = jnp.dot(hmid.astype(MXU_DTYPE), w2_ref[...],
                preferred_element_type=jnp.float32) + b2_ref[...]

    # ---- residual + LayerNorm2 ----------------------------------------------
    out = _layernorm(y + z, g2_ref[...], be2_ref[...])

    if final_act:
        # classifier-head prologue fused into the last layer: GELU activation
        # + zeroing of padded timesteps (dropout is identity in eval mode).
        out = _gelu(out) * omask_ref[...].reshape(tb * s, 1)

    o_ref[...] = out.reshape(tb, s, d)


def transformer_layer(x, kmask, omask, lw, n_heads, tb, final_act):
    B, S, D = x.shape
    scale = 1.0 / math.sqrt(D // n_heads)
    weights = (lw["wq"], lw["wk"], lw["wv"], lw["bq"], lw["bk"], lw["bv"],
               lw["wo"], lw["bo"], lw["ln1_g"], lw["ln1_b"],
               lw["w1"], lw["b1"], lw["w2"], lw["b2"],
               lw["ln2_g"], lw["ln2_b"])
    # TODO(synk): on v7x, mark the constant-index weight specs with
    # pipeline_mode=pl.Buffered(1) so they are not double-buffered in its
    # 64 MiB VMEM.
    return pl.pallas_call(
        functools.partial(_layer_kernel, n_heads=n_heads, scale=scale,
                          final_act=final_act),
        grid=(B // tb,),
        in_specs=[
            pl.BlockSpec((tb, S, D), lambda i: (i, 0, 0)),
            pl.BlockSpec((tb, 1, S), lambda i: (i, 0, 0)),
            pl.BlockSpec((tb, S, 1), lambda i: (i, 0, 0)),
        ] + [_full_spec(w) for w in weights],
        out_specs=pl.BlockSpec((tb, S, D), lambda i: (i, 0, 0)),
        out_shape=jax.ShapeDtypeStruct((B, S, D), jnp.float32),
        compiler_params=pltpu.CompilerParams(
            dimension_semantics=("parallel",), vmem_limit_bytes=VMEM_LIMIT),
    )(x, kmask, omask, *weights)


# ------------------ classifier head: K-tiled matmul + sigmoid ----------------

def _head_kernel(x_ref, w_ref, b_ref, o_ref, acc_ref):
    kstep = pl.program_id(0)

    @pl.when(kstep == 0)
    def _():
        acc_ref[...] = jnp.broadcast_to(b_ref[...], acc_ref.shape)

    acc_ref[...] += jnp.dot(x_ref[...].astype(MXU_DTYPE), w_ref[...],
                            preferred_element_type=jnp.float32)

    @pl.when(kstep == pl.num_programs(0) - 1)
    def _():
        o_ref[...] = jax.nn.sigmoid(acc_ref[...])


def output_head(x_flat, w_pad, b_pad, num_classes):
    B, K = x_flat.shape
    Cp = w_pad.shape[1]                       # 128-lane-padded class dim
    tk = K
    if K % 128 == 0:
        for cand in (512, 256, 128):
            if K % cand == 0 and K // cand >= 2:
                tk = cand
                break
    out = pl.pallas_call(
        _head_kernel,
        grid=(K // tk,),
        in_specs=[
            pl.BlockSpec((B, tk), lambda k: (0, k)),
            pl.BlockSpec((tk, Cp), lambda k: (k, 0)),
            _full_spec(b_pad),
        ],
        out_specs=pl.BlockSpec((B, Cp), lambda k: (0, 0)),
        out_shape=jax.ShapeDtypeStruct((B, Cp), jnp.float32),
        scratch_shapes=[pltpu.VMEM((B, Cp), jnp.float32)],
        compiler_params=pltpu.CompilerParams(
            dimension_semantics=("arbitrary",), vmem_limit_bytes=VMEM_LIMIT),
    )(x_flat, w_pad, b_pad)
    return out[:, :num_classes]


# ------------------------------ parameter init --------------------------------

def init_params(key, feat_dim, max_len, d_model, n_heads, num_layers,
                dim_ff, num_classes):
    H, dh = n_heads, d_model // n_heads
    keys = jax.random.split(key, 3 + num_layers)

    def dense(k, fan_in, fan_out):
        kw, kb = jax.random.split(k)
        lim = 1.0 / math.sqrt(fan_in)
        w = jax.random.uniform(kw, (fan_in, fan_out), jnp.float32, -lim, lim)
        b = jax.random.uniform(kb, (fan_out,), jnp.float32, -lim, lim)
        return w, b

    params = {}
    pw, pb = dense(keys[0], feat_dim, d_model)
    params["proj_w"] = pw.astype(MXU_DTYPE)
    params["proj_b"] = pb.reshape(1, d_model)
    # learnable positional encoding, uniform(-0.02, 0.02) like mvts_transformer
    params["pos"] = jax.random.uniform(keys[1], (max_len, d_model), jnp.float32,
                                       -0.02, 0.02)

    def to_heads_in(w):   # (D, D) -> (H, D, dh): per-head input-proj layout
        return jnp.transpose(w.reshape(d_model, H, dh), (1, 0, 2)).astype(MXU_DTYPE)

    layers = []
    for l in range(num_layers):
        k = jax.random.split(keys[2 + l], 6)
        wq, bq = dense(k[0], d_model, d_model)
        wk, bk = dense(k[1], d_model, d_model)
        wv, bv = dense(k[2], d_model, d_model)
        wo, bo = dense(k[3], d_model, d_model)
        w1, b1 = dense(k[4], d_model, dim_ff)
        w2, b2 = dense(k[5], dim_ff, d_model)
        layers.append({
            "wq": to_heads_in(wq), "wk": to_heads_in(wk), "wv": to_heads_in(wv),
            "bq": bq.reshape(H, 1, dh), "bk": bk.reshape(H, 1, dh),
            "bv": bv.reshape(H, 1, dh),
            "wo": wo.reshape(H, dh, d_model).astype(MXU_DTYPE),
            "bo": bo.reshape(1, d_model),
            "ln1_g": jnp.ones((1, d_model), jnp.float32),
            "ln1_b": jnp.zeros((1, d_model), jnp.float32),
            "w1": w1.astype(MXU_DTYPE), "b1": b1.reshape(1, dim_ff),
            "w2": w2.astype(MXU_DTYPE), "b2": b2.reshape(1, d_model),
            "ln2_g": jnp.ones((1, d_model), jnp.float32),
            "ln2_b": jnp.zeros((1, d_model), jnp.float32),
        })
    params["layers"] = layers

    ow, ob = dense(keys[2 + num_layers], d_model * max_len, num_classes)
    cpad = ((num_classes + 127) // 128) * 128          # lane-dense head output
    w_pad = jnp.zeros((d_model * max_len, cpad), jnp.float32)
    w_pad = w_pad.at[:, :num_classes].set(ow)
    b_pad = jnp.zeros((1, cpad), jnp.float32).at[:, :num_classes].set(
        ob.reshape(1, num_classes))
    params["out_w"] = w_pad.astype(MXU_DTYPE)
    params["out_b"] = b_pad
    return params


# -------------------------------- forward pass --------------------------------

def forward(params, X, padding_masks, *, d_model, n_heads, num_classes):
    """X: (B, S, feat_dim) f32; padding_masks: (B, S) bool (True = keep)."""
    B, S, _ = X.shape
    tb = _pick_batch_tile(B, S)
    maskf = padding_masks.astype(jnp.float32)
    kmask = maskf.reshape(B, 1, S)      # key-padding mask -> additive bias
    omask = maskf.reshape(B, S, 1)      # final-output zeroing mask

    # input projection * sqrt(d_model) + learnable positional encoding (fused)
    x = input_projection(X, params["proj_w"], params["proj_b"],
                         params["pos"][:S], math.sqrt(d_model), tb)
    # (pos-enc / residual dropouts: identity in eval mode)

    n_layers = len(params["layers"])
    for li, lw in enumerate(params["layers"]):
        x = transformer_layer(x, kmask, omask, lw, n_heads, tb,
                              final_act=(li == n_layers - 1))

    # flatten (row-major, matches torch .reshape(B, -1)); GELU + mask already
    # applied in the last layer's epilogue.  Then K-tiled linear + sigmoid.
    x_flat = x.reshape(B, S * d_model)
    return output_head(x_flat, params["out_w"], params["out_b"], num_classes)


# ------------------------------------ main ------------------------------------

if __name__ == "__main__":
    B, S, F = 2, 8, 4                  # batch, max_len (seq), feat_dim
    d_model, n_heads = 32, 8           # head_dim = 4
    num_layers, dim_ff, num_classes = 2, 64, 2

    key = jax.random.PRNGKey(0)
    kx, kp = jax.random.split(key)
    X = jax.random.normal(kx, (B, S, F), jnp.float32)
    # second example has its last 2 timesteps padded (True = keep)
    lengths = jnp.array([S, S - 2])
    padding_masks = jnp.arange(S)[None, :] < lengths[:, None]

    params = init_params(kp, F, S, d_model, n_heads, num_layers,
                         dim_ff, num_classes)

    fwd = jax.jit(functools.partial(forward, d_model=d_model, n_heads=n_heads,
                                    num_classes=num_classes))
    out = jax.block_until_ready(fwd(params, X, padding_masks))

    assert out.shape == (B, num_classes), out.shape
    assert bool(jnp.all(jnp.isfinite(out)))
    assert bool(jnp.all((out >= 0.0) & (out <= 1.0)))   # sigmoid output
    print("KERNEL_OK")
</pallas_src>

<mosaic_0001>
module attributes {stable_mosaic.version = 11 : i64} {
  func.func @_inproj_kernel(%arg0: i32, %arg1: memref<1x8x4xf32, #tpu.memory_space<vmem>>, %arg2: memref<4x32xbf16, #tpu.memory_space<vmem>>, %arg3: memref<1x32xf32, #tpu.memory_space<vmem>>, %arg4: memref<8x32xf32, #tpu.memory_space<vmem>>, %arg5: memref<1x8x32xf32, #tpu.memory_space<vmem>>) attributes {dimension_semantics = [#tpu.dimension_semantics<parallel>], iteration_bounds = array<i64: 2>, scalar_prefetch = 0 : i64, scratch_operands = 0 : i64, tpu.core_type = #tpu.core_type<tc>, window_params = [{transform_indices = @transform_0, window_bounds = array<i64: 1, 8, 4>}, {pipeline_mode = #tpu.pipeline_mode<synchronous>, transform_indices = @transform_1, window_bounds = array<i64: 4, 32>}, {pipeline_mode = #tpu.pipeline_mode<synchronous>, transform_indices = @transform_2, window_bounds = array<i64: 1, 32>}, {pipeline_mode = #tpu.pipeline_mode<synchronous>, transform_indices = @transform_3, window_bounds = array<i64: 8, 32>}, {transform_indices = @transform_4, window_bounds = array<i64: 1, 8, 32>}]} {
    %c0 = arith.constant 0 : index
    %c0_0 = arith.constant 0 : index
    %c0_1 = arith.constant 0 : index
    %0 = vector.load %arg1[%c0, %c0_0, %c0_1] : memref<1x8x4xf32, #tpu.memory_space<vmem>>, vector<1x8x4xf32>
    %1 = arith.truncf %0 : vector<1x8x4xf32> to vector<1x8x4xbf16>
    %2 = vector.shape_cast %1 : vector<1x8x4xbf16> to vector<8x4xbf16>
    %c0_2 = arith.constant 0 : index
    %c0_3 = arith.constant 0 : index
    %3 = vector.load %arg2[%c0_2, %c0_3] : memref<4x32xbf16, #tpu.memory_space<vmem>>, vector<4x32xbf16>
    %cst = arith.constant dense<0.000000e+00> : vector<8x32xf32>
    %4 = tpu.matmul %2, %3, %cst {dimension_numbers = #tpu.dot_dimension_numbers<[1], [0], [0], [1], [0, 0, 1, 1], [], []>} : vector<8x4xbf16>, vector<4x32xbf16>, vector<8x32xf32> -> vector<8x32xf32>
    %c0_4 = arith.constant 0 : index
    %c0_5 = arith.constant 0 : index
    %5 = vector.load %arg3[%c0_4, %c0_5] : memref<1x32xf32, #tpu.memory_space<vmem>>, vector<1x32xf32>
    %6 = vector.broadcast %5 : vector<1x32xf32> to vector<8x32xf32>
    %7 = arith.addf %4, %6 : vector<8x32xf32>
    %cst_6 = arith.constant 5.65685415 : f32
    %8 = vector.broadcast %cst_6 : f32 to vector<8x32xf32>
    %9 = arith.mulf %7, %8 : vector<8x32xf32>
    %10 = vector.shape_cast %9 : vector<8x32xf32> to vector<1x8x32xf32>
    %c0_7 = arith.constant 0 : index
    %c0_8 = arith.constant 0 : index
    %11 = vector.load %arg4[%c0_7, %c0_8] : memref<8x32xf32, #tpu.memory_space<vmem>>, vector<8x32xf32>
    %12 = vector.shape_cast %11 : vector<8x32xf32> to vector<1x8x32xf32>
    %13 = arith.addf %10, %12 : vector<1x8x32xf32>
    %c0_9 = arith.constant 0 : index
    %c0_10 = arith.constant 0 : index
    %c0_11 = arith.constant 0 : index
    %14 = vector.load %arg5[%c0_9, %c0_10, %c0_11] : memref<1x8x32xf32, #tpu.memory_space<vmem>>, vector<1x8x32xf32>
    tpu.vector_store %arg5[%c0_9, %c0_10, %c0_11], %13 {strides = array<i32>} : memref<1x8x32xf32, #tpu.memory_space<vmem>>, vector<1x8x32xf32>,
    return
  }
  func.func @transform_0(%arg0: i32) -> (i32, i32, i32) {
    %c0_i32 = arith.constant 0 : i32
    %c0_i32_0 = arith.constant 0 : i32
    %c0_i32_1 = arith.constant 0 : i32
    return %arg0, %c0_i32, %c0_i32_0 : i32, i32, i32
  }
  func.func @transform_1(%arg0: i32) -> (i32, i32) {
    %c0_i32 = arith.constant 0 : i32
    %c0_i32_0 = arith.constant 0 : i32
    %c0_i32_1 = arith.constant 0 : i32
    return %c0_i32, %c0_i32_0 : i32, i32
  }
  func.func @transform_2(%arg0: i32) -> (i32, i32) {
    %c0_i32 = arith.constant 0 : i32
    %c0_i32_0 = arith.constant 0 : i32
    %c0_i32_1 = arith.constant 0 : i32
    return %c0_i32, %c0_i32_0 : i32, i32
  }
  func.func @transform_3(%arg0: i32) -> (i32, i32) {
    %c0_i32 = arith.constant 0 : i32
    %c0_i32_0 = arith.constant 0 : i32
    %c0_i32_1 = arith.constant 0 : i32
    return %c0_i32, %c0_i32_0 : i32, i32
  }
  func.func @transform_4(%arg0: i32) -> (i32, i32, i32) {
    %c0_i32 = arith.constant 0 : i32
    %c0_i32_0 = arith.constant 0 : i32
    %c0_i32_1 = arith.constant 0 : i32
    return %arg0, %c0_i32, %c0_i32_0 : i32, i32, i32
  }
}

module attributes {stable_mosaic.version = 11 : i64} {
  func.func @_layer_kernel(%arg0: i32, %arg1: memref<1x8x32xf32, #tpu.memory_space<vmem>>, %arg2: memref<1x1x8xf32, #tpu.memory_space<vmem>>, %arg3: memref<1x8x1xf32, #tpu.memory_space<vmem>>, %arg4: memref<8x32x4xbf16, #tpu.memory_space<vmem>>, %arg5: memref<8x32x4xbf16, #tpu.memory_space<vmem>>, %arg6: memref<8x32x4xbf16, #tpu.memory_space<vmem>>, %arg7: memref<8x1x4xf32, #tpu.memory_space<vmem>>, %arg8: memref<8x1x4xf32, #tpu.memory_space<vmem>>, %arg9: memref<8x1x4xf32, #tpu.memory_space<vmem>>, %arg10: memref<8x4x32xbf16, #tpu.memory_space<vmem>>, %arg11: memref<1x32xf32, #tpu.memory_space<vmem>>, %arg12: memref<1x32xf32, #tpu.memory_space<vmem>>, %arg13: memref<1x32xf32, #tpu.memory_space<vmem>>, %arg14: memref<32x64xbf16, #tpu.memory_space<vmem>>, %arg15: memref<1x64xf32, #tpu.memory_space<vmem>>, %arg16: memref<64x32xbf16, #tpu.memory_space<vmem>>, %arg17: memref<1x32xf32, #tpu.memory_space<vmem>>, %arg18: memref<1x32xf32, #tpu.memory_space<vmem>>, %arg19: memref<1x32xf32, #tpu.memory_space<vmem>>, %arg20: memref<1x8x32xf32, #tpu.memory_space<vmem>>) attributes {dimension_semantics = [#tpu.dimension_semantics<parallel>], iteration_bounds = array<i64: 2>, scalar_prefetch = 0 : i64, scratch_operands = 0 : i64, tpu.core_type = #tpu.core_type<tc>, window_params = [{transform_indices = @transform_0, window_bounds = array<i64: 1, 8, 32>}, {transform_indices = @transform_1, window_bounds = array<i64: 1, 1, 8>}, {transform_indices = @transform_2, window_bounds = array<i64: 1, 8, 1>}, {pipeline_mode = #tpu.pipeline_mode<synchronous>, transform_indices = @transform_3, window_bounds = array<i64: 8, 32, 4>}, {pipeline_mode = #tpu.pipeline_mode<synchronous>, transform_indices = @transform_4, window_bounds = array<i64: 8, 32, 4>}, {pipeline_mode = #tpu.pipeline_mode<synchronous>, transform_indices = @transform_5, window_bounds = array<i64: 8, 32, 4>}, {pipeline_mode = #tpu.pipeline_mode<synchronous>, transform_indices = @transform_6, window_bounds = array<i64: 8, 1, 4>}, {pipeline_mode = #tpu.pipeline_mode<synchronous>, transform_indices = @transform_7, window_bounds = array<i64: 8, 1, 4>}, {pipeline_mode = #tpu.pipeline_mode<synchronous>, transform_indices = @transform_8, window_bounds = array<i64: 8, 1, 4>}, {pipeline_mode = #tpu.pipeline_mode<synchronous>, transform_indices = @transform_9, window_bounds = array<i64: 8, 4, 32>}, {pipeline_mode = #tpu.pipeline_mode<synchronous>, transform_indices = @transform_10, window_bounds = array<i64: 1, 32>}, {pipeline_mode = #tpu.pipeline_mode<synchronous>, transform_indices = @transform_11, window_bounds = array<i64: 1, 32>}, {pipeline_mode = #tpu.pipeline_mode<synchronous>, transform_indices = @transform_12, window_bounds = array<i64: 1, 32>}, {pipeline_mode = #tpu.pipeline_mode<synchronous>, transform_indices = @transform_13, window_bounds = array<i64: 32, 64>}, {pipeline_mode = #tpu.pipeline_mode<synchronous>, transform_indices = @transform_14, window_bounds = array<i64: 1, 64>}, {pipeline_mode = #tpu.pipeline_mode<synchronous>, transform_indices = @transform_15, window_bounds = array<i64: 64, 32>}, {pipeline_mode = #tpu.pipeline_mode<synchronous>, transform_indices = @transform_16, window_bounds = array<i64: 1, 32>}, {pipeline_mode = #tpu.pipeline_mode<synchronous>, transform_indices = @transform_17, window_bounds = array<i64: 1, 32>}, {pipeline_mode = #tpu.pipeline_mode<synchronous>, transform_indices = @transform_18, window_bounds = array<i64: 1, 32>}, {transform_indices = @transform_19, window_bounds = array<i64: 1, 8, 32>}]} {
    %c0 = arith.constant 0 : index
    %c0_0 = arith.constant 0 : index
    %c0_1 = arith.constant 0 : index
    %0 = vector.load %arg1[%c0, %c0_0, %c0_1] : memref<1x8x32xf32, #tpu.memory_space<vmem>>, vector<1x8x32xf32>
    %1 = vector.shape_cast %0 : vector<1x8x32xf32> to vector<8x32xf32>
    %2 = arith.truncf %0 : vector<1x8x32xf32> to vector<1x8x32xbf16>
    %3 = vector.shape_cast %2 : vector<1x8x32xbf16> to vector<1x1x8x32xbf16>
    %4 = vector.shape_cast %3 : vector<1x1x8x32xbf16> to vector<1x1x8x32xbf16>
    %5 = vector.broadcast %4 : vector<1x1x8x32xbf16> to vector<1x8x8x32xbf16>
    %6 = vector.shape_cast %5 : vector<1x8x8x32xbf16> to vector<8x8x32xbf16>
    %c0_2 = arith.constant 0 : index
    %c0_3 = arith.constant 0 : index
    %c0_4 = arith.constant 0 : index
    %7 = vector.load %arg4[%c0_2, %c0_3, %c0_4] : memref<8x32x4xbf16, #tpu.memory_space<vmem>>, vector<8x32x4xbf16>
    %8 = vector.shape_cast %7 : vector<8x32x4xbf16> to vector<1x8x32x4xbf16>
    %9 = vector.shape_cast %8 : vector<1x8x32x4xbf16> to vector<8x32x4xbf16>
    "tpu.trace_start"() <{level = 10 : i32, message = "nsd,ndf->nsf"}> : () -> ()
    %cst = arith.constant dense<0.000000e+00> : vector<8x8x4xf32>
    %10 = tpu.matmul %6, %9, %cst {dimension_numbers = #tpu.dot_dimension_numbers<[2], [1], [1], [2], [0, 0, 0, 1, 1, 2], [0], [0]>} : vector<8x8x32xbf16>, vector<8x32x4xbf16>, vector<8x8x4xf32> -> vector<8x8x4xf32>
    "tpu.trace_stop"() : () -> ()
    %c0_5 = arith.constant 0 : index
    %c0_6 = arith.constant 0 : index
    %c0_7 = arith.constant 0 : index
    %11 = vector.load %arg7[%c0_5, %c0_6, %c0_7] : memref<8x1x4xf32, #tpu.memory_space<vmem>>, vector<8x1x4xf32>
    %12 = vector.shape_cast %11 : vector<8x1x4xf32> to vector<1x8x1x4xf32>
    %13 = vector.shape_cast %12 : vector<1x8x1x4xf32> to vector<8x1x4xf32>
    %14 = vector.broadcast %13 : vector<8x1x4xf32> to vector<8x8x4xf32>
    %15 = arith.addf %10, %14 : vector<8x8x4xf32>
    %c0_8 = arith.constant 0 : index
    %c0_9 = arith.constant 0 : index
    %c0_10 = arith.constant 0 : index
    %16 = vector.load %arg5[%c0_8, %c0_9, %c0_10] : memref<8x32x4xbf16, #tpu.memory_space<vmem>>, vector<8x32x4xbf16>
    %17 = vector.shape_cast %16 : vector<8x32x4xbf16> to vector<1x8x32x4xbf16>
    %18 = vector.shape_cast %17 : vector<1x8x32x4xbf16> to vector<8x32x4xbf16>
    "tpu.trace_start"() <{level = 10 : i32, message = "nsd,ndf->nsf"}> : () -> ()
    %cst_11 = arith.constant dense<0.000000e+00> : vector<8x8x4xf32>
    %19 = tpu.matmul %6, %18, %cst_11 {dimension_numbers = #tpu.dot_dimension_numbers<[2], [1], [1], [2], [0, 0, 0, 1, 1, 2], [0], [0]>} : vector<8x8x32xbf16>, vector<8x32x4xbf16>, vector<8x8x4xf32> -> vector<8x8x4xf32>
    "tpu.trace_stop"() : () -> ()
    %c0_12 = arith.constant 0 : index
    %c0_13 = arith.constant 0 : index
    %c0_14 = arith.constant 0 : index
    %20 = vector.load %arg8[%c0_12, %c0_13, %c0_14] : memref<8x1x4xf32, #tpu.memory_space<vmem>>, vector<8x1x4xf32>
    %21 = vector.shape_cast %20 : vector<8x1x4xf32> to vector<1x8x1x4xf32>
    %22 = vector.shape_cast %21 : vector<1x8x1x4xf32> to vector<8x1x4xf32>
    %23 = vector.broadcast %22 : vector<8x1x4xf32> to vector<8x8x4xf32>
    %24 = arith.addf %19, %23 : vector<8x8x4xf32>
    %c0_15 = arith.constant 0 : index
    %c0_16 = arith.constant 0 : index
    %c0_17 = arith.constant 0 : index
    %25 = vector.load %arg6[%c0_15, %c0_16, %c0_17] : memref<8x32x4xbf16, #tpu.memory_space<vmem>>, vector<8x32x4xbf16>
    %26 = vector.shape_cast %25 : vector<8x32x4xbf16> to vector<1x8x32x4xbf16>
    %27 = vector.shape_cast %26 : vector<1x8x32x4xbf16> to vector<8x32x4xbf16>
    "tpu.trace_start"() <{level = 10 : i32, message = "nsd,ndf->nsf"}> : () -> ()
    %cst_18 = arith.constant dense<0.000000e+00> : vector<8x8x4xf32>
    %28 = tpu.matmul %6, %27, %cst_18 {dimension_numbers = #tpu.dot_dimension_numbers<[2], [1], [1], [2], [0, 0, 0, 1, 1, 2], [0], [0]>} : vector<8x8x32xbf16>, vector<8x32x4xbf16>, vector<8x8x4xf32> -> vector<8x8x4xf32>
    "tpu.trace_stop"() : () -> ()
    %c0_19 = arith.constant 0 : index
    %c0_20 = arith.constant 0 : index
    %c0_21 = arith.constant 0 : index
    %29 = vector.load %arg9[%c0_19, %c0_20, %c0_21] : memref<8x1x4xf32, #tpu.memory_space<vmem>>, vector<8x1x4xf32>
    %30 = vector.shape_cast %29 : vector<8x1x4xf32> to vector<1x8x1x4xf32>
    %31 = vector.shape_cast %30 : vector<1x8x1x4xf32> to vector<8x1x4xf32>
    %32 = vector.broadcast %31 : vector<8x1x4xf32> to vector<8x8x4xf32>
    %33 = arith.addf %28, %32 : vector<8x8x4xf32>
    %c0_22 = arith.constant 0 : index
    %c0_23 = arith.constant 0 : index
    %c0_24 = arith.constant 0 : index
    %34 = vector.load %arg2[%c0_22, %c0_23, %c0_24] : memref<1x1x8xf32, #tpu.memory_space<vmem>>, vector<1x1x8xf32>
    %cst_25 = arith.constant 0.000000e+00 : f32
    %35 = vector.broadcast %cst_25 : f32 to vector<1x1x8xf32>
    %36 = arith.cmpf ogt, %34, %35 : vector<1x1x8xf32>
    %cst_26 = arith.constant 0.000000e+00 : f32
    %cst_27 = arith.constant -1.000000e+09 : f32
    %37 = vector.broadcast %cst_26 : f32 to vector<1x1x8xf32>
    %38 = vector.broadcast %cst_27 : f32 to vector<1x1x8xf32>
    %39 = arith.select %36, %37, %38 : vector<1x1x8xi1>, vector<1x1x8xf32>
    %40 = vector.shape_cast %39 : vector<1x1x8xf32> to vector<1x1x1x8xf32>
    %41 = vector.shape_cast %40 : vector<1x1x1x8xf32> to vector<1x1x1x8xf32>
    %42 = vector.broadcast %41 : vector<1x1x1x8xf32> to vector<1x8x1x8xf32>
    %43 = vector.shape_cast %42 : vector<1x8x1x8xf32> to vector<8x1x8xf32>
    %44 = arith.truncf %15 : vector<8x8x4xf32> to vector<8x8x4xbf16>
    %45 = arith.truncf %24 : vector<8x8x4xf32> to vector<8x8x4xbf16>
    "tpu.trace_start"() <{level = 10 : i32, message = "nqf,nkf->nqk"}> : () -> ()
    %cst_28 = arith.constant dense<0.000000e+00> : vector<8x8x8xf32>
    %46 = tpu.matmul %44, %45, %cst_28 {dimension_numbers = #tpu.dot_dimension_numbers<[2], [2], [1], [1], [0, 0, 0, 1, 1, 1], [0], [0]>} : vector<8x8x4xbf16>, vector<8x8x4xbf16>, vector<8x8x8xf32> -> vector<8x8x8xf32>
    "tpu.trace_stop"() : () -> ()
    %cst_29 = arith.constant 5.000000e-01 : f32
    %47 = vector.broadcast %cst_29 : f32 to vector<8x8x8xf32>
    %48 = arith.mulf %46, %47 : vector<8x8x8xf32>
    %49 = vector.broadcast %43 : vector<8x1x8xf32> to vector<8x8x8xf32>
    %50 = arith.addf %48, %49 : vector<8x8x8xf32>
    %cst_30 = arith.constant dense<0xFF800000> : vector<8x8xf32>
    %51 = vector.multi_reduction <maximumf>, %50, %cst_30 [2] : vector<8x8x8xf32> to vector<8x8xf32>
    %52 = vector.shape_cast %51 : vector<8x8xf32> to vector<8x8x1xf32>
    %53 = vector.broadcast %52 : vector<8x8x1xf32> to vector<8x8x8xf32>
    %54 = arith.subf %50, %53 : vector<8x8x8xf32>
    %55 = math.exp %54 : vector<8x8x8xf32>
    %cst_31 = arith.constant dense<0.000000e+00> : vector<8x8xf32>
    %56 = vector.multi_reduction <add>, %55, %cst_31 [2] : vector<8x8x8xf32> to vector<8x8xf32>
    %57 = vector.shape_cast %56 : vector<8x8xf32> to vector<8x8x1xf32>
    %58 = vector.broadcast %57 : vector<8x8x1xf32> to vector<8x8x8xf32>
    %59 = arith.divf %55, %58 : vector<8x8x8xf32>
    %60 = arith.truncf %59 : vector<8x8x8xf32> to vector<8x8x8xbf16>
    %61 = arith.truncf %33 : vector<8x8x4xf32> to vector<8x8x4xbf16>
    "tpu.trace_start"() <{level = 10 : i32, message = "nqk,nkf->nqf"}> : () -> ()
    %cst_32 = arith.constant dense<0.000000e+00> : vector<8x8x4xf32>
    %62 = tpu.matmul %60, %61, %cst_32 {dimension_numbers = #tpu.dot_dimension_numbers<[2], [1], [1], [2], [0, 0, 0, 1, 1, 2], [0], [0]>} : vector<8x8x8xbf16>, vector<8x8x4xbf16>, vector<8x8x4xf32> -> vector<8x8x4xf32>
    "tpu.trace_stop"() : () -> ()
    %63 = arith.truncf %62 : vector<8x8x4xf32> to vector<8x8x4xbf16>
    %c0_33 = arith.constant 0 : index
    %c0_34 = arith.constant 0 : index
    %c0_35 = arith.constant 0 : index
    %64 = vector.load %arg10[%c0_33, %c0_34, %c0_35] : memref<8x4x32xbf16, #tpu.memory_space<vmem>>, vector<8x4x32xbf16>
    %65 = vector.shape_cast %64 : vector<8x4x32xbf16> to vector<1x8x4x32xbf16>
    %66 = vector.shape_cast %65 : vector<1x8x4x32xbf16> to vector<8x4x32xbf16>
    "tpu.trace_start"() <{level = 10 : i32, message = "nqf,nfe->nqe"}> : () -> ()
    %cst_36 = arith.constant dense<0.000000e+00> : vector<8x8x32xf32>
    %67 = tpu.matmul %63, %66, %cst_36 {dimension_numbers = #tpu.dot_dimension_numbers<[2], [1], [1], [2], [0, 0, 0, 1, 1, 2], [0], [0]>} : vector<8x8x4xbf16>, vector<8x4x32xbf16>, vector<8x8x32xf32> -> vector<8x8x32xf32>
    "tpu.trace_stop"() : () -> ()
    %68 = vector.shape_cast %67 : vector<8x8x32xf32> to vector<1x8x8x32xf32>
    %cst_37 = arith.constant dense<0.000000e+00> : vector<1x8x32xf32>
    %69 = vector.multi_reduction <add>, %68, %cst_37 [1] : vector<1x8x8x32xf32> to vector<1x8x32xf32>
    %70 = vector.shape_cast %69 : vector<1x8x32xf32> to vector<8x32xf32>
    %c0_38 = arith.constant 0 : index
    %c0_39 = arith.constant 0 : index
    %71 = vector.load %arg11[%c0_38, %c0_39] : memref<1x32xf32, #tpu.memory_space<vmem>>, vector<1x32xf32>
    %72 = vector.broadcast %71 : vector<1x32xf32> to vector<8x32xf32>
    %73 = arith.addf %70, %72 : vector<8x32xf32>
    %74 = arith.addf %1, %73 : vector<8x32xf32>
    %c0_40 = arith.constant 0 : index
    %c0_41 = arith.constant 0 : index
    %75 = vector.load %arg12[%c0_40, %c0_41] : memref<1x32xf32, #tpu.memory_space<vmem>>, vector<1x32xf32>
    %c0_42 = arith.constant 0 : index
    %c0_43 = arith.constant 0 : index
    %76 = vector.load %arg13[%c0_42, %c0_43] : memref<1x32xf32, #tpu.memory_space<vmem>>, vector<1x32xf32>
    %cst_44 = arith.constant dense<0.000000e+00> : vector<8xf32>
    %77 = vector.multi_reduction <add>, %74, %cst_44 [1] : vector<8x32xf32> to vector<8xf32>
    %78 = vector.shape_cast %77 : vector<8xf32> to vector<8x1xf32>
    %cst_45 = arith.constant 3.200000e+01 : f32
    %79 = vector.broadcast %cst_45 : f32 to vector<8x1xf32>
    %80 = arith.divf %78, %79 : vector<8x1xf32>
    %81 = vector.broadcast %80 : vector<8x1xf32> to vector<8x32xf32>
    %82 = arith.subf %74, %81 : vector<8x32xf32>
    %83 = arith.mulf %82, %82 : vector<8x32xf32>
    %cst_46 = arith.constant dense<0.000000e+00> : vector<8xf32>
    %84 = vector.multi_reduction <add>, %83, %cst_46 [1] : vector<8x32xf32> to vector<8xf32>
    %85 = vector.shape_cast %84 : vector<8xf32> to vector<8x1xf32>
    %cst_47 = arith.constant 3.200000e+01 : f32
    %86 = vector.broadcast %cst_47 : f32 to vector<8x1xf32>
    %87 = arith.divf %85, %86 : vector<8x1xf32>
    %88 = vector.broadcast %80 : vector<8x1xf32> to vector<8x32xf32>
    %89 = arith.subf %74, %88 : vector<8x32xf32>
    %cst_48 = arith.constant 9.99999974E-6 : f32
    %90 = vector.broadcast %cst_48 : f32 to vector<8x1xf32>
    %91 = arith.addf %87, %90 : vector<8x1xf32>
    %92 = math.rsqrt %91 : vector<8x1xf32>
    %93 = vector.broadcast %92 : vector<8x1xf32> to vector<8x32xf32>
    %94 = arith.mulf %89, %93 : vector<8x32xf32>
    %95 = vector.broadcast %75 : vector<1x32xf32> to vector<8x32xf32>
    %96 = arith.mulf %94, %95 : vector<8x32xf32>
    %97 = vector.broadcast %76 : vector<1x32xf32> to vector<8x32xf32>
    %98 = arith.addf %96, %97 : vector<8x32xf32>
    %99 = arith.truncf %98 : vector<8x32xf32> to vector<8x32xbf16>
    %c0_49 = arith.constant 0 : index
    %c0_50 = arith.constant 0 : index
    %100 = vector.load %arg14[%c0_49, %c0_50] : memref<32x64xbf16, #tpu.memory_space<vmem>>, vector<32x64xbf16>
    %cst_51 = arith.constant dense<0.000000e+00> : vector<8x64xf32>
    %101 = tpu.matmul %99, %100, %cst_51 {dimension_numbers = #tpu.dot_dimension_numbers<[1], [0], [0], [1], [0, 0, 1, 1], [], []>} : vector<8x32xbf16>, vector<32x64xbf16>, vector<8x64xf32> -> vector<8x64xf32>
    %c0_52 = arith.constant 0 : index
    %c0_53 = arith.constant 0 : index
    %102 = vector.load %arg15[%c0_52, %c0_53] : memref<1x64xf32, #tpu.memory_space<vmem>>, vector<1x64xf32>
    %103 = vector.broadcast %102 : vector<1x64xf32> to vector<8x64xf32>
    %104 = arith.addf %101, %103 : vector<8x64xf32>
    %105 = arith.mulf %104, %104 : vector<8x64xf32>
    %106 = arith.mulf %104, %105 : vector<8x64xf32>
    %cst_54 = arith.constant 4.471500e-02 : f32
    %107 = vector.broadcast %cst_54 : f32 to vector<8x64xf32>
    %108 = arith.mulf %107, %106 : vector<8x64xf32>
    %109 = arith.addf %104, %108 : vector<8x64xf32>
    %cst_55 = arith.constant 0.797884583 : f32
    %110 = vector.broadcast %cst_55 : f32 to vector<8x64xf32>
    %111 = arith.mulf %110, %109 : vector<8x64xf32>
    %112 = math.tanh %111 : vector<8x64xf32>
    %cst_56 = arith.constant 1.000000e+00 : f32
    %113 = vector.broadcast %cst_56 : f32 to vector<8x64xf32>
    %114 = arith.addf %113, %112 : vector<8x64xf32>
    %cst_57 = arith.constant 5.000000e-01 : f32
    %115 = vector.broadcast %cst_57 : f32 to vector<8x64xf32>
    %116 = arith.mulf %115, %114 : vector<8x64xf32>
    %117 = arith.mulf %104, %116 : vector<8x64xf32>
    %118 = arith.truncf %117 : vector<8x64xf32> to vector<8x64xbf16>
    %c0_58 = arith.constant 0 : index
    %c0_59 = arith.constant 0 : index
    %119 = vector.load %arg16[%c0_58, %c0_59] : memref<64x32xbf16, #tpu.memory_space<vmem>>, vector<64x32xbf16>
    %cst_60 = arith.constant dense<0.000000e+00> : vector<8x32xf32>
    %120 = tpu.matmul %118, %119, %cst_60 {dimension_numbers = #tpu.dot_dimension_numbers<[1], [0], [0], [1], [0, 0, 1, 1], [], []>} : vector<8x64xbf16>, vector<64x32xbf16>, vector<8x32xf32> -> vector<8x32xf32>
    %c0_61 = arith.constant 0 : index
    %c0_62 = arith.constant 0 : index
    %121 = vector.load %arg17[%c0_61, %c0_62] : memref<1x32xf32, #tpu.memory_space<vmem>>, vector<1x32xf32>
    %122 = vector.broadcast %121 : vector<1x32xf32> to vector<8x32xf32>
    %123 = arith.addf %120, %122 : vector<8x32xf32>
    %124 = arith.addf %98, %123 : vector<8x32xf32>
    %c0_63 = arith.constant 0 : index
    %c0_64 = arith.constant 0 : index
    %125 = vector.load %arg18[%c0_63, %c0_64] : memref<1x32xf32, #tpu.memory_space<vmem>>, vector<1x32xf32>
    %c0_65 = arith.constant 0 : index
    %c0_66 = arith.constant 0 : index
    %126 = vector.load %arg19[%c0_65, %c0_66] : memref<1x32xf32, #tpu.memory_space<vmem>>, vector<1x32xf32>
    %cst_67 = arith.constant dense<0.000000e+00> : vector<8xf32>
    %127 = vector.multi_reduction <add>, %124, %cst_67 [1] : vector<8x32xf32> to vector<8xf32>
    %128 = vector.shape_cast %127 : vector<8xf32> to vector<8x1xf32>
    %cst_68 = arith.constant 3.200000e+01 : f32
    %129 = vector.broadcast %cst_68 : f32 to vector<8x1xf32>
    %130 = arith.divf %128, %129 : vector<8x1xf32>
    %131 = vector.broadcast %130 : vector<8x1xf32> to vector<8x32xf32>
    %132 = arith.subf %124, %131 : vector<8x32xf32>
    %133 = arith.mulf %132, %132 : vector<8x32xf32>
    %cst_69 = arith.constant dense<0.000000e+00> : vector<8xf32>
    %134 = vector.multi_reduction <add>, %133, %cst_69 [1] : vector<8x32xf32> to vector<8xf32>
    %135 = vector.shape_cast %134 : vector<8xf32> to vector<8x1xf32>
    %cst_70 = arith.constant 3.200000e+01 : f32
    %136 = vector.broadcast %cst_70 : f32 to vector<8x1xf32>
    %137 = arith.divf %135, %136 : vector<8x1xf32>
    %138 = vector.broadcast %130 : vector<8x1xf32> to vector<8x32xf32>
    %139 = arith.subf %124, %138 : vector<8x32xf32>
    %cst_71 = arith.constant 9.99999974E-6 : f32
    %140 = vector.broadcast %cst_71 : f32 to vector<8x1xf32>
    %141 = arith.addf %137, %140 : vector<8x1xf32>
    %142 = math.rsqrt %141 : vector<8x1xf32>
    %143 = vector.broadcast %142 : vector<8x1xf32> to vector<8x32xf32>
    %144 = arith.mulf %139, %143 : vector<8x32xf32>
    %145 = vector.broadcast %125 : vector<1x32xf32> to vector<8x32xf32>
    %146 = arith.mulf %144, %145 : vector<8x32xf32>
    %147 = vector.broadcast %126 : vector<1x32xf32> to vector<8x32xf32>
    %148 = arith.addf %146, %147 : vector<8x32xf32>
    %149 = vector.shape_cast %148 : vector<8x32xf32> to vector<1x8x32xf32>
    %c0_72 = arith.constant 0 : index
    %c0_73 = arith.constant 0 : index
    %c0_74 = arith.constant 0 : index
    %150 = vector.load %arg20[%c0_72, %c0_73, %c0_74] : memref<1x8x32xf32, #tpu.memory_space<vmem>>, vector<1x8x32xf32>
    tpu.vector_store %arg20[%c0_72, %c0_73, %c0_74], %149 {strides = array<i32>} : memref<1x8x32xf32, #tpu.memory_space<vmem>>, vector<1x8x32xf32>,
    return
  }
  func.func @transform_0(%arg0: i32) -> (i32, i32, i32) {
    %c0_i32 = arith.constant 0 : i32
    %c0_i32_0 = arith.constant 0 : i32
    %c0_i32_1 = arith.constant 0 : i32
    return %arg0, %c0_i32, %c0_i32_0 : i32, i32, i32
  }
  func.func @transform_1(%arg0: i32) -> (i32, i32, i32) {
    %c0_i32 = arith.constant 0 : i32
    %c0_i32_0 = arith.constant 0 : i32
    %c0_i32_1 = arith.constant 0 : i32
    return %arg0, %c0_i32, %c0_i32_0 : i32, i32, i32
  }
  func.func @transform_2(%arg0: i32) -> (i32, i32, i32) {
    %c0_i32 = arith.constant 0 : i32
    %c0_i32_0 = arith.constant 0 : i32
    %c0_i32_1 = arith.constant 0 : i32
    return %arg0, %c0_i32, %c0_i32_0 : i32, i32, i32
  }
  func.func @transform_3(%arg0: i32) -> (i32, i32, i32) {
    %c0_i32 = arith.constant 0 : i32
    %c0_i32_0 = arith.constant 0 : i32
    %c0_i32_1 = arith.constant 0 : i32
    %c0_i32_2 = arith.constant 0 : i32
    return %c0_i32, %c0_i32_0, %c0_i32_1 : i32, i32, i32
  }
  func.func @transform_4(%arg0: i32) -> (i32, i32, i32) {
    %c0_i32 = arith.constant 0 : i32
    %c0_i32_0 = arith.constant 0 : i32
    %c0_i32_1 = arith.constant 0 : i32
    %c0_i32_2 = arith.constant 0 : i32
    return %c0_i32, %c0_i32_0, %c0_i32_1 : i32, i32, i32
  }
  func.func @transform_5(%arg0: i32) -> (i32, i32, i32) {
    %c0_i32 = arith.constant 0 : i32
    %c0_i32_0 = arith.constant 0 : i32
    %c0_i32_1 = arith.constant 0 : i32
    %c0_i32_2 = arith.constant 0 : i32
    return %c0_i32, %c0_i32_0, %c0_i32_1 : i32, i32, i32
  }
  func.func @transform_6(%arg0: i32) -> (i32, i32, i32) {
    %c0_i32 = arith.constant 0 : i32
    %c0_i32_0 = arith.constant 0 : i32
    %c0_i32_1 = arith.constant 0 : i32
    %c0_i32_2 = arith.constant 0 : i32
    return %c0_i32, %c0_i32_0, %c0_i32_1 : i32, i32, i32
  }
  func.func @transform_7(%arg0: i32) -> (i32, i32, i32) {
    %c0_i32 = arith.constant 0 : i32
    %c0_i32_0 = arith.constant 0 : i32
    %c0_i32_1 = arith.constant 0 : i32
    %c0_i32_2 = arith.constant 0 : i32
    return %c0_i32, %c0_i32_0, %c0_i32_1 : i32, i32, i32
  }
  func.func @transform_8(%arg0: i32) -> (i32, i32, i32) {
    %c0_i32 = arith.constant 0 : i32
    %c0_i32_0 = arith.constant 0 : i32
    %c0_i32_1 = arith.constant 0 : i32
    %c0_i32_2 = arith.constant 0 : i32
    return %c0_i32, %c0_i32_0, %c0_i32_1 : i32, i32, i32
  }
  func.func @transform_9(%arg0: i32) -> (i32, i32, i32) {
    %c0_i32 = arith.constant 0 : i32
    %c0_i32_0 = arith.constant 0 : i32
    %c0_i32_1 = arith.constant 0 : i32
    %c0_i32_2 = arith.constant 0 : i32
    return %c0_i32, %c0_i32_0, %c0_i32_1 : i32, i32, i32
  }
  func.func @transform_10(%arg0: i32) -> (i32, i32) {
    %c0_i32 = arith.constant 0 : i32
    %c0_i32_0 = arith.constant 0 : i32
    %c0_i32_1 = arith.constant 0 : i32
    return %c0_i32, %c0_i32_0 : i32, i32
  }
  func.func @transform_11(%arg0: i32) -> (i32, i32) {
    %c0_i32 = arith.constant 0 : i32
    %c0_i32_0 = arith.constant 0 : i32
    %c0_i32_1 = arith.constant 0 : i32
    return %c0_i32, %c0_i32_0 : i32, i32
  }
  func.func @transform_12(%arg0: i32) -> (i32, i32) {
    %c0_i32 = arith.constant 0 : i32
    %c0_i32_0 = arith.constant 0 : i32
    %c0_i32_1 = arith.constant 0 : i32
    return %c0_i32, %c0_i32_0 : i32, i32
  }
  func.func @transform_13(%arg0: i32) -> (i32, i32) {
    %c0_i32 = arith.constant 0 : i32
    %c0_i32_0 = arith.constant 0 : i32
    %c0_i32_1 = arith.constant 0 : i32
    return %c0_i32, %c0_i32_0 : i32, i32
  }
  func.func @transform_14(%arg0: i32) -> (i32, i32) {
    %c0_i32 = arith.constant 0 : i32
    %c0_i32_0 = arith.constant 0 : i32
    %c0_i32_1 = arith.constant 0 : i32
    return %c0_i32, %c0_i32_0 : i32, i32
  }
  func.func @transform_15(%arg0: i32) -> (i32, i32) {
    %c0_i32 = arith.constant 0 : i32
    %c0_i32_0 = arith.constant 0 : i32
    %c0_i32_1 = arith.constant 0 : i32
    return %c0_i32, %c0_i32_0 : i32, i32
  }
  func.func @transform_16(%arg0: i32) -> (i32, i32) {
    %c0_i32 = arith.constant 0 : i32
    %c0_i32_0 = arith.constant 0 : i32
    %c0_i32_1 = arith.constant 0 : i32
    return %c0_i32, %c0_i32_0 : i32, i32
  }
  func.func @transform_17(%arg0: i32) -> (i32, i32) {
    %c0_i32 = arith.constant 0 : i32
    %c0_i32_0 = arith.constant 0 : i32
    %c0_i32_1 = arith.constant 0 : i32
    return %c0_i32, %c0_i32_0 : i32, i32
  }
  func.func @transform_18(%arg0: i32) -> (i32, i32) {
    %c0_i32 = arith.constant 0 : i32
    %c0_i32_0 = arith.constant 0 : i32
    %c0_i32_1 = arith.constant 0 : i32
    return %c0_i32, %c0_i32_0 : i32, i32
  }
  func.func @transform_19(%arg0: i32) -> (i32, i32, i32) {
    %c0_i32 = arith.constant 0 : i32
    %c0_i32_0 = arith.constant 0 : i32
    %c0_i32_1 = arith.constant 0 : i32
    return %arg0, %c0_i32, %c0_i32_0 : i32, i32, i32
  }
}

module attributes {stable_mosaic.version = 11 : i64} {
  func.func @_head_kernel(%arg0: i32, %arg1: memref<2x128xf32, #tpu.memory_space<vmem>>, %arg2: memref<128x128xbf16, #tpu.memory_space<vmem>>, %arg3: memref<1x128xf32, #tpu.memory_space<vmem>>, %arg4: memref<2x128xf32, #tpu.memory_space<vmem>>, %arg5: memref<2x128xf32, #tpu.memory_space<vmem>>) attributes {dimension_semantics = [#tpu.dimension_semantics<arbitrary>], iteration_bounds = array<i64: 2>, scalar_prefetch = 0 : i64, scratch_operands = 1 : i64, tpu.core_type = #tpu.core_type<tc>, window_params = [{transform_indices = @transform_0, window_bounds = array<i64: 2, 128>}, {transform_indices = @transform_1, window_bounds = array<i64: 128, 128>}, {pipeline_mode = #tpu.pipeline_mode<synchronous>, transform_indices = @transform_2, window_bounds = array<i64: 1, 128>}, {pipeline_mode = #tpu.pipeline_mode<synchronous>, transform_indices = @transform_3, window_bounds = array<i64: 2, 128>}]} {
    %c0_i32 = arith.constant 0 : i32
    %0 = arith.cmpi eq, %arg0, %c0_i32 : i32
    %1 = arith.extui %0 : i1 to i32
    %c0_i32_0 = arith.constant 0 : i32
    %2 = arith.cmpi ne, %1, %c0_i32_0 : i32
    scf.if %2 {
      %c0_9 = arith.constant 0 : index
      %c0_10 = arith.constant 0 : index
      %13 = vector.load %arg3[%c0_9, %c0_10] : memref<1x128xf32, #tpu.memory_space<vmem>>, vector<1x128xf32>
      %14 = vector.shape_cast %13 : vector<1x128xf32> to vector<1x128xf32>
      %15 = vector.broadcast %14 : vector<1x128xf32> to vector<2x128xf32>
      %c0_11 = arith.constant 0 : index
      %c0_12 = arith.constant 0 : index
      %16 = vector.load %arg5[%c0_11, %c0_12] : memref<2x128xf32, #tpu.memory_space<vmem>>, vector<2x128xf32>
      tpu.vector_store %arg5[%c0_11, %c0_12], %15 {strides = array<i32>} : memref<2x128xf32, #tpu.memory_space<vmem>>, vector<2x128xf32>,
    } else {
    }
    %c0 = arith.constant 0 : index
    %c0_1 = arith.constant 0 : index
    %3 = vector.load %arg5[%c0, %c0_1] : memref<2x128xf32, #tpu.memory_space<vmem>>, vector<2x128xf32>
    %c0_2 = arith.constant 0 : index
    %c0_3 = arith.constant 0 : index
    %4 = vector.load %arg1[%c0_2, %c0_3] : memref<2x128xf32, #tpu.memory_space<vmem>>, vector<2x128xf32>
    %5 = arith.truncf %4 : vector<2x128xf32> to vector<2x128xbf16>
    %c0_4 = arith.constant 0 : index
    %c0_5 = arith.constant 0 : index
    %6 = vector.load %arg2[%c0_4, %c0_5] : memref<128x128xbf16, #tpu.memory_space<vmem>>, vector<128x128xbf16>
    %cst = arith.constant dense<0.000000e+00> : vector<2x128xf32>
    %7 = tpu.matmul %5, %6, %cst {dimension_numbers = #tpu.dot_dimension_numbers<[1], [0], [0], [1], [0, 0, 1, 1], [], []>} : vector<2x128xbf16>, vector<128x128xbf16>, vector<2x128xf32> -> vector<2x128xf32>
    %8 = arith.addf %3, %7 : vector<2x128xf32>
    %c0_6 = arith.constant 0 : index
    %c0_7 = arith.constant 0 : index
    %9 = vector.load %arg5[%c0_6, %c0_7] : memref<2x128xf32, #tpu.memory_space<vmem>>, vector<2x128xf32>
    tpu.vector_store %arg5[%c0_6, %c0_7], %8 {strides = array<i32>} : memref<2x128xf32, #tpu.memory_space<vmem>>, vector<2x128xf32>,
    %c1_i32 = arith.constant 1 : i32
    %10 = arith.cmpi eq, %arg0, %c1_i32 : i32
    %11 = arith.extui %10 : i1 to i32
    %c0_i32_8 = arith.constant 0 : i32
    %12 = arith.cmpi ne, %11, %c0_i32_8 : i32
    scf.if %12 {
      %c0_9 = arith.constant 0 : index
      %c0_10 = arith.constant 0 : index
      %13 = vector.load %arg5[%c0_9, %c0_10] : memref<2x128xf32, #tpu.memory_space<vmem>>, vector<2x128xf32>
      %14 = arith.negf %13 : vector<2x128xf32>
      %15 = math.exp %14 : vector<2x128xf32>
      %cst_11 = arith.constant 1.000000e+00 : f32
      %16 = vector.broadcast %cst_11 : f32 to vector<2x128xf32>
      %17 = arith.addf %16, %15 : vector<2x128xf32>
      %18 = arith.divf %16, %17 : vector<2x128xf32>
      %c0_12 = arith.constant 0 : index
      %c0_13 = arith.constant 0 : index
      %19 = vector.load %arg4[%c0_12, %c0_13] : memref<2x128xf32, #tpu.memory_space<vmem>>, vector<2x128xf32>
      tpu.vector_store %arg4[%c0_12, %c0_13], %18 {strides = array<i32>} : memref<2x128xf32, #tpu.memory_space<vmem>>, vector<2x128xf32>,
    } else {
    }
    return
  }
  func.func @transform_0(%arg0: i32) -> (i32, i32) {
    %c0_i32 = arith.constant 0 : i32
    %c0_i32_0 = arith.constant 0 : i32
    return %c0_i32, %arg0 : i32, i32
  }
  func.func @transform_1(%arg0: i32) -> (i32, i32) {
    %c0_i32 = arith.constant 0 : i32
    %c0_i32_0 = arith.constant 0 : i32
    return %arg0, %c0_i32 : i32, i32
  }
  func.func @transform_2(%arg0: i32) -> (i32, i32) {
    %c0_i32 = arith.constant 0 : i32
    %c0_i32_0 = arith.constant 0 : i32
    %c0_i32_1 = arith.constant 0 : i32
    return %c0_i32, %c0_i32_0 : i32, i32
  }
  func.func @transform_3(%arg0: i32) -> (i32, i32) {
    %c0_i32 = arith.constant 0 : i32
    %c0_i32_0 = arith.constant 0 : i32
    %c0_i32_1 = arith.constant 0 : i32
    return %c0_i32, %c0_i32_0 : i32, i32
  }
}

module attributes {stable_mosaic.version = 11 : i64} {
  func.func @_layer_kernel(%arg0: i32, %arg1: memref<1x8x32xf32, #tpu.memory_space<vmem>>, %arg2: memref<1x1x8xf32, #tpu.memory_space<vmem>>, %arg3: memref<1x8x1xf32, #tpu.memory_space<vmem>>, %arg4: memref<8x32x4xbf16, #tpu.memory_space<vmem>>, %arg5: memref<8x32x4xbf16, #tpu.memory_space<vmem>>, %arg6: memref<8x32x4xbf16, #tpu.memory_space<vmem>>, %arg7: memref<8x1x4xf32, #tpu.memory_space<vmem>>, %arg8: memref<8x1x4xf32, #tpu.memory_space<vmem>>, %arg9: memref<8x1x4xf32, #tpu.memory_space<vmem>>, %arg10: memref<8x4x32xbf16, #tpu.memory_space<vmem>>, %arg11: memref<1x32xf32, #tpu.memory_space<vmem>>, %arg12: memref<1x32xf32, #tpu.memory_space<vmem>>, %arg13: memref<1x32xf32, #tpu.memory_space<vmem>>, %arg14: memref<32x64xbf16, #tpu.memory_space<vmem>>, %arg15: memref<1x64xf32, #tpu.memory_space<vmem>>, %arg16: memref<64x32xbf16, #tpu.memory_space<vmem>>, %arg17: memref<1x32xf32, #tpu.memory_space<vmem>>, %arg18: memref<1x32xf32, #tpu.memory_space<vmem>>, %arg19: memref<1x32xf32, #tpu.memory_space<vmem>>, %arg20: memref<1x8x32xf32, #tpu.memory_space<vmem>>) attributes {dimension_semantics = [#tpu.dimension_semantics<parallel>], iteration_bounds = array<i64: 2>, scalar_prefetch = 0 : i64, scratch_operands = 0 : i64, tpu.core_type = #tpu.core_type<tc>, window_params = [{transform_indices = @transform_0, window_bounds = array<i64: 1, 8, 32>}, {transform_indices = @transform_1, window_bounds = array<i64: 1, 1, 8>}, {transform_indices = @transform_2, window_bounds = array<i64: 1, 8, 1>}, {pipeline_mode = #tpu.pipeline_mode<synchronous>, transform_indices = @transform_3, window_bounds = array<i64: 8, 32, 4>}, {pipeline_mode = #tpu.pipeline_mode<synchronous>, transform_indices = @transform_4, window_bounds = array<i64: 8, 32, 4>}, {pipeline_mode = #tpu.pipeline_mode<synchronous>, transform_indices = @transform_5, window_bounds = array<i64: 8, 32, 4>}, {pipeline_mode = #tpu.pipeline_mode<synchronous>, transform_indices = @transform_6, window_bounds = array<i64: 8, 1, 4>}, {pipeline_mode = #tpu.pipeline_mode<synchronous>, transform_indices = @transform_7, window_bounds = array<i64: 8, 1, 4>}, {pipeline_mode = #tpu.pipeline_mode<synchronous>, transform_indices = @transform_8, window_bounds = array<i64: 8, 1, 4>}, {pipeline_mode = #tpu.pipeline_mode<synchronous>, transform_indices = @transform_9, window_bounds = array<i64: 8, 4, 32>}, {pipeline_mode = #tpu.pipeline_mode<synchronous>, transform_indices = @transform_10, window_bounds = array<i64: 1, 32>}, {pipeline_mode = #tpu.pipeline_mode<synchronous>, transform_indices = @transform_11, window_bounds = array<i64: 1, 32>}, {pipeline_mode = #tpu.pipeline_mode<synchronous>, transform_indices = @transform_12, window_bounds = array<i64: 1, 32>}, {pipeline_mode = #tpu.pipeline_mode<synchronous>, transform_indices = @transform_13, window_bounds = array<i64: 32, 64>}, {pipeline_mode = #tpu.pipeline_mode<synchronous>, transform_indices = @transform_14, window_bounds = array<i64: 1, 64>}, {pipeline_mode = #tpu.pipeline_mode<synchronous>, transform_indices = @transform_15, window_bounds = array<i64: 64, 32>}, {pipeline_mode = #tpu.pipeline_mode<synchronous>, transform_indices = @transform_16, window_bounds = array<i64: 1, 32>}, {pipeline_mode = #tpu.pipeline_mode<synchronous>, transform_indices = @transform_17, window_bounds = array<i64: 1, 32>}, {pipeline_mode = #tpu.pipeline_mode<synchronous>, transform_indices = @transform_18, window_bounds = array<i64: 1, 32>}, {transform_indices = @transform_19, window_bounds = array<i64: 1, 8, 32>}]} {
    %c0 = arith.constant 0 : index
    %c0_0 = arith.constant 0 : index
    %c0_1 = arith.constant 0 : index
    %0 = vector.load %arg1[%c0, %c0_0, %c0_1] : memref<1x8x32xf32, #tpu.memory_space<vmem>>, vector<1x8x32xf32>
    %1 = vector.shape_cast %0 : vector<1x8x32xf32> to vector<8x32xf32>
    %2 = arith.truncf %0 : vector<1x8x32xf32> to vector<1x8x32xbf16>
    %3 = vector.shape_cast %2 : vector<1x8x32xbf16> to vector<1x1x8x32xbf16>
    %4 = vector.shape_cast %3 : vector<1x1x8x32xbf16> to vector<1x1x8x32xbf16>
    %5 = vector.broadcast %4 : vector<1x1x8x32xbf16> to vector<1x8x8x32xbf16>
    %6 = vector.shape_cast %5 : vector<1x8x8x32xbf16> to vector<8x8x32xbf16>
    %c0_2 = arith.constant 0 : index
    %c0_3 = arith.constant 0 : index
    %c0_4 = arith.constant 0 : index
    %7 = vector.load %arg4[%c0_2, %c0_3, %c0_4] : memref<8x32x4xbf16, #tpu.memory_space<vmem>>, vector<8x32x4xbf16>
    %8 = vector.shape_cast %7 : vector<8x32x4xbf16> to vector<1x8x32x4xbf16>
    %9 = vector.shape_cast %8 : vector<1x8x32x4xbf16> to vector<8x32x4xbf16>
    "tpu.trace_start"() <{level = 10 : i32, message = "nsd,ndf->nsf"}> : () -> ()
    %cst = arith.constant dense<0.000000e+00> : vector<8x8x4xf32>
    %10 = tpu.matmul %6, %9, %cst {dimension_numbers = #tpu.dot_dimension_numbers<[2], [1], [1], [2], [0, 0, 0, 1, 1, 2], [0], [0]>} : vector<8x8x32xbf16>, vector<8x32x4xbf16>, vector<8x8x4xf32> -> vector<8x8x4xf32>
    "tpu.trace_stop"() : () -> ()
    %c0_5 = arith.constant 0 : index
    %c0_6 = arith.constant 0 : index
    %c0_7 = arith.constant 0 : index
    %11 = vector.load %arg7[%c0_5, %c0_6, %c0_7] : memref<8x1x4xf32, #tpu.memory_space<vmem>>, vector<8x1x4xf32>
    %12 = vector.shape_cast %11 : vector<8x1x4xf32> to vector<1x8x1x4xf32>
    %13 = vector.shape_cast %12 : vector<1x8x1x4xf32> to vector<8x1x4xf32>
    %14 = vector.broadcast %13 : vector<8x1x4xf32> to vector<8x8x4xf32>
    %15 = arith.addf %10, %14 : vector<8x8x4xf32>
    %c0_8 = arith.constant 0 : index
    %c0_9 = arith.constant 0 : index
    %c0_10 = arith.constant 0 : index
    %16 = vector.load %arg5[%c0_8, %c0_9, %c0_10] : memref<8x32x4xbf16, #tpu.memory_space<vmem>>, vector<8x32x4xbf16>
    %17 = vector.shape_cast %16 : vector<8x32x4xbf16> to vector<1x8x32x4xbf16>
    %18 = vector.shape_cast %17 : vector<1x8x32x4xbf16> to vector<8x32x4xbf16>
    "tpu.trace_start"() <{level = 10 : i32, message = "nsd,ndf->nsf"}> : () -> ()
    %cst_11 = arith.constant dense<0.000000e+00> : vector<8x8x4xf32>
    %19 = tpu.matmul %6, %18, %cst_11 {dimension_numbers = #tpu.dot_dimension_numbers<[2], [1], [1], [2], [0, 0, 0, 1, 1, 2], [0], [0]>} : vector<8x8x32xbf16>, vector<8x32x4xbf16>, vector<8x8x4xf32> -> vector<8x8x4xf32>
    "tpu.trace_stop"() : () -> ()
    %c0_12 = arith.constant 0 : index
    %c0_13 = arith.constant 0 : index
    %c0_14 = arith.constant 0 : index
    %20 = vector.load %arg8[%c0_12, %c0_13, %c0_14] : memref<8x1x4xf32, #tpu.memory_space<vmem>>, vector<8x1x4xf32>
    %21 = vector.shape_cast %20 : vector<8x1x4xf32> to vector<1x8x1x4xf32>
    %22 = vector.shape_cast %21 : vector<1x8x1x4xf32> to vector<8x1x4xf32>
    %23 = vector.broadcast %22 : vector<8x1x4xf32> to vector<8x8x4xf32>
    %24 = arith.addf %19, %23 : vector<8x8x4xf32>
    %c0_15 = arith.constant 0 : index
    %c0_16 = arith.constant 0 : index
    %c0_17 = arith.constant 0 : index
    %25 = vector.load %arg6[%c0_15, %c0_16, %c0_17] : memref<8x32x4xbf16, #tpu.memory_space<vmem>>, vector<8x32x4xbf16>
    %26 = vector.shape_cast %25 : vector<8x32x4xbf16> to vector<1x8x32x4xbf16>
    %27 = vector.shape_cast %26 : vector<1x8x32x4xbf16> to vector<8x32x4xbf16>
    "tpu.trace_start"() <{level = 10 : i32, message = "nsd,ndf->nsf"}> : () -> ()
    %cst_18 = arith.constant dense<0.000000e+00> : vector<8x8x4xf32>
    %28 = tpu.matmul %6, %27, %cst_18 {dimension_numbers = #tpu.dot_dimension_numbers<[2], [1], [1], [2], [0, 0, 0, 1, 1, 2], [0], [0]>} : vector<8x8x32xbf16>, vector<8x32x4xbf16>, vector<8x8x4xf32> -> vector<8x8x4xf32>
    "tpu.trace_stop"() : () -> ()
    %c0_19 = arith.constant 0 : index
    %c0_20 = arith.constant 0 : index
    %c0_21 = arith.constant 0 : index
    %29 = vector.load %arg9[%c0_19, %c0_20, %c0_21] : memref<8x1x4xf32, #tpu.memory_space<vmem>>, vector<8x1x4xf32>
    %30 = vector.shape_cast %29 : vector<8x1x4xf32> to vector<1x8x1x4xf32>
    %31 = vector.shape_cast %30 : vector<1x8x1x4xf32> to vector<8x1x4xf32>
    %32 = vector.broadcast %31 : vector<8x1x4xf32> to vector<8x8x4xf32>
    %33 = arith.addf %28, %32 : vector<8x8x4xf32>
    %c0_22 = arith.constant 0 : index
    %c0_23 = arith.constant 0 : index
    %c0_24 = arith.constant 0 : index
    %34 = vector.load %arg2[%c0_22, %c0_23, %c0_24] : memref<1x1x8xf32, #tpu.memory_space<vmem>>, vector<1x1x8xf32>
    %cst_25 = arith.constant 0.000000e+00 : f32
    %35 = vector.broadcast %cst_25 : f32 to vector<1x1x8xf32>
    %36 = arith.cmpf ogt, %34, %35 : vector<1x1x8xf32>
    %cst_26 = arith.constant 0.000000e+00 : f32
    %cst_27 = arith.constant -1.000000e+09 : f32
    %37 = vector.broadcast %cst_26 : f32 to vector<1x1x8xf32>
    %38 = vector.broadcast %cst_27 : f32 to vector<1x1x8xf32>
    %39 = arith.select %36, %37, %38 : vector<1x1x8xi1>, vector<1x1x8xf32>
    %40 = vector.shape_cast %39 : vector<1x1x8xf32> to vector<1x1x1x8xf32>
    %41 = vector.shape_cast %40 : vector<1x1x1x8xf32> to vector<1x1x1x8xf32>
    %42 = vector.broadcast %41 : vector<1x1x1x8xf32> to vector<1x8x1x8xf32>
    %43 = vector.shape_cast %42 : vector<1x8x1x8xf32> to vector<8x1x8xf32>
    %44 = arith.truncf %15 : vector<8x8x4xf32> to vector<8x8x4xbf16>
    %45 = arith.truncf %24 : vector<8x8x4xf32> to vector<8x8x4xbf16>
    "tpu.trace_start"() <{level = 10 : i32, message = "nqf,nkf->nqk"}> : () -> ()
    %cst_28 = arith.constant dense<0.000000e+00> : vector<8x8x8xf32>
    %46 = tpu.matmul %44, %45, %cst_28 {dimension_numbers = #tpu.dot_dimension_numbers<[2], [2], [1], [1], [0, 0, 0, 1, 1, 1], [0], [0]>} : vector<8x8x4xbf16>, vector<8x8x4xbf16>, vector<8x8x8xf32> -> vector<8x8x8xf32>
    "tpu.trace_stop"() : () -> ()
    %cst_29 = arith.constant 5.000000e-01 : f32
    %47 = vector.broadcast %cst_29 : f32 to vector<8x8x8xf32>
    %48 = arith.mulf %46, %47 : vector<8x8x8xf32>
    %49 = vector.broadcast %43 : vector<8x1x8xf32> to vector<8x8x8xf32>
    %50 = arith.addf %48, %49 : vector<8x8x8xf32>
    %cst_30 = arith.constant dense<0xFF800000> : vector<8x8xf32>
    %51 = vector.multi_reduction <maximumf>, %50, %cst_30 [2] : vector<8x8x8xf32> to vector<8x8xf32>
    %52 = vector.shape_cast %51 : vector<8x8xf32> to vector<8x8x1xf32>
    %53 = vector.broadcast %52 : vector<8x8x1xf32> to vector<8x8x8xf32>
    %54 = arith.subf %50, %53 : vector<8x8x8xf32>
    %55 = math.exp %54 : vector<8x8x8xf32>
    %cst_31 = arith.constant dense<0.000000e+00> : vector<8x8xf32>
    %56 = vector.multi_reduction <add>, %55, %cst_31 [2] : vector<8x8x8xf32> to vector<8x8xf32>
    %57 = vector.shape_cast %56 : vector<8x8xf32> to vector<8x8x1xf32>
    %58 = vector.broadcast %57 : vector<8x8x1xf32> to vector<8x8x8xf32>
    %59 = arith.divf %55, %58 : vector<8x8x8xf32>
    %60 = arith.truncf %59 : vector<8x8x8xf32> to vector<8x8x8xbf16>
    %61 = arith.truncf %33 : vector<8x8x4xf32> to vector<8x8x4xbf16>
    "tpu.trace_start"() <{level = 10 : i32, message = "nqk,nkf->nqf"}> : () -> ()
    %cst_32 = arith.constant dense<0.000000e+00> : vector<8x8x4xf32>
    %62 = tpu.matmul %60, %61, %cst_32 {dimension_numbers = #tpu.dot_dimension_numbers<[2], [1], [1], [2], [0, 0, 0, 1, 1, 2], [0], [0]>} : vector<8x8x8xbf16>, vector<8x8x4xbf16>, vector<8x8x4xf32> -> vector<8x8x4xf32>
    "tpu.trace_stop"() : () -> ()
    %63 = arith.truncf %62 : vector<8x8x4xf32> to vector<8x8x4xbf16>
    %c0_33 = arith.constant 0 : index
    %c0_34 = arith.constant 0 : index
    %c0_35 = arith.constant 0 : index
    %64 = vector.load %arg10[%c0_33, %c0_34, %c0_35] : memref<8x4x32xbf16, #tpu.memory_space<vmem>>, vector<8x4x32xbf16>
    %65 = vector.shape_cast %64 : vector<8x4x32xbf16> to vector<1x8x4x32xbf16>
    %66 = vector.shape_cast %65 : vector<1x8x4x32xbf16> to vector<8x4x32xbf16>
    "tpu.trace_start"() <{level = 10 : i32, message = "nqf,nfe->nqe"}> : () -> ()
    %cst_36 = arith.constant dense<0.000000e+00> : vector<8x8x32xf32>
    %67 = tpu.matmul %63, %66, %cst_36 {dimension_numbers = #tpu.dot_dimension_numbers<[2], [1], [1], [2], [0, 0, 0, 1, 1, 2], [0], [0]>} : vector<8x8x4xbf16>, vector<8x4x32xbf16>, vector<8x8x32xf32> -> vector<8x8x32xf32>
    "tpu.trace_stop"() : () -> ()
    %68 = vector.shape_cast %67 : vector<8x8x32xf32> to vector<1x8x8x32xf32>
    %cst_37 = arith.constant dense<0.000000e+00> : vector<1x8x32xf32>
    %69 = vector.multi_reduction <add>, %68, %cst_37 [1] : vector<1x8x8x32xf32> to vector<1x8x32xf32>
    %70 = vector.shape_cast %69 : vector<1x8x32xf32> to vector<8x32xf32>
    %c0_38 = arith.constant 0 : index
    %c0_39 = arith.constant 0 : index
    %71 = vector.load %arg11[%c0_38, %c0_39] : memref<1x32xf32, #tpu.memory_space<vmem>>, vector<1x32xf32>
    %72 = vector.broadcast %71 : vector<1x32xf32> to vector<8x32xf32>
    %73 = arith.addf %70, %72 : vector<8x32xf32>
    %74 = arith.addf %1, %73 : vector<8x32xf32>
    %c0_40 = arith.constant 0 : index
    %c0_41 = arith.constant 0 : index
    %75 = vector.load %arg12[%c0_40, %c0_41] : memref<1x32xf32, #tpu.memory_space<vmem>>, vector<1x32xf32>
    %c0_42 = arith.constant 0 : index
    %c0_43 = arith.constant 0 : index
    %76 = vector.load %arg13[%c0_42, %c0_43] : memref<1x32xf32, #tpu.memory_space<vmem>>, vector<1x32xf32>
    %cst_44 = arith.constant dense<0.000000e+00> : vector<8xf32>
    %77 = vector.multi_reduction <add>, %74, %cst_44 [1] : vector<8x32xf32> to vector<8xf32>
    %78 = vector.shape_cast %77 : vector<8xf32> to vector<8x1xf32>
    %cst_45 = arith.constant 3.200000e+01 : f32
    %79 = vector.broadcast %cst_45 : f32 to vector<8x1xf32>
    %80 = arith.divf %78, %79 : vector<8x1xf32>
    %81 = vector.broadcast %80 : vector<8x1xf32> to vector<8x32xf32>
    %82 = arith.subf %74, %81 : vector<8x32xf32>
    %83 = arith.mulf %82, %82 : vector<8x32xf32>
    %cst_46 = arith.constant dense<0.000000e+00> : vector<8xf32>
    %84 = vector.multi_reduction <add>, %83, %cst_46 [1] : vector<8x32xf32> to vector<8xf32>
    %85 = vector.shape_cast %84 : vector<8xf32> to vector<8x1xf32>
    %cst_47 = arith.constant 3.200000e+01 : f32
    %86 = vector.broadcast %cst_47 : f32 to vector<8x1xf32>
    %87 = arith.divf %85, %86 : vector<8x1xf32>
    %88 = vector.broadcast %80 : vector<8x1xf32> to vector<8x32xf32>
    %89 = arith.subf %74, %88 : vector<8x32xf32>
    %cst_48 = arith.constant 9.99999974E-6 : f32
    %90 = vector.broadcast %cst_48 : f32 to vector<8x1xf32>
    %91 = arith.addf %87, %90 : vector<8x1xf32>
    %92 = math.rsqrt %91 : vector<8x1xf32>
    %93 = vector.broadcast %92 : vector<8x1xf32> to vector<8x32xf32>
    %94 = arith.mulf %89, %93 : vector<8x32xf32>
    %95 = vector.broadcast %75 : vector<1x32xf32> to vector<8x32xf32>
    %96 = arith.mulf %94, %95 : vector<8x32xf32>
    %97 = vector.broadcast %76 : vector<1x32xf32> to vector<8x32xf32>
    %98 = arith.addf %96, %97 : vector<8x32xf32>
    %99 = arith.truncf %98 : vector<8x32xf32> to vector<8x32xbf16>
    %c0_49 = arith.constant 0 : index
    %c0_50 = arith.constant 0 : index
    %100 = vector.load %arg14[%c0_49, %c0_50] : memref<32x64xbf16, #tpu.memory_space<vmem>>, vector<32x64xbf16>
    %cst_51 = arith.constant dense<0.000000e+00> : vector<8x64xf32>
    %101 = tpu.matmul %99, %100, %cst_51 {dimension_numbers = #tpu.dot_dimension_numbers<[1], [0], [0], [1], [0, 0, 1, 1], [], []>} : vector<8x32xbf16>, vector<32x64xbf16>, vector<8x64xf32> -> vector<8x64xf32>
    %c0_52 = arith.constant 0 : index
    %c0_53 = arith.constant 0 : index
    %102 = vector.load %arg15[%c0_52, %c0_53] : memref<1x64xf32, #tpu.memory_space<vmem>>, vector<1x64xf32>
    %103 = vector.broadcast %102 : vector<1x64xf32> to vector<8x64xf32>
    %104 = arith.addf %101, %103 : vector<8x64xf32>
    %105 = arith.mulf %104, %104 : vector<8x64xf32>
    %106 = arith.mulf %104, %105 : vector<8x64xf32>
    %cst_54 = arith.constant 4.471500e-02 : f32
    %107 = vector.broadcast %cst_54 : f32 to vector<8x64xf32>
    %108 = arith.mulf %107, %106 : vector<8x64xf32>
    %109 = arith.addf %104, %108 : vector<8x64xf32>
    %cst_55 = arith.constant 0.797884583 : f32
    %110 = vector.broadcast %cst_55 : f32 to vector<8x64xf32>
    %111 = arith.mulf %110, %109 : vector<8x64xf32>
    %112 = math.tanh %111 : vector<8x64xf32>
    %cst_56 = arith.constant 1.000000e+00 : f32
    %113 = vector.broadcast %cst_56 : f32 to vector<8x64xf32>
    %114 = arith.addf %113, %112 : vector<8x64xf32>
    %cst_57 = arith.constant 5.000000e-01 : f32
    %115 = vector.broadcast %cst_57 : f32 to vector<8x64xf32>
    %116 = arith.mulf %115, %114 : vector<8x64xf32>
    %117 = arith.mulf %104, %116 : vector<8x64xf32>
    %118 = arith.truncf %117 : vector<8x64xf32> to vector<8x64xbf16>
    %c0_58 = arith.constant 0 : index
    %c0_59 = arith.constant 0 : index
    %119 = vector.load %arg16[%c0_58, %c0_59] : memref<64x32xbf16, #tpu.memory_space<vmem>>, vector<64x32xbf16>
    %cst_60 = arith.constant dense<0.000000e+00> : vector<8x32xf32>
    %120 = tpu.matmul %118, %119, %cst_60 {dimension_numbers = #tpu.dot_dimension_numbers<[1], [0], [0], [1], [0, 0, 1, 1], [], []>} : vector<8x64xbf16>, vector<64x32xbf16>, vector<8x32xf32> -> vector<8x32xf32>
    %c0_61 = arith.constant 0 : index
    %c0_62 = arith.constant 0 : index
    %121 = vector.load %arg17[%c0_61, %c0_62] : memref<1x32xf32, #tpu.memory_space<vmem>>, vector<1x32xf32>
    %122 = vector.broadcast %121 : vector<1x32xf32> to vector<8x32xf32>
    %123 = arith.addf %120, %122 : vector<8x32xf32>
    %124 = arith.addf %98, %123 : vector<8x32xf32>
    %c0_63 = arith.constant 0 : index
    %c0_64 = arith.constant 0 : index
    %125 = vector.load %arg18[%c0_63, %c0_64] : memref<1x32xf32, #tpu.memory_space<vmem>>, vector<1x32xf32>
    %c0_65 = arith.constant 0 : index
    %c0_66 = arith.constant 0 : index
    %126 = vector.load %arg19[%c0_65, %c0_66] : memref<1x32xf32, #tpu.memory_space<vmem>>, vector<1x32xf32>
    %cst_67 = arith.constant dense<0.000000e+00> : vector<8xf32>
    %127 = vector.multi_reduction <add>, %124, %cst_67 [1] : vector<8x32xf32> to vector<8xf32>
    %128 = vector.shape_cast %127 : vector<8xf32> to vector<8x1xf32>
    %cst_68 = arith.constant 3.200000e+01 : f32
    %129 = vector.broadcast %cst_68 : f32 to vector<8x1xf32>
    %130 = arith.divf %128, %129 : vector<8x1xf32>
    %131 = vector.broadcast %130 : vector<8x1xf32> to vector<8x32xf32>
    %132 = arith.subf %124, %131 : vector<8x32xf32>
    %133 = arith.mulf %132, %132 : vector<8x32xf32>
    %cst_69 = arith.constant dense<0.000000e+00> : vector<8xf32>
    %134 = vector.multi_reduction <add>, %133, %cst_69 [1] : vector<8x32xf32> to vector<8xf32>
    %135 = vector.shape_cast %134 : vector<8xf32> to vector<8x1xf32>
    %cst_70 = arith.constant 3.200000e+01 : f32
    %136 = vector.broadcast %cst_70 : f32 to vector<8x1xf32>
    %137 = arith.divf %135, %136 : vector<8x1xf32>
    %138 = vector.broadcast %130 : vector<8x1xf32> to vector<8x32xf32>
    %139 = arith.subf %124, %138 : vector<8x32xf32>
    %cst_71 = arith.constant 9.99999974E-6 : f32
    %140 = vector.broadcast %cst_71 : f32 to vector<8x1xf32>
    %141 = arith.addf %137, %140 : vector<8x1xf32>
    %142 = math.rsqrt %141 : vector<8x1xf32>
    %143 = vector.broadcast %142 : vector<8x1xf32> to vector<8x32xf32>
    %144 = arith.mulf %139, %143 : vector<8x32xf32>
    %145 = vector.broadcast %125 : vector<1x32xf32> to vector<8x32xf32>
    %146 = arith.mulf %144, %145 : vector<8x32xf32>
    %147 = vector.broadcast %126 : vector<1x32xf32> to vector<8x32xf32>
    %148 = arith.addf %146, %147 : vector<8x32xf32>
    %149 = arith.mulf %148, %148 : vector<8x32xf32>
    %150 = arith.mulf %148, %149 : vector<8x32xf32>
    %cst_72 = arith.constant 4.471500e-02 : f32
    %151 = vector.broadcast %cst_72 : f32 to vector<8x32xf32>
    %152 = arith.mulf %151, %150 : vector<8x32xf32>
    %153 = arith.addf %148, %152 : vector<8x32xf32>
    %cst_73 = arith.constant 0.797884583 : f32
    %154 = vector.broadcast %cst_73 : f32 to vector<8x32xf32>
    %155 = arith.mulf %154, %153 : vector<8x32xf32>
    %156 = math.tanh %155 : vector<8x32xf32>
    %cst_74 = arith.constant 1.000000e+00 : f32
    %157 = vector.broadcast %cst_74 : f32 to vector<8x32xf32>
    %158 = arith.addf %157, %156 : vector<8x32xf32>
    %cst_75 = arith.constant 5.000000e-01 : f32
    %159 = vector.broadcast %cst_75 : f32 to vector<8x32xf32>
    %160 = arith.mulf %159, %158 : vector<8x32xf32>
    %161 = arith.mulf %148, %160 : vector<8x32xf32>
    %c0_76 = arith.constant 0 : index
    %c0_77 = arith.constant 0 : index
    %c0_78 = arith.constant 0 : index
    %162 = vector.load %arg3[%c0_76, %c0_77, %c0_78] : memref<1x8x1xf32, #tpu.memory_space<vmem>>, vector<1x8x1xf32>
    %163 = vector.shape_cast %162 : vector<1x8x1xf32> to vector<8x1xf32>
    %164 = vector.broadcast %163 : vector<8x1xf32> to vector<8x32xf32>
    %165 = arith.mulf %161, %164 : vector<8x32xf32>
    %166 = vector.shape_cast %165 : vector<8x32xf32> to vector<1x8x32xf32>
    %c0_79 = arith.constant 0 : index
    %c0_80 = arith.constant 0 : index
    %c0_81 = arith.constant 0 : index
    %167 = vector.load %arg20[%c0_79, %c0_80, %c0_81] : memref<1x8x32xf32, #tpu.memory_space<vmem>>, vector<1x8x32xf32>
    tpu.vector_store %arg20[%c0_79, %c0_80, %c0_81], %166 {strides = array<i32>} : memref<1x8x32xf32, #tpu.memory_space<vmem>>, vector<1x8x32xf32>,
    return
  }
  func.func @transform_0(%arg0: i32) -> (i32, i32, i32) {
    %c0_i32 = arith.constant 0 : i32
    %c0_i32_0 = arith.constant 0 : i32
    %c0_i32_1 = arith.constant 0 : i32
    return %arg0, %c0_i32, %c0_i32_0 : i32, i32, i32
  }
  func.func @transform_1(%arg0: i32) -> (i32, i32, i32) {
    %c0_i32 = arith.constant 0 : i32
    %c0_i32_0 = arith.constant 0 : i32
    %c0_i32_1 = arith.constant 0 : i32
    return %arg0, %c0_i32, %c0_i32_0 : i32, i32, i32
  }
  func.func @transform_2(%arg0: i32) -> (i32, i32, i32) {
    %c0_i32 = arith.constant 0 : i32
    %c0_i32_0 = arith.constant 0 : i32
    %c0_i32_1 = arith.constant 0 : i32
    return %arg0, %c0_i32, %c0_i32_0 : i32, i32, i32
  }
  func.func @transform_3(%arg0: i32) -> (i32, i32, i32) {
    %c0_i32 = arith.constant 0 : i32
    %c0_i32_0 = arith.constant 0 : i32
    %c0_i32_1 = arith.constant 0 : i32
    %c0_i32_2 = arith.constant 0 : i32
    return %c0_i32, %c0_i32_0, %c0_i32_1 : i32, i32, i32
  }
  func.func @transform_4(%arg0: i32) -> (i32, i32, i32) {
    %c0_i32 = arith.constant 0 : i32
    %c0_i32_0 = arith.constant 0 : i32
    %c0_i32_1 = arith.constant 0 : i32
    %c0_i32_2 = arith.constant 0 : i32
    return %c0_i32, %c0_i32_0, %c0_i32_1 : i32, i32, i32
  }
  func.func @transform_5(%arg0: i32) -> (i32, i32, i32) {
    %c0_i32 = arith.constant 0 : i32
    %c0_i32_0 = arith.constant 0 : i32
    %c0_i32_1 = arith.constant 0 : i32
    %c0_i32_2 = arith.constant 0 : i32
    return %c0_i32, %c0_i32_0, %c0_i32_1 : i32, i32, i32
  }
  func.func @transform_6(%arg0: i32) -> (i32, i32, i32) {
    %c0_i32 = arith.constant 0 : i32
    %c0_i32_0 = arith.constant 0 : i32
    %c0_i32_1 = arith.constant 0 : i32
    %c0_i32_2 = arith.constant 0 : i32
    return %c0_i32, %c0_i32_0, %c0_i32_1 : i32, i32, i32
  }
  func.func @transform_7(%arg0: i32) -> (i32, i32, i32) {
    %c0_i32 = arith.constant 0 : i32
    %c0_i32_0 = arith.constant 0 : i32
    %c0_i32_1 = arith.constant 0 : i32
    %c0_i32_2 = arith.constant 0 : i32
    return %c0_i32, %c0_i32_0, %c0_i32_1 : i32, i32, i32
  }
  func.func @transform_8(%arg0: i32) -> (i32, i32, i32) {
    %c0_i32 = arith.constant 0 : i32
    %c0_i32_0 = arith.constant 0 : i32
    %c0_i32_1 = arith.constant 0 : i32
    %c0_i32_2 = arith.constant 0 : i32
    return %c0_i32, %c0_i32_0, %c0_i32_1 : i32, i32, i32
  }
  func.func @transform_9(%arg0: i32) -> (i32, i32, i32) {
    %c0_i32 = arith.constant 0 : i32
    %c0_i32_0 = arith.constant 0 : i32
    %c0_i32_1 = arith.constant 0 : i32
    %c0_i32_2 = arith.constant 0 : i32
    return %c0_i32, %c0_i32_0, %c0_i32_1 : i32, i32, i32
  }
  func.func @transform_10(%arg0: i32) -> (i32, i32) {
    %c0_i32 = arith.constant 0 : i32
    %c0_i32_0 = arith.constant 0 : i32
    %c0_i32_1 = arith.constant 0 : i32
    return %c0_i32, %c0_i32_0 : i32, i32
  }
  func.func @transform_11(%arg0: i32) -> (i32, i32) {
    %c0_i32 = arith.constant 0 : i32
    %c0_i32_0 = arith.constant 0 : i32
    %c0_i32_1 = arith.constant 0 : i32
    return %c0_i32, %c0_i32_0 : i32, i32
  }
  func.func @transform_12(%arg0: i32) -> (i32, i32) {
    %c0_i32 = arith.constant 0 : i32
    %c0_i32_0 = arith.constant 0 : i32
    %c0_i32_1 = arith.constant 0 : i32
    return %c0_i32, %c0_i32_0 : i32, i32
  }
  func.func @transform_13(%arg0: i32) -> (i32, i32) {
    %c0_i32 = arith.constant 0 : i32
    %c0_i32_0 = arith.constant 0 : i32
    %c0_i32_1 = arith.constant 0 : i32
    return %c0_i32, %c0_i32_0 : i32, i32
  }
  func.func @transform_14(%arg0: i32) -> (i32, i32) {
    %c0_i32 = arith.constant 0 : i32
    %c0_i32_0 = arith.constant 0 : i32
    %c0_i32_1 = arith.constant 0 : i32
    return %c0_i32, %c0_i32_0 : i32, i32
  }
  func.func @transform_15(%arg0: i32) -> (i32, i32) {
    %c0_i32 = arith.constant 0 : i32
    %c0_i32_0 = arith.constant 0 : i32
    %c0_i32_1 = arith.constant 0 : i32
    return %c0_i32, %c0_i32_0 : i32, i32
  }
  func.func @transform_16(%arg0: i32) -> (i32, i32) {
    %c0_i32 = arith.constant 0 : i32
    %c0_i32_0 = arith.constant 0 : i32
    %c0_i32_1 = arith.constant 0 : i32
    return %c0_i32, %c0_i32_0 : i32, i32
  }
  func.func @transform_17(%arg0: i32) -> (i32, i32) {
    %c0_i32 = arith.constant 0 : i32
    %c0_i32_0 = arith.constant 0 : i32
    %c0_i32_1 = arith.constant 0 : i32
    return %c0_i32, %c0_i32_0 : i32, i32
  }
  func.func @transform_18(%arg0: i32) -> (i32, i32) {
    %c0_i32 = arith.constant 0 : i32
    %c0_i32_0 = arith.constant 0 : i32
    %c0_i32_1 = arith.constant 0 : i32
    return %c0_i32, %c0_i32_0 : i32, i32
  }
  func.func @transform_19(%arg0: i32) -> (i32, i32, i32) {
    %c0_i32 = arith.constant 0 : i32
    %c0_i32_0 = arith.constant 0 : i32
    %c0_i32_1 = arith.constant 0 : i32
    return %arg0, %c0_i32, %c0_i32_0 : i32, i32, i32
  }
}

</mosaic_0001>

<llo_original>
// kernel: forward.4
$region0: #{forward.4}
  #allocation0 [shape = 'u32[]', space=smem, size = 0x4, offset = 0x4, fixed_abs, tag = 'smem constant byte address 0x4 - core index']
  #allocation1 [shape = 'u32[72,128]{1,0:T(1,128)}', space=vmem, size = 0x9000, scoped, tag = 'internal scratch']
  %s0 = inlined_call_operand.vmem [shape: f32[2,8,4], index: 0, kind: input, shape index: {}]
  %s1 = inlined_call_operand.vmem [shape: bf16[4,32], index: 1, kind: input, shape index: {}]
  %s2 = inlined_call_operand.vmem [shape: f32[1,32], index: 2, kind: input, shape index: {}]
  %s3 = inlined_call_operand.vmem [shape: f32[8,32], index: 3, kind: input, shape index: {}]
  %s4 = inlined_call_operand.vmem [shape: f32[2,8,32], index: 4, kind: output, shape index: {}]
  %s5 = sld [smem:[#allocation0]]
  $region49: #{forward.4} parent=0
    _
  %s7 = ssub.s32 1, %s5
  %s8 = scalar_select 0, %s7, %s5
  loop: start=0, step=1, limit=4
  $region2: #{forward.4} parent=0 // loop_pre_header
    _
  $region3: #{forward.4} parent=0 // loop_header
    %s10 = sphi 0, %s14
    %p11 = scmp.ge.s32.totalorder %s10, 4
    %s20 = sphi 0, %s22
    %s23 = sphi 0, %s20
    %s24 = sphi 0, %s23
    %s40 = sphi 0, %s24
    %s44 = sphi 0, %s44
    %s46 = sphi 0, %s44
    %s47 = sphi 0, %s46
    %s61 = sphi 0, %s47
    %s65 = sphi 0, %s65
    %s67 = sphi 0, %s65
    %s68 = sphi 0, %s67
    %s82 = sphi 0, %s68
    %s86 = sphi 0, %s86
    %s88 = sphi 0, %s86
    %s89 = sphi 0, %s88
    %s103 = sphi 0, %s89
    %s109 = sphi 0, %s111
    %s112 = sphi 0, %s109
    %s113 = sphi 0, %s112
    %s129 = sphi 0, %s113
  $region4: #{forward.4} parent=0 // loop_header_branch
    %13 = sbr.rel (%p11) target = $region8
  $region5: #{forward.4} parent=0 // loop_body
    %s15 = ssub.s32 %s10, 1
    %s16 = ssub.s32 %s10, 2
    %s17 = sadd.s32 %s10, 1
    %s18 = ssub.s32 %s10, %s17
    %p19 = scmp.eq.s32.totalorder %s18, 0
    %s21 = sadd.s32 %s20, 1
    %s22 = scalar_select %p19, %s20, %s21
    %p25 = pneg %p19
    %p26 = scmp.eq.s32.totalorder %s10, 1
    %p27 = por %p25, %p26
    %p28 = scmp.ne.s32.totalorder %s20, %s23
    %p29 = scmp.eq.s32.totalorder %s10, 0
    %p30 = por %p28, %p29
    %p31 = scmp.ne.s32.totalorder %s20, %s23
    %p32 = scmp.eq.s32.totalorder %s15, 1
    %p33 = por %p31, %p32
    %p34 = scmp.ne.s32.totalorder %s23, %s24
    %p35 = scmp.eq.s32.totalorder %s15, 0
    %p36 = por %p34, %p35
    %p37 = scmp.ne.s32.totalorder %s23, %s24
    %p38 = scmp.eq.s32.totalorder %s16, 1
    %p39 = por %p37, %p38
    %p41 = scmp.ne.s32.totalorder %s24, %s40
    %p42 = scmp.eq.s32.totalorder %s16, 0
    %p43 = por %p41, %p42
    %s45 = sadd.s32 %s44, 1
    %p48 = scmp.eq.s32.totalorder %s10, 1
    %p49 = scmp.ne.s32.totalorder %s44, %s46
    %p50 = scmp.eq.s32.totalorder %s10, 0
    %p51 = por %p49, %p50
    %p52 = scmp.ne.s32.totalorder %s44, %s46
    %p53 = scmp.eq.s32.totalorder %s15, 1
    %p54 = por %p52, %p53
    %p55 = scmp.ne.s32.totalorder %s46, %s47
    %p56 = scmp.eq.s32.totalorder %s15, 0
    %p57 = por %p55, %p56
    %p58 = scmp.ne.s32.totalorder %s46, %s47
    %p59 = scmp.eq.s32.totalorder %s16, 1
    %p60 = por %p58, %p59
    %p62 = scmp.ne.s32.totalorder %s47, %s61
    %p63 = scmp.eq.s32.totalorder %s16, 0
    %p64 = por %p62, %p63
    %s66 = sadd.s32 %s65, 1
    %p69 = scmp.eq.s32.totalorder %s10, 1
    %p70 = scmp.ne.s32.totalorder %s65, %s67
    %p71 = scmp.eq.s32.totalorder %s10, 0
    %p72 = por %p70, %p71
    %p73 = scmp.ne.s32.totalorder %s65, %s67
    %p74 = scmp.eq.s32.totalorder %s15, 1
    %p75 = por %p73, %p74
    %p76 = scmp.ne.s32.totalorder %s67, %s68
    %p77 = scmp.eq.s32.totalorder %s15, 0
    %p78 = por %p76, %p77
    %p79 = scmp.ne.s32.totalorder %s67, %s68
    %p80 = scmp.eq.s32.totalorder %s16, 1
    %p81 = por %p79, %p80
    %p83 = scmp.ne.s32.totalorder %s68, %s82
    %p84 = scmp.eq.s32.totalorder %s16, 0
    %p85 = por %p83, %p84
    %s87 = sadd.s32 %s86, 1
    %p90 = scmp.eq.s32.totalorder %s10, 1
    %p91 = scmp.ne.s32.totalorder %s86, %s88
    %p92 = scmp.eq.s32.totalorder %s10, 0
    %p93 = por %p91, %p92
    %p94 = scmp.ne.s32.totalorder %s86, %s88
    %p95 = scmp.eq.s32.totalorder %s15, 1
    %p96 = por %p94, %p95
    %p97 = scmp.ne.s32.totalorder %s88, %s89
    %p98 = scmp.eq.s32.totalorder %s15, 0
    %p99 = por %p97, %p98
    %p100 = scmp.ne.s32.totalorder %s88, %s89
    %p101 = scmp.eq.s32.totalorder %s16, 1
    %p102 = por %p100, %p101
    %p104 = scmp.ne.s32.totalorder %s89, %s103
    %p105 = scmp.eq.s32.totalorder %s16, 0
    %p106 = por %p104, %p105
    %s107 = ssub.s32 %s10, %s17
    %p108 = scmp.eq.s32.totalorder %s107, 0
    %s110 = sadd.s32 %s109, 1
    %s111 = scalar_select %p108, %s109, %s110
    %p114 = pneg %p108
    %p115 = scmp.eq.s32.totalorder %s10, 1
    %p116 = por %p114, %p115
    %p117 = scmp.ne.s32.totalorder %s109, %s112
    %p118 = scmp.eq.s32.totalorder %s10, 0
    %p119 = por %p117, %p118
    %p120 = scmp.ne.s32.totalorder %s109, %s112
    %p121 = scmp.eq.s32.totalorder %s15, 1
    %p122 = por %p120, %p121
    %p123 = scmp.ne.s32.totalorder %s112, %s113
    %p124 = scmp.eq.s32.totalorder %s15, 0
    %p125 = por %p123, %p124
    %p126 = scmp.ne.s32.totalorder %s112, %s113
    %p127 = scmp.eq.s32.totalorder %s16, 1
    %p128 = por %p126, %p127
    %p130 = scmp.ne.s32.totalorder %s113, %s129
    %p131 = scmp.eq.s32.totalorder %s16, 0
    %p132 = por %p130, %p131
    %p133 = scmp.le.s32.totalorder 1, %s10
    %p134 = scmp.lt.s32.totalorder %s10, 3
    %p135 = pnand %p133, %p134
    %p136 = pneg %p135
    // Predicated region
    $region9: #{forward.4} parent=5 // pred_check
      _
    $region10: #{forward.4} parent=5 // pred_check_branch
      %138 = sbr.rel (%p135) target = $region12
    $region11: #{forward.4} parent=5 // pred_region
      %s139 = ssub.s32 %s10, 1
      // Predicated region
      $region13: #{forward.4} parent=11 // pred_check
        %p140 = pneg %p57
      $region14: #{forward.4} parent=11 // pred_check_branch
        %142 = sbr.rel (%p140) target = $region16
      $region15: #{forward.4} parent=11 // pred_region
        _
      $region16: #{forward.4} parent=11 // pred_fallthru
        _
      // Predicated region
      $region17: #{forward.4} parent=11 // pred_check
        %p143 = pneg %p78
      $region18: #{forward.4} parent=11 // pred_check_branch
        %145 = sbr.rel (%p143) target = $region20
      $region19: #{forward.4} parent=11 // pred_region
        _
      $region20: #{forward.4} parent=11 // pred_fallthru
        _
      // Predicated region
      $region21: #{forward.4} parent=11 // pred_check
        %p146 = pneg %p99
      $region22: #{forward.4} parent=11 // pred_check_branch
        %148 = sbr.rel (%p146) target = $region24
      $region23: #{forward.4} parent=11 // pred_region
        _
      $region24: #{forward.4} parent=11 // pred_fallthru
        _
    $region12: #{forward.4} parent=5 // pred_fallthru
      _
    %p149 = scmp.lt.s32.totalorder %s10, 2
    // Predicated region
    $region25: #{forward.4} parent=5 // pred_check
      %p150 = pneg %p149
    $region26: #{forward.4} parent=5 // pred_check_branch
      %152 = sbr.rel (%p150) target = $region28
    $region27: #{forward.4} parent=5 // pred_region
      // Predicated region
      $region29: #{forward.4} parent=27 // pred_check
        %p153 = pneg %p30
      $region30: #{forward.4} parent=27 // pred_check_branch
        %155 = sbr.rel (%p153) target = $region32
      $region31: #{forward.4} parent=27 // pred_region
        %p156 = scmp.lt.s32.totalorder %s10, 1
        %s157 = scalar_select %p156, %s10, 1
        %s158 = smul.addr %s157, 8
        %s159 = scalar_lea.vmem %s0, %s158
      $region32: #{forward.4} parent=27 // pred_fallthru
        _
    $region28: #{forward.4} parent=5 // pred_fallthru
      _
    %p160 = scmp.le.s32.totalorder 1, %s10
    %p161 = scmp.lt.s32.totalorder %s10, 3
    %p162 = pnand %p160, %p161
    %p163 = pneg %p162
    // Predicated region
    $region33: #{forward.4} parent=5 // pred_check
      _
    $region34: #{forward.4} parent=5 // pred_check_branch
      %165 = sbr.rel (%p162) target = $region36
    $region35: #{forward.4} parent=5 // pred_region
      %s166 = ssub.s32 %s10, 1
      %p167 = scmp.lt.s32.totalorder %s15, 1
      %s168 = scalar_select %p167, %s15, 1
      %s169 = smul.addr %s168, 8
      %s170 = scalar_lea.vmem %s0, %s169
      %p171 = pneg %p36
      %p172 = pneg %p33
      %p173 = pneg %p57
      %p174 = pneg %p54
      %p175 = pneg %p78
      %p176 = pneg %p75
      %p177 = pneg %p99
      %p178 = pneg %p96
      %p179 = pneg %p125
      %p180 = pneg %p122
      %p181 = scmp.lt.s32.totalorder %s15, 1
      %s182 = scalar_select %p181, %s15, 1
      %s183 = smul.addr %s182, 8
      %s184 = scalar_lea.vmem %s4, %s183
      %p185 = scmp.lt.s32.totalorder %s15, 1
      %s186 = scalar_select %p185, %s15, 1
      %s187 = smul.addr %s186, 8
      %s188 = scalar_lea.vmem %s0, %s187
      %p189 = scmp.lt.s32.totalorder %s15, 1
      %s190 = scalar_select %p189, %s15, 1
      %s191 = smul.addr %s190, 8
      %s192 = scalar_lea.vmem %s4, %s191
      %v194 = vld [vmem:[%s188] sm:$0xff]
      %v195 = vpack.c.bf16 %v194, %v194
      %v196 = vld [vmem:[%s1] sm:$0x3]
      %v197 = vld [vmem:[%s2] sm:$0x1]
      %v199 = vperm.slane %v197, 0
      %vm201 = vcmask 31744
      %v203 = vsel %vm201, %v195, 0
      %vm205 = vcmask 1041408
      %v207 = vsel %vm205, %v196, 0
      %209 = vmatpush.bf16.msra.mxu0 0
      %210 = vmatpush.bf16.msra.mxu0 0
      %211 = vmatpush.bf16.msra.mxu0 0
      %212 = vmatpush.bf16.msra.mxu0 0
      %213 = vmatpush.bf16.msra.mxu0 0
      %214 = vmatpush.bf16.msra.mxu0 0
      %215 = vmatpush.bf16.msra.mxu0 0
      %216 = vmatpush.bf16.msra.mxu0 %v207
      %217 = vmatmul.bf16.gmra.mxu0 %v203
      %v218 = vpop.f32.mrf.mxu0
      %v219 = vadd.f32 %v199, %v218
      %v220 = vpop.f32.mrf.mxu0
      %221 = vdwg.mxu0
      %v222 = vmul.f32 %v219, 5.656854
      %v223 = vld [vmem:[%s3] sm:$0xff]
      %v224 = vadd.f32 %v222, %v223
      %vm225 = vcmask 261120
      %226 = vst.msk [vmem:[%s192] sm:$0xff] %vm225, %v224
      %p227 = scmp.lt.s32.totalorder %s15, 1
      %s228 = scalar_select %p227, %s15, 1
      %s229 = smul.addr %s228, 8
      %s230 = scalar_lea.vmem %s4, %s229
      // Predicated region
      $region37: #{forward.4} parent=35 // pred_check
        %p231 = pneg %p122
      $region38: #{forward.4} parent=35 // pred_check_branch
        %233 = sbr.rel (%p231) target = $region40
      $region39: #{forward.4} parent=35 // pred_region
        _
      $region40: #{forward.4} parent=35 // pred_fallthru
        _
    $region36: #{forward.4} parent=5 // pred_fallthru
      _
    %p234 = scmp.le.s32.totalorder 2, %s10
    // Predicated region
    $region41: #{forward.4} parent=5 // pred_check
      %p235 = pneg %p234
    $region42: #{forward.4} parent=5 // pred_check_branch
      %237 = sbr.rel (%p235) target = $region44
    $region43: #{forward.4} parent=5 // pred_region
      %s238 = ssub.s32 %s10, 2
      // Predicated region
      $region45: #{forward.4} parent=43 // pred_check
        %p239 = pneg %p128
      $region46: #{forward.4} parent=43 // pred_check_branch
        %241 = sbr.rel (%p239) target = $region48
      $region47: #{forward.4} parent=43 // pred_region
        %p242 = scmp.lt.s32.totalorder %s16, 1
        %s243 = scalar_select %p242, %s16, 1
        %s244 = smul.addr %s243, 8
        %s245 = scalar_lea.vmem %s4, %s244
      $region48: #{forward.4} parent=43 // pred_fallthru
        _
    $region44: #{forward.4} parent=5 // pred_fallthru
      _
  $region6: #{forward.4} parent=0 // loop_footer
    %s14 = sadd.s32 1, %s10
  $region7: #{forward.4} parent=0 // loop_footer_branch
    %9 = sbr.rel target = $region3
  $region8: #{forward.4} parent=0 // loop_exit
    _

// kernel: forward.7
$region0: #{forward.7}
  #allocation0 [shape = 'u32[]', space=smem, size = 0x4, offset = 0x4, fixed_abs, tag = 'smem constant byte address 0x4 - core index']
  #allocation1 [shape = 'u32[72,128]{1,0:T(1,128)}', space=vmem, size = 0x9000, scoped, tag = 'internal scratch']
  #allocation2 [shape = 'f32[2,128]{1,0:T(2,128)}', space=vmem, size = 0x400, scoped, tag = 'scratch operand']
  %s0 = inlined_call_operand.vmem [shape: f32[2,256], index: 0, kind: input, shape index: {}]
  %s1 = inlined_call_operand.vmem [shape: bf16[256,128], index: 1, kind: input, shape index: {}]
  %s2 = inlined_call_operand.vmem [shape: f32[1,128], index: 2, kind: input, shape index: {}]
  %s3 = inlined_call_operand.hbm [shape: f32[2,128], index: 3, kind: output, shape index: {}]
  %s4 = sld [smem:[#allocation0]]
  $region53: #{forward.7} parent=0
    _
  %s6 = ssub.s32 1, %s4
  %s7 = scalar_select 0, %s6, %s4
  $region1: #{forward.7} parent=0
    #allocation3 [shape = 'u8[1024]{0}', space=vmem, size = 0x400, scoped, tag = 'output window, operand 0, single buffered']
    #allocation4 [shape = 's32[2]{0}', space=sflag, size = 0x8, scoped, tag = 'scoped memory for forward.7']
    %8 = vsyncpa [#allocation4], 0
    loop: start=0, step=1, limit=4
    $region2: #{forward.7} parent=1 // loop_pre_header
      _
    $region3: #{forward.7} parent=1 // loop_header
      %s10 = sphi 0, %s14
      %p11 = scmp.ge.s32.totalorder %s10, 4
      %s20 = sphi 0, %s22
      %s23 = sphi 0, %s20
      %s24 = sphi 0, %s23
      %s40 = sphi 0, %s24
      %s46 = sphi 0, %s48
      %s49 = sphi 0, %s46
      %s50 = sphi 0, %s49
      %s66 = sphi 0, %s50
      %s70 = sphi 0, %s70
      %s72 = sphi 0, %s70
      %s73 = sphi 0, %s72
      %s87 = sphi 0, %s73
      %s91 = sphi 0, %s91
      %s93 = sphi 0, %s91
      %s94 = sphi 0, %s93
      %s108 = sphi 0, %s94
    $region4: #{forward.7} parent=1 // loop_header_branch
      %13 = sbr.rel (%p11) target = $region8
    $region5: #{forward.7} parent=1 // loop_body
      %s15 = ssub.s32 %s10, 1
      %s16 = ssub.s32 %s10, 2
      %s17 = sadd.s32 %s10, 1
      %s18 = ssub.s32 %s10, %s17
      %p19 = scmp.eq.s32.totalorder %s18, 0
      %s21 = sadd.s32 %s20, 1
      %s22 = scalar_select %p19, %s20, %s21
      %p25 = pneg %p19
      %p26 = scmp.eq.s32.totalorder %s10, 1
      %p27 = por %p25, %p26
      %p28 = scmp.ne.s32.totalorder %s20, %s23
      %p29 = scmp.eq.s32.totalorder %s10, 0
      %p30 = por %p28, %p29
      %p31 = scmp.ne.s32.totalorder %s20, %s23
      %p32 = scmp.eq.s32.totalorder %s15, 1
      %p33 = por %p31, %p32
      %p34 = scmp.ne.s32.totalorder %s23, %s24
      %p35 = scmp.eq.s32.totalorder %s15, 0
      %p36 = por %p34, %p35
      %p37 = scmp.ne.s32.totalorder %s23, %s24
      %p38 = scmp.eq.s32.totalorder %s16, 1
      %p39 = por %p37, %p38
      %p41 = scmp.ne.s32.totalorder %s24, %s40
      %p42 = scmp.eq.s32.totalorder %s16, 0
      %p43 = por %p41, %p42
      %s44 = ssub.s32 %s10, %s17
      %p45 = scmp.eq.s32.totalorder %s44, 0
      %s47 = sadd.s32 %s46, 1
      %s48 = scalar_select %p45, %s46, %s47
      %p51 = pneg %p45
      %p52 = scmp.eq.s32.totalorder %s10, 1
      %p53 = por %p51, %p52
      %p54 = scmp.ne.s32.totalorder %s46, %s49
      %p55 = scmp.eq.s32.totalorder %s10, 0
      %p56 = por %p54, %p55
      %p57 = scmp.ne.s32.totalorder %s46, %s49
      %p58 = scmp.eq.s32.totalorder %s15, 1
      %p59 = por %p57, %p58
      %p60 = scmp.ne.s32.totalorder %s49, %s50
      %p61 = scmp.eq.s32.totalorder %s15, 0
      %p62 = por %p60, %p61
      %p63 = scmp.ne.s32.totalorder %s49, %s50
      %p64 = scmp.eq.s32.totalorder %s16, 1
      %p65 = por %p63, %p64
      %p67 = scmp.ne.s32.totalorder %s50, %s66
      %p68 = scmp.eq.s32.totalorder %s16, 0
      %p69 = por %p67, %p68
      %s71 = sadd.s32 %s70, 1
      %p74 = scmp.eq.s32.totalorder %s10, 1
      %p75 = scmp.ne.s32.totalorder %s70, %s72
      %p76 = scmp.eq.s32.totalorder %s10, 0
      %p77 = por %p75, %p76
      %p78 = scmp.ne.s32.totalorder %s70, %s72
      %p79 = scmp.eq.s32.totalorder %s15, 1
      %p80 = por %p78, %p79
      %p81 = scmp.ne.s32.totalorder %s72, %s73
      %p82 = scmp.eq.s32.totalorder %s15, 0
      %p83 = por %p81, %p82
      %p84 = scmp.ne.s32.totalorder %s72, %s73
      %p85 = scmp.eq.s32.totalorder %s16, 1
      %p86 = por %p84, %p85
      %p88 = scmp.ne.s32.totalorder %s73, %s87
      %p89 = scmp.eq.s32.totalorder %s16, 0
      %p90 = por %p88, %p89
      %s92 = sadd.s32 %s91, 1
      %p95 = scmp.eq.s32.totalorder %s10, 1
      %p96 = scmp.ne.s32.totalorder %s91, %s93
      %p97 = scmp.eq.s32.totalorder %s10, 0
      %p98 = por %p96, %p97
      %p99 = scmp.ne.s32.totalorder %s91, %s93
      %p100 = scmp.eq.s32.totalorder %s15, 1
      %p101 = por %p99, %p100
      %p102 = scmp.ne.s32.totalorder %s93, %s94
      %p103 = scmp.eq.s32.totalorder %s15, 0
      %p104 = por %p102, %p103
      %p105 = scmp.ne.s32.totalorder %s93, %s94
      %p106 = scmp.eq.s32.totalorder %s16, 1
      %p107 = por %p105, %p106
      %p109 = scmp.ne.s32.totalorder %s94, %s108
      %p110 = scmp.eq.s32.totalorder %s16, 0
      %p111 = por %p109, %p110
      %p112 = scmp.le.s32.totalorder 1, %s10
      %p113 = scmp.lt.s32.totalorder %s10, 3
      %p114 = pnand %p112, %p113
      %p115 = pneg %p114
      // Predicated region
      $region9: #{forward.7} parent=5 // pred_check
        _
      $region10: #{forward.7} parent=5 // pred_check_branch
        %117 = sbr.rel (%p114) target = $region12
      $region11: #{forward.7} parent=5 // pred_region
        %s118 = ssub.s32 %s10, 1
        // Predicated region
        $region13: #{forward.7} parent=11 // pred_check
          %p119 = pneg %p83
        $region14: #{forward.7} parent=11 // pred_check_branch
          %121 = sbr.rel (%p119) target = $region16
        $region15: #{forward.7} parent=11 // pred_region
          _
        $region16: #{forward.7} parent=11 // pred_fallthru
          _
      $region12: #{forward.7} parent=5 // pred_fallthru
        _
      %p122 = scmp.lt.s32.totalorder %s10, 2
      // Predicated region
      $region17: #{forward.7} parent=5 // pred_check
        %p123 = pneg %p122
      $region18: #{forward.7} parent=5 // pred_check_branch
        %125 = sbr.rel (%p123) target = $region20
      $region19: #{forward.7} parent=5 // pred_region
        // Predicated region
        $region21: #{forward.7} parent=19 // pred_check
          %p126 = pneg %p30
        $region22: #{forward.7} parent=19 // pred_check_branch
          %128 = sbr.rel (%p126) target = $region24
        $region23: #{forward.7} parent=19 // pred_region
          %p129 = scmp.lt.s32.totalorder %s10, 1
          %s130 = scalar_select %p129, %s10, 1
          %s131 = smul.addr %s130, 2
          %s132 = scalar_lea.vmem %s0, %s131
        $region24: #{forward.7} parent=19 // pred_fallthru
          _
        // Predicated region
        $region25: #{forward.7} parent=19 // pred_check
          %p133 = pneg %p56
        $region26: #{forward.7} parent=19 // pred_check_branch
          %135 = sbr.rel (%p133) target = $region28
        $region27: #{forward.7} parent=19 // pred_region
          %s136 = smul.u32 16, %s10
          %p137 = scmp.lt.s32.totalorder %s136, 31
          %s138 = scalar_select %p137, %s136, 31
          %s139 = smul.addr %s138, 4
          %s140 = scalar_lea.vmem %s1, %s139
          %s141 = smul.u32 16, %s10
        $region28: #{forward.7} parent=19 // pred_fallthru
          _
      $region20: #{forward.7} parent=5 // pred_fallthru
        _
      %p142 = scmp.le.s32.totalorder 1, %s10
      %p143 = scmp.lt.s32.totalorder %s10, 3
      %p144 = pnand %p142, %p143
      %p145 = pneg %p144
      // Predicated region
      $region29: #{forward.7} parent=5 // pred_check
        _
      $region30: #{forward.7} parent=5 // pred_check_branch
        %147 = sbr.rel (%p144) target = $region32
      $region31: #{forward.7} parent=5 // pred_region
        %s148 = ssub.s32 %s10, 1
        %p149 = scmp.lt.s32.totalorder %s15, 1
        %s150 = scalar_select %p149, %s15, 1
        %s151 = smul.addr %s150, 2
        %s152 = scalar_lea.vmem %s0, %s151
        %p153 = pneg %p36
        %p154 = pneg %p33
        %s155 = smul.u32 16, %s15
        %p156 = scmp.lt.s32.totalorder %s155, 31
        %s157 = scalar_select %p156, %s155, 31
        %s158 = smul.addr %s157, 4
        %s159 = scalar_lea.vmem %s1, %s158
        %p160 = pneg %p62
        %p161 = pneg %p59
        %p162 = pneg %p83
        %p163 = pneg %p80
        %p164 = pneg %p104
        %p165 = pneg %p101
        %p166 = scmp.lt.s32.totalorder %s15, 1
        %s167 = scalar_select %p166, %s15, 1
        %s168 = smul.addr %s167, 2
        %s169 = scalar_lea.vmem %s0, %s168
        %s170 = smul.u32 16, %s15
        %p171 = scmp.lt.s32.totalorder %s170, 31
        %s172 = scalar_select %p171, %s170, 31
        %s173 = smul.addr %s172, 4
        %s174 = scalar_lea.vmem %s1, %s173
        %s175 = smul.u32 16, %s15
        %p176 = scmp.eq.s32.totalorder %s15, 0
        // Predicated region
        $region33: #{forward.7} parent=31 // pred_check
          %p177 = pneg %p176
        $region34: #{forward.7} parent=31 // pred_check_branch
          %179 = sbr.rel (%p177) target = $region36
        $region35: #{forward.7} parent=31 // pred_region
          %v180 = vld [vmem:[%s2] sm:$0x1]
          %v182 = vperm.slane %v180, 0
          %184 = vst [vmem:[#allocation2] sm:$0x3] %v182
        $region36: #{forward.7} parent=31 // pred_fallthru
          _
        %v185 = vld [vmem:[#allocation2] sm:$0x3]
        %v186 = vld [vmem:[%s169] sm:$0x3]
        %v187 = vpack.c.bf16 %v186, %v186
        %v188 = vld [vmem:[%s174] sm:$0xf]
        %v189 = vld [vmem:[%s174 + $0x4] sm:$0xf]
        %v190 = vld [vmem:[%s174 + $0x8] sm:$0xf]
        %v191 = vld [vmem:[%s174 + $0xc] sm:$0xf]
        %v192 = vld [vmem:[%s174 + $0x10] sm:$0xf]
        %v193 = vld [vmem:[%s174 + $0x14] sm:$0xf]
        %v194 = vld [vmem:[%s174 + $0x18] sm:$0xf]
        %v195 = vld [vmem:[%s174 + $0x1c] sm:$0xf]
        %v196 = vld [vmem:[%s174 + $0x20] sm:$0xf]
        %v197 = vld [vmem:[%s174 + $0x24] sm:$0xf]
        %v198 = vld [vmem:[%s174 + $0x28] sm:$0xf]
        %v199 = vld [vmem:[%s174 + $0x2c] sm:$0xf]
        %v200 = vld [vmem:[%s174 + $0x30] sm:$0xf]
        %v201 = vld [vmem:[%s174 + $0x34] sm:$0xf]
        %v202 = vld [vmem:[%s174 + $0x38] sm:$0xf]
        %v203 = vld [vmem:[%s174 + $0x3c] sm:$0xf]
        %v220 = vunpack.c.l.b16 %v188
        %v221 = vunpack.c.l.b16 %v189
        %v222 = vunpack.c.l.b16 %v190
        %v223 = vunpack.c.l.b16 %v191
        %v224 = vunpack.c.l.b16 %v192
        %v225 = vunpack.c.l.b16 %v193
        %v226 = vunpack.c.l.b16 %v194
        %v227 = vunpack.c.l.b16 %v195
        %v228 = vunpack.c.l.b16 %v196
        %v229 = vunpack.c.l.b16 %v197
        %v230 = vunpack.c.l.b16 %v198
        %v231 = vunpack.c.l.b16 %v199
        %v232 = vunpack.c.l.b16 %v200
        %v233 = vunpack.c.l.b16 %v201
        %v234 = vunpack.c.l.b16 %v202
        %v235 = vunpack.c.l.b16 %v203
        %v236 = vpack.c.b16 %v221, %v220
        %v237 = vpack.c.b16 %v223, %v222
        %v238 = vpack.c.b16 %v225, %v224
        %v239 = vpack.c.b16 %v227, %v226
        %v240 = vpack.c.b16 %v229, %v228
        %v241 = vpack.c.b16 %v231, %v230
        %v242 = vpack.c.b16 %v233, %v232
        %v243 = vpack.c.b16 %v235, %v234
        %252 = vmatpush.bf16.msra.mxu0 %v243
        %253 = vmatpush.bf16.msra.mxu0 %v242
        %254 = vmatpush.bf16.msra.mxu0 %v241
        %255 = vmatpush.bf16.msra.mxu0 %v240
        %256 = vmatpush.bf16.msra.mxu0 %v239
        %257 = vmatpush.bf16.msra.mxu0 %v238
        %258 = vmatpush.bf16.msra.mxu0 %v237
        %259 = vmatpush.bf16.msra.mxu0 %v236
        %260 = vmatmul.bf16.gmra.mxu0 %v187
        %v261 = vpop.f32.mrf.mxu0
        %v262 = vadd.f32 0.0, %v261
        %v263 = vpop.f32.mrf.mxu0
        %264 = vdwg.mxu0
        %v265 = vadd.f32 %v185, %v262
        %266 = vst [vmem:[#allocation2] sm:$0x3] %v265
        %p267 = scmp.eq.s32.totalorder %s15, 1
        // Predicated region
        $region37: #{forward.7} parent=31 // pred_check
          %p268 = pneg %p267
        $region38: #{forward.7} parent=31 // pred_check_branch
          %270 = sbr.rel (%p268) target = $region40
        $region39: #{forward.7} parent=31 // pred_region
          %v271 = vld [vmem:[#allocation2] sm:$0x3]
          %v272 = vxor.u32 %v271, 2147483648
          %v273 = vmul.f32 %v272, 1.442695
          %v274 = vpow.pop %v273
          %v275 = vadd.f32 %v274, 1.0
          %v276 = vrcp.pop %v275
          %v277 = vmul.f32 %v275, %v276
          %v278 = vsub.f32 1.0, %v277
          %v279 = vmul.f32 %v276, %v278
          %v280 = vadd.f32 %v276, %v279
          %vm281 = vweird.f32 %v275
          %vm282 = vweird.f32 %v276
          %vm283 = vmor %vm281, %vm282
          %v284 = vsel %vm283, %v276, %v280
          %v285 = vand.u32 2147483647, %v275
          %vm286 = vcmp.eq.f32.partialorder %v285, 8.507059e+37
          %v287 = vand.u32 %v275, 2147483648
          %v288 = vor.u32 1.1754944e-38, %v287
          %v289 = vsel %vm286, %v288, %v284
          %v290 = vmul.f32 1.0, %v289
          %291 = vst [vmem:[#allocation3] sm:$0x3] %v290
        $region40: #{forward.7} parent=31 // pred_fallthru
          _
        // Predicated region
        $region41: #{forward.7} parent=31 // pred_check
          %p292 = pneg %p101
        $region42: #{forward.7} parent=31 // pred_check_branch
          %294 = sbr.rel (%p292) target = $region44
        $region43: #{forward.7} parent=31 // pred_region
          %296 = vsyncadd [#allocation4], 0
          %s298 = sshll.u32 [#allocation3], 4
          %s299 = int_to_ptr.vmem [resolvable:$true] %s298
          %s300 = sshll.u32 %s3, 4
          %s301 = int_to_ptr.hbm [resolvable:$true] %s300
          %303 = dma.vmem_to_hbm [thread:$0]  %s299, 32, %s301, [#allocation4]
        $region44: #{forward.7} parent=31 // pred_fallthru
          _
        // Predicated region
        $region45: #{forward.7} parent=31 // pred_check
          %p304 = pneg %p101
        $region46: #{forward.7} parent=31 // pred_check_branch
          %306 = sbr.rel (%p304) target = $region48
        $region47: #{forward.7} parent=31 // pred_region
          %308 = dma.done [#allocation4], 32
        $region48: #{forward.7} parent=31 // pred_fallthru
          _
      $region32: #{forward.7} parent=5 // pred_fallthru
        _
      %p309 = scmp.le.s32.totalorder 2, %s10
      // Predicated region
      $region49: #{forward.7} parent=5 // pred_check
        %p310 = pneg %p309
      $region50: #{forward.7} parent=5 // pred_check_branch
        %312 = sbr.rel (%p310) target = $region52
      $region51: #{forward.7} parent=5 // pred_region
        %s313 = ssub.s32 %s10, 2
      $region52: #{forward.7} parent=5 // pred_fallthru
        _
    $region6: #{forward.7} parent=1 // loop_footer
      %s14 = sadd.s32 1, %s10
    $region7: #{forward.7} parent=1 // loop_footer_branch
      %9 = sbr.rel target = $region3
    $region8: #{forward.7} parent=1 // loop_exit
      _
    %314 = vsyncpa [#allocation4], 1
    %s315 = scalar_lea.sflag [#allocation4], 1
    %316 = vsyncpa %s315, 1

// kernel: forward.5
$region0: #{forward.5}
  #allocation0 [shape = 'u32[]', space=smem, size = 0x4, offset = 0x4, fixed_abs, tag = 'smem constant byte address 0x4 - core index']
  #allocation1 [shape = 'u32[72,128]{1,0:T(1,128)}', space=vmem, size = 0x9000, scoped, tag = 'internal scratch']
  %s0 = inlined_call_operand.vmem [shape: f32[2,8,32], index: 0, kind: input, shape index: {}]
  %s1 = inlined_call_operand.vmem [shape: f32[2,1,8], index: 1, kind: input, shape index: {}]
  %s2 = inlined_call_operand.vmem [shape: f32[2,8,1], index: 2, kind: input, shape index: {}]
  %s3 = inlined_call_operand.vmem [shape: bf16[8,32,4], index: 3, kind: input, shape index: {}]
  %s4 = inlined_call_operand.vmem [shape: bf16[8,32,4], index: 4, kind: input, shape index: {}]
  %s5 = inlined_call_operand.vmem [shape: bf16[8,32,4], index: 5, kind: input, shape index: {}]
  %s6 = inlined_call_operand.vmem [shape: f32[8,1,4], index: 6, kind: input, shape index: {}]
  %s7 = inlined_call_operand.vmem [shape: f32[8,1,4], index: 7, kind: input, shape index: {}]
  %s8 = inlined_call_operand.vmem [shape: f32[8,1,4], index: 8, kind: input, shape index: {}]
  %s9 = inlined_call_operand.vmem [shape: bf16[8,4,32], index: 9, kind: input, shape index: {}]
  %s10 = inlined_call_operand.vmem [shape: f32[1,32], index: 10, kind: input, shape index: {}]
  %s11 = inlined_call_operand.vmem [shape: f32[1,32], index: 11, kind: input, shape index: {}]
  %s12 = inlined_call_operand.vmem [shape: f32[1,32], index: 12, kind: input, shape index: {}]
  %s13 = inlined_call_operand.vmem [shape: bf16[32,64], index: 13, kind: input, shape index: {}]
  %s14 = inlined_call_operand.vmem [shape: f32[1,64], index: 14, kind: input, shape index: {}]
  %s15 = inlined_call_operand.vmem [shape: bf16[64,32], index: 15, kind: input, shape index: {}]
  %s16 = inlined_call_operand.vmem [shape: f32[1,32], index: 16, kind: input, shape index: {}]
  %s17 = inlined_call_operand.vmem [shape: f32[1,32], index: 17, kind: input, shape index: {}]
  %s18 = inlined_call_operand.vmem [shape: f32[1,32], index: 18, kind: input, shape index: {}]
  %s19 = inlined_call_operand.vmem [shape: f32[2,8,32], index: 19, kind: output, shape index: {}]
  %s20 = sld [smem:[#allocation0]]
  $region109: #{forward.5} parent=0
    _
  %s22 = ssub.s32 1, %s20
  %s23 = scalar_select 0, %s22, %s20
  loop: start=0, step=1, limit=4
  $region2: #{forward.5} parent=0 // loop_pre_header
    _
  $region3: #{forward.5} parent=0 // loop_header
    %s25 = sphi 0, %s29
    %p26 = scmp.ge.s32.totalorder %s25, 4
    %s35 = sphi 0, %s37
    %s38 = sphi 0, %s35
    %s39 = sphi 0, %s38
    %s55 = sphi 0, %s39
    %s61 = sphi 0, %s63
    %s64 = sphi 0, %s61
    %s65 = sphi 0, %s64
    %s81 = sphi 0, %s65
    %s87 = sphi 0, %s89
    %s90 = sphi 0, %s87
    %s91 = sphi 0, %s90
    %s107 = sphi 0, %s91
    %s111 = sphi 0, %s111
    %s113 = sphi 0, %s111
    %s114 = sphi 0, %s113
    %s128 = sphi 0, %s114
    %s132 = sphi 0, %s132
    %s134 = sphi 0, %s132
    %s135 = sphi 0, %s134
    %s149 = sphi 0, %s135
    %s153 = sphi 0, %s153
    %s155 = sphi 0, %s153
    %s156 = sphi 0, %s155
    %s170 = sphi 0, %s156
    %s174 = sphi 0, %s174
    %s176 = sphi 0, %s174
    %s177 = sphi 0, %s176
    %s191 = sphi 0, %s177
    %s195 = sphi 0, %s195
    %s197 = sphi 0, %s195
    %s198 = sphi 0, %s197
    %s212 = sphi 0, %s198
    %s216 = sphi 0, %s216
    %s218 = sphi 0, %s216
    %s219 = sphi 0, %s218
    %s233 = sphi 0, %s219
    %s237 = sphi 0, %s237
    %s239 = sphi 0, %s237
    %s240 = sphi 0, %s239
    %s254 = sphi 0, %s240
    %s258 = sphi 0, %s258
    %s260 = sphi 0, %s258
    %s261 = sphi 0, %s260
    %s275 = sphi 0, %s261
    %s279 = sphi 0, %s279
    %s281 = sphi 0, %s279
    %s282 = sphi 0, %s281
    %s296 = sphi 0, %s282
    %s300 = sphi 0, %s300
    %s302 = sphi 0, %s300
    %s303 = sphi 0, %s302
    %s317 = sphi 0, %s303
    %s321 = sphi 0, %s321
    %s323 = sphi 0, %s321
    %s324 = sphi 0, %s323
    %s338 = sphi 0, %s324
    %s342 = sphi 0, %s342
    %s344 = sphi 0, %s342
    %s345 = sphi 0, %s344
    %s359 = sphi 0, %s345
    %s363 = sphi 0, %s363
    %s365 = sphi 0, %s363
    %s366 = sphi 0, %s365
    %s380 = sphi 0, %s366
    %s384 = sphi 0, %s384
    %s386 = sphi 0, %s384
    %s387 = sphi 0, %s386
    %s401 = sphi 0, %s387
    %s405 = sphi 0, %s405
    %s407 = sphi 0, %s405
    %s408 = sphi 0, %s407
    %s422 = sphi 0, %s408
    %s426 = sphi 0, %s426
    %s428 = sphi 0, %s426
    %s429 = sphi 0, %s428
    %s443 = sphi 0, %s429
    %s449 = sphi 0, %s451
    %s452 = sphi 0, %s449
    %s453 = sphi 0, %s452
    %s469 = sphi 0, %s453
  $region4: #{forward.5} parent=0 // loop_header_branch
    %28 = sbr.rel (%p26) target = $region8
  $region5: #{forward.5} parent=0 // loop_body
    %s30 = ssub.s32 %s25, 1
    %s31 = ssub.s32 %s25, 2
    %s32 = sadd.s32 %s25, 1
    %s33 = ssub.s32 %s25, %s32
    %p34 = scmp.eq.s32.totalorder %s33, 0
    %s36 = sadd.s32 %s35, 1
    %s37 = scalar_select %p34, %s35, %s36
    %p40 = pneg %p34
    %p41 = scmp.eq.s32.totalorder %s25, 1
    %p42 = por %p40, %p41
    %p43 = scmp.ne.s32.totalorder %s35, %s38
    %p44 = scmp.eq.s32.totalorder %s25, 0
    %p45 = por %p43, %p44
    %p46 = scmp.ne.s32.totalorder %s35, %s38
    %p47 = scmp.eq.s32.totalorder %s30, 1
    %p48 = por %p46, %p47
    %p49 = scmp.ne.s32.totalorder %s38, %s39
    %p50 = scmp.eq.s32.totalorder %s30, 0
    %p51 = por %p49, %p50
    %p52 = scmp.ne.s32.totalorder %s38, %s39
    %p53 = scmp.eq.s32.totalorder %s31, 1
    %p54 = por %p52, %p53
    %p56 = scmp.ne.s32.totalorder %s39, %s55
    %p57 = scmp.eq.s32.totalorder %s31, 0
    %p58 = por %p56, %p57
    %s59 = ssub.s32 %s25, %s32
    %p60 = scmp.eq.s32.totalorder %s59, 0
    %s62 = sadd.s32 %s61, 1
    %s63 = scalar_select %p60, %s61, %s62
    %p66 = pneg %p60
    %p67 = scmp.eq.s32.totalorder %s25, 1
    %p68 = por %p66, %p67
    %p69 = scmp.ne.s32.totalorder %s61, %s64
    %p70 = scmp.eq.s32.totalorder %s25, 0
    %p71 = por %p69, %p70
    %p72 = scmp.ne.s32.totalorder %s61, %s64
    %p73 = scmp.eq.s32.totalorder %s30, 1
    %p74 = por %p72, %p73
    %p75 = scmp.ne.s32.totalorder %s64, %s65
    %p76 = scmp.eq.s32.totalorder %s30, 0
    %p77 = por %p75, %p76
    %p78 = scmp.ne.s32.totalorder %s64, %s65
    %p79 = scmp.eq.s32.totalorder %s31, 1
    %p80 = por %p78, %p79
    %p82 = scmp.ne.s32.totalorder %s65, %s81
    %p83 = scmp.eq.s32.totalorder %s31, 0
    %p84 = por %p82, %p83
    %s85 = ssub.s32 %s25, %s32
    %p86 = scmp.eq.s32.totalorder %s85, 0
    %s88 = sadd.s32 %s87, 1
    %s89 = scalar_select %p86, %s87, %s88
    %p92 = pneg %p86
    %p93 = scmp.eq.s32.totalorder %s25, 1
    %p94 = por %p92, %p93
    %p95 = scmp.ne.s32.totalorder %s87, %s90
    %p96 = scmp.eq.s32.totalorder %s25, 0
    %p97 = por %p95, %p96
    %p98 = scmp.ne.s32.totalorder %s87, %s90
    %p99 = scmp.eq.s32.totalorder %s30, 1
    %p100 = por %p98, %p99
    %p101 = scmp.ne.s32.totalorder %s90, %s91
    %p102 = scmp.eq.s32.totalorder %s30, 0
    %p103 = por %p101, %p102
    %p104 = scmp.ne.s32.totalorder %s90, %s91
    %p105 = scmp.eq.s32.totalorder %s31, 1
    %p106 = por %p104, %p105
    %p108 = scmp.ne.s32.totalorder %s91, %s107
    %p109 = scmp.eq.s32.totalorder %s31, 0
    %p110 = por %p108, %p109
    %s112 = sadd.s32 %s111, 1
    %p115 = scmp.eq.s32.totalorder %s25, 1
    %p116 = scmp.ne.s32.totalorder %s111, %s113
    %p117 = scmp.eq.s32.totalorder %s25, 0
    %p118 = por %p116, %p117
    %p119 = scmp.ne.s32.totalorder %s111, %s113
    %p120 = scmp.eq.s32.totalorder %s30, 1
    %p121 = por %p119, %p120
    %p122 = scmp.ne.s32.totalorder %s113, %s114
    %p123 = scmp.eq.s32.totalorder %s30, 0
    %p124 = por %p122, %p123
    %p125 = scmp.ne.s32.totalorder %s113, %s114
    %p126 = scmp.eq.s32.totalorder %s31, 1
    %p127 = por %p125, %p126
    %p129 = scmp.ne.s32.totalorder %s114, %s128
    %p130 = scmp.eq.s32.totalorder %s31, 0
    %p131 = por %p129, %p130
    %s133 = sadd.s32 %s132, 1
    %p136 = scmp.eq.s32.totalorder %s25, 1
    %p137 = scmp.ne.s32.totalorder %s132, %s134
    %p138 = scmp.eq.s32.totalorder %s25, 0
    %p139 = por %p137, %p138
    %p140 = scmp.ne.s32.totalorder %s132, %s134
    %p141 = scmp.eq.s32.totalorder %s30, 1
    %p142 = por %p140, %p141
    %p143 = scmp.ne.s32.totalorder %s134, %s135
    %p144 = scmp.eq.s32.totalorder %s30, 0
    %p145 = por %p143, %p144
    %p146 = scmp.ne.s32.totalorder %s134, %s135
    %p147 = scmp.eq.s32.totalorder %s31, 1
    %p148 = por %p146, %p147
    %p150 = scmp.ne.s32.totalorder %s135, %s149
    %p151 = scmp.eq.s32.totalorder %s31, 0
    %p152 = por %p150, %p151
    %s154 = sadd.s32 %s153, 1
    %p157 = scmp.eq.s32.totalorder %s25, 1
    %p158 = scmp.ne.s32.totalorder %s153, %s155
    %p159 = scmp.eq.s32.totalorder %s25, 0
    %p160 = por %p158, %p159
    %p161 = scmp.ne.s32.totalorder %s153, %s155
    %p162 = scmp.eq.s32.totalorder %s30, 1
    %p163 = por %p161, %p162
    %p164 = scmp.ne.s32.totalorder %s155, %s156
    %p165 = scmp.eq.s32.totalorder %s30, 0
    %p166 = por %p164, %p165
    %p167 = scmp.ne.s32.totalorder %s155, %s156
    %p168 = scmp.eq.s32.totalorder %s31, 1
    %p169 = por %p167, %p168
    %p171 = scmp.ne.s32.totalorder %s156, %s170
    %p172 = scmp.eq.s32.totalorder %s31, 0
    %p173 = por %p171, %p172
    %s175 = sadd.s32 %s174, 1
    %p178 = scmp.eq.s32.totalorder %s25, 1
    %p179 = scmp.ne.s32.totalorder %s174, %s176
    %p180 = scmp.eq.s32.totalorder %s25, 0
    %p181 = por %p179, %p180
    %p182 = scmp.ne.s32.totalorder %s174, %s176
    %p183 = scmp.eq.s32.totalorder %s30, 1
    %p184 = por %p182, %p183
    %p185 = scmp.ne.s32.totalorder %s176, %s177
    %p186 = scmp.eq.s32.totalorder %s30, 0
    %p187 = por %p185, %p186
    %p188 = scmp.ne.s32.totalorder %s176, %s177
    %p189 = scmp.eq.s32.totalorder %s31, 1
    %p190 = por %p188, %p189
    %p192 = scmp.ne.s32.totalorder %s177, %s191
    %p193 = scmp.eq.s32.totalorder %s31, 0
    %p194 = por %p192, %p193
    %s196 = sadd.s32 %s195, 1
    %p199 = scmp.eq.s32.totalorder %s25, 1
    %p200 = scmp.ne.s32.totalorder %s195, %s197
    %p201 = scmp.eq.s32.totalorder %s25, 0
    %p202 = por %p200, %p201
    %p203 = scmp.ne.s32.totalorder %s195, %s197
    %p204 = scmp.eq.s32.totalorder %s30, 1
    %p205 = por %p203, %p204
    %p206 = scmp.ne.s32.totalorder %s197, %s198
    %p207 = scmp.eq.s32.totalorder %s30, 0
    %p208 = por %p206, %p207
    %p209 = scmp.ne.s32.totalorder %s197, %s198
    %p210 = scmp.eq.s32.totalorder %s31, 1
    %p211 = por %p209, %p210
    %p213 = scmp.ne.s32.totalorder %s198, %s212
    %p214 = scmp.eq.s32.totalorder %s31, 0
    %p215 = por %p213, %p214
    %s217 = sadd.s32 %s216, 1
    %p220 = scmp.eq.s32.totalorder %s25, 1
    %p221 = scmp.ne.s32.totalorder %s216, %s218
    %p222 = scmp.eq.s32.totalorder %s25, 0
    %p223 = por %p221, %p222
    %p224 = scmp.ne.s32.totalorder %s216, %s218
    %p225 = scmp.eq.s32.totalorder %s30, 1
    %p226 = por %p224, %p225
    %p227 = scmp.ne.s32.totalorder %s218, %s219
    %p228 = scmp.eq.s32.totalorder %s30, 0
    %p229 = por %p227, %p228
    %p230 = scmp.ne.s32.totalorder %s218, %s219
    %p231 = scmp.eq.s32.totalorder %s31, 1
    %p232 = por %p230, %p231
    %p234 = scmp.ne.s32.totalorder %s219, %s233
    %p235 = scmp.eq.s32.totalorder %s31, 0
    %p236 = por %p234, %p235
    %s238 = sadd.s32 %s237, 1
    %p241 = scmp.eq.s32.totalorder %s25, 1
    %p242 = scmp.ne.s32.totalorder %s237, %s239
    %p243 = scmp.eq.s32.totalorder %s25, 0
    %p244 = por %p242, %p243
    %p245 = scmp.ne.s32.totalorder %s237, %s239
    %p246 = scmp.eq.s32.totalorder %s30, 1
    %p247 = por %p245, %p246
    %p248 = scmp.ne.s32.totalorder %s239, %s240
    %p249 = scmp.eq.s32.totalorder %s30, 0
    %p250 = por %p248, %p249
    %p251 = scmp.ne.s32.totalorder %s239, %s240
    %p252 = scmp.eq.s32.totalorder %s31, 1
    %p253 = por %p251, %p252
    %p255 = scmp.ne.s32.totalorder %s240, %s254
    %p256 = scmp.eq.s32.totalorder %s31, 0
    %p257 = por %p255, %p256
    %s259 = sadd.s32 %s258, 1
    %p262 = scmp.eq.s32.totalorder %s25, 1
    %p263 = scmp.ne.s32.totalorder %s258, %s260
    %p264 = scmp.eq.s32.totalorder %s25, 0
    %p265 = por %p263, %p264
    %p266 = scmp.ne.s32.totalorder %s258, %s260
    %p267 = scmp.eq.s32.totalorder %s30, 1
    %p268 = por %p266, %p267
    %p269 = scmp.ne.s32.totalorder %s260, %s261
    %p270 = scmp.eq.s32.totalorder %s30, 0
    %p271 = por %p269, %p270
    %p272 = scmp.ne.s32.totalorder %s260, %s261
    %p273 = scmp.eq.s32.totalorder %s31, 1
    %p274 = por %p272, %p273
    %p276 = scmp.ne.s32.totalorder %s261, %s275
    %p277 = scmp.eq.s32.totalorder %s31, 0
    %p278 = por %p276, %p277
    %s280 = sadd.s32 %s279, 1
    %p283 = scmp.eq.s32.totalorder %s25, 1
    %p284 = scmp.ne.s32.totalorder %s279, %s281
    %p285 = scmp.eq.s32.totalorder %s25, 0
    %p286 = por %p284, %p285
    %p287 = scmp.ne.s32.totalorder %s279, %s281
    %p288 = scmp.eq.s32.totalorder %s30, 1
    %p289 = por %p287, %p288
    %p290 = scmp.ne.s32.totalorder %s281, %s282
    %p291 = scmp.eq.s32.totalorder %s30, 0
    %p292 = por %p290, %p291
    %p293 = scmp.ne.s32.totalorder %s281, %s282
    %p294 = scmp.eq.s32.totalorder %s31, 1
    %p295 = por %p293, %p294
    %p297 = scmp.ne.s32.totalorder %s282, %s296
    %p298 = scmp.eq.s32.totalorder %s31, 0
    %p299 = por %p297, %p298
    %s301 = sadd.s32 %s300, 1
    %p304 = scmp.eq.s32.totalorder %s25, 1
    %p305 = scmp.ne.s32.totalorder %s300, %s302
    %p306 = scmp.eq.s32.totalorder %s25, 0
    %p307 = por %p305, %p306
    %p308 = scmp.ne.s32.totalorder %s300, %s302
    %p309 = scmp.eq.s32.totalorder %s30, 1
    %p310 = por %p308, %p309
    %p311 = scmp.ne.s32.totalorder %s302, %s303
    %p312 = scmp.eq.s32.totalorder %s30, 0
    %p313 = por %p311, %p312
    %p314 = scmp.ne.s32.totalorder %s302, %s303
    %p315 = scmp.eq.s32.totalorder %s31, 1
    %p316 = por %p314, %p315
    %p318 = scmp.ne.s32.totalorder %s303, %s317
    %p319 = scmp.eq.s32.totalorder %s31, 0
    %p320 = por %p318, %p319
    %s322 = sadd.s32 %s321, 1
    %p325 = scmp.eq.s32.totalorder %s25, 1
    %p326 = scmp.ne.s32.totalorder %s321, %s323
    %p327 = scmp.eq.s32.totalorder %s25, 0
    %p328 = por %p326, %p327
    %p329 = scmp.ne.s32.totalorder %s321, %s323
    %p330 = scmp.eq.s32.totalorder %s30, 1
    %p331 = por %p329, %p330
    %p332 = scmp.ne.s32.totalorder %s323, %s324
    %p333 = scmp.eq.s32.totalorder %s30, 0
    %p334 = por %p332, %p333
    %p335 = scmp.ne.s32.totalorder %s323, %s324
    %p336 = scmp.eq.s32.totalorder %s31, 1
    %p337 = por %p335, %p336
    %p339 = scmp.ne.s32.totalorder %s324, %s338
    %p340 = scmp.eq.s32.totalorder %s31, 0
    %p341 = por %p339, %p340
    %s343 = sadd.s32 %s342, 1
    %p346 = scmp.eq.s32.totalorder %s25, 1
    %p347 = scmp.ne.s32.totalorder %s342, %s344
    %p348 = scmp.eq.s32.totalorder %s25, 0
    %p349 = por %p347, %p348
    %p350 = scmp.ne.s32.totalorder %s342, %s344
    %p351 = scmp.eq.s32.totalorder %s30, 1
    %p352 = por %p350, %p351
    %p353 = scmp.ne.s32.totalorder %s344, %s345
    %p354 = scmp.eq.s32.totalorder %s30, 0
    %p355 = por %p353, %p354
    %p356 = scmp.ne.s32.totalorder %s344, %s345
    %p357 = scmp.eq.s32.totalorder %s31, 1
    %p358 = por %p356, %p357
    %p360 = scmp.ne.s32.totalorder %s345, %s359
    %p361 = scmp.eq.s32.totalorder %s31, 0
    %p362 = por %p360, %p361
    %s364 = sadd.s32 %s363, 1
    %p367 = scmp.eq.s32.totalorder %s25, 1
    %p368 = scmp.ne.s32.totalorder %s363, %s365
    %p369 = scmp.eq.s32.totalorder %s25, 0
    %p370 = por %p368, %p369
    %p371 = scmp.ne.s32.totalorder %s363, %s365
    %p372 = scmp.eq.s32.totalorder %s30, 1
    %p373 = por %p371, %p372
    %p374 = scmp.ne.s32.totalorder %s365, %s366
    %p375 = scmp.eq.s32.totalorder %s30, 0
    %p376 = por %p374, %p375
    %p377 = scmp.ne.s32.totalorder %s365, %s366
    %p378 = scmp.eq.s32.totalorder %s31, 1
    %p379 = por %p377, %p378
    %p381 = scmp.ne.s32.totalorder %s366, %s380
    %p382 = scmp.eq.s32.totalorder %s31, 0
    %p383 = por %p381, %p382
    %s385 = sadd.s32 %s384, 1
    %p388 = scmp.eq.s32.totalorder %s25, 1
    %p389 = scmp.ne.s32.totalorder %s384, %s386
    %p390 = scmp.eq.s32.totalorder %s25, 0
    %p391 = por %p389, %p390
    %p392 = scmp.ne.s32.totalorder %s384, %s386
    %p393 = scmp.eq.s32.totalorder %s30, 1
    %p394 = por %p392, %p393
    %p395 = scmp.ne.s32.totalorder %s386, %s387
    %p396 = scmp.eq.s32.totalorder %s30, 0
    %p397 = por %p395, %p396
    %p398 = scmp.ne.s32.totalorder %s386, %s387
    %p399 = scmp.eq.s32.totalorder %s31, 1
    %p400 = por %p398, %p399
    %p402 = scmp.ne.s32.totalorder %s387, %s401
    %p403 = scmp.eq.s32.totalorder %s31, 0
    %p404 = por %p402, %p403
    %s406 = sadd.s32 %s405, 1
    %p409 = scmp.eq.s32.totalorder %s25, 1
    %p410 = scmp.ne.s32.totalorder %s405, %s407
    %p411 = scmp.eq.s32.totalorder %s25, 0
    %p412 = por %p410, %p411
    %p413 = scmp.ne.s32.totalorder %s405, %s407
    %p414 = scmp.eq.s32.totalorder %s30, 1
    %p415 = por %p413, %p414
    %p416 = scmp.ne.s32.totalorder %s407, %s408
    %p417 = scmp.eq.s32.totalorder %s30, 0
    %p418 = por %p416, %p417
    %p419 = scmp.ne.s32.totalorder %s407, %s408
    %p420 = scmp.eq.s32.totalorder %s31, 1
    %p421 = por %p419, %p420
    %p423 = scmp.ne.s32.totalorder %s408, %s422
    %p424 = scmp.eq.s32.totalorder %s31, 0
    %p425 = por %p423, %p424
    %s427 = sadd.s32 %s426, 1
    %p430 = scmp.eq.s32.totalorder %s25, 1
    %p431 = scmp.ne.s32.totalorder %s426, %s428
    %p432 = scmp.eq.s32.totalorder %s25, 0
    %p433 = por %p431, %p432
    %p434 = scmp.ne.s32.totalorder %s426, %s428
    %p435 = scmp.eq.s32.totalorder %s30, 1
    %p436 = por %p434, %p435
    %p437 = scmp.ne.s32.totalorder %s428, %s429
    %p438 = scmp.eq.s32.totalorder %s30, 0
    %p439 = por %p437, %p438
    %p440 = scmp.ne.s32.totalorder %s428, %s429
    %p441 = scmp.eq.s32.totalorder %s31, 1
    %p442 = por %p440, %p441
    %p444 = scmp.ne.s32.totalorder %s429, %s443
    %p445 = scmp.eq.s32.totalorder %s31, 0
    %p446 = por %p444, %p445
    %s447 = ssub.s32 %s25, %s32
    %p448 = scmp.eq.s32.totalorder %s447, 0
    %s450 = sadd.s32 %s449, 1
    %s451 = scalar_select %p448, %s449, %s450
    %p454 = pneg %p448
    %p455 = scmp.eq.s32.totalorder %s25, 1
    %p456 = por %p454, %p455
    %p457 = scmp.ne.s32.totalorder %s449, %s452
    %p458 = scmp.eq.s32.totalorder %s25, 0
    %p459 = por %p457, %p458
    %p460 = scmp.ne.s32.totalorder %s449, %s452
    %p461 = scmp.eq.s32.totalorder %s30, 1
    %p462 = por %p460, %p461
    %p463 = scmp.ne.s32.totalorder %s452, %s453
    %p464 = scmp.eq.s32.totalorder %s30, 0
    %p465 = por %p463, %p464
    %p466 = scmp.ne.s32.totalorder %s452, %s453
    %p467 = scmp.eq.s32.totalorder %s31, 1
    %p468 = por %p466, %p467
    %p470 = scmp.ne.s32.totalorder %s453, %s469
    %p471 = scmp.eq.s32.totalorder %s31, 0
    %p472 = por %p470, %p471
    %p473 = scmp.le.s32.totalorder 1, %s25
    %p474 = scmp.lt.s32.totalorder %s25, 3
    %p475 = pnand %p473, %p474
    %p476 = pneg %p475
    // Predicated region
    $region9: #{forward.5} parent=5 // pred_check
      _
    $region10: #{forward.5} parent=5 // pred_check_branch
      %478 = sbr.rel (%p475) target = $region12
    $region11: #{forward.5} parent=5 // pred_region
      %s479 = ssub.s32 %s25, 1
      // Predicated region
      $region13: #{forward.5} parent=11 // pred_check
        %p480 = pneg %p124
      $region14: #{forward.5} parent=11 // pred_check_branch
        %482 = sbr.rel (%p480) target = $region16
      $region15: #{forward.5} parent=11 // pred_region
        _
      $region16: #{forward.5} parent=11 // pred_fallthru
        _
      // Predicated region
      $region17: #{forward.5} parent=11 // pred_check
        %p483 = pneg %p145
      $region18: #{forward.5} parent=11 // pred_check_branch
        %485 = sbr.rel (%p483) target = $region20
      $region19: #{forward.5} parent=11 // pred_region
        _
      $region20: #{forward.5} parent=11 // pred_fallthru
        _
      // Predicated region
      $region21: #{forward.5} parent=11 // pred_check
        %p486 = pneg %p166
      $region22: #{forward.5} parent=11 // pred_check_branch
        %488 = sbr.rel (%p486) target = $region24
      $region23: #{forward.5} parent=11 // pred_region
        _
      $region24: #{forward.5} parent=11 // pred_fallthru
        _
      // Predicated region
      $region25: #{forward.5} parent=11 // pred_check
        %p489 = pneg %p187
      $region26: #{forward.5} parent=11 // pred_check_branch
        %491 = sbr.rel (%p489) target = $region28
      $region27: #{forward.5} parent=11 // pred_region
        _
      $region28: #{forward.5} parent=11 // pred_fallthru
        _
      // Predicated region
      $region29: #{forward.5} parent=11 // pred_check
        %p492 = pneg %p208
      $region30: #{forward.5} parent=11 // pred_check_branch
        %494 = sbr.rel (%p492) target = $region32
      $region31: #{forward.5} parent=11 // pred_region
        _
      $region32: #{forward.5} parent=11 // pred_fallthru
        _
      // Predicated region
      $region33: #{forward.5} parent=11 // pred_check
        %p495 = pneg %p229
      $region34: #{forward.5} parent=11 // pred_check_branch
        %497 = sbr.rel (%p495) target = $region36
      $region35: #{forward.5} parent=11 // pred_region
        _
      $region36: #{forward.5} parent=11 // pred_fallthru
        _
      // Predicated region
      $region37: #{forward.5} parent=11 // pred_check
        %p498 = pneg %p250
      $region38: #{forward.5} parent=11 // pred_check_branch
        %500 = sbr.rel (%p498) target = $region40
      $region39: #{forward.5} parent=11 // pred_region
        _
      $region40: #{forward.5} parent=11 // pred_fallthru
        _
      // Predicated region
      $region41: #{forward.5} parent=11 // pred_check
        %p501 = pneg %p271
      $region42: #{forward.5} parent=11 // pred_check_branch
        %503 = sbr.rel (%p501) target = $region44
      $region43: #{forward.5} parent=11 // pred_region
        _
      $region44: #{forward.5} parent=11 // pred_fallthru
        _
      // Predicated region
      $region45: #{forward.5} parent=11 // pred_check
        %p504 = pneg %p292
      $region46: #{forward.5} parent=11 // pred_check_branch
        %506 = sbr.rel (%p504) target = $region48
      $region47: #{forward.5} parent=11 // pred_region
        _
      $region48: #{forward.5} parent=11 // pred_fallthru
        _
      // Predicated region
      $region49: #{forward.5} parent=11 // pred_check
        %p507 = pneg %p313
      $region50: #{forward.5} parent=11 // pred_check_branch
        %509 = sbr.rel (%p507) target = $region52
      $region51: #{forward.5} parent=11 // pred_region
        _
      $region52: #{forward.5} parent=11 // pred_fallthru
        _
      // Predicated region
      $region53: #{forward.5} parent=11 // pred_check
        %p510 = pneg %p334
      $region54: #{forward.5} parent=11 // pred_check_branch
        %512 = sbr.rel (%p510) target = $region56
      $region55: #{forward.5} parent=11 // pred_region
        _
      $region56: #{forward.5} parent=11 // pred_fallthru
        _
      // Predicated region
      $region57: #{forward.5} parent=11 // pred_check
        %p513 = pneg %p355
      $region58: #{forward.5} parent=11 // pred_check_branch
        %515 = sbr.rel (%p513) target = $region60
      $region59: #{forward.5} parent=11 // pred_region
        _
      $region60: #{forward.5} parent=11 // pred_fallthru
        _
      // Predicated region
      $region61: #{forward.5} parent=11 // pred_check
        %p516 = pneg %p376
      $region62: #{forward.5} parent=11 // pred_check_branch
        %518 = sbr.rel (%p516) target = $region64
      $region63: #{forward.5} parent=11 // pred_region
        _
      $region64: #{forward.5} parent=11 // pred_fallthru
        _
      // Predicated region
      $region65: #{forward.5} parent=11 // pred_check
        %p519 = pneg %p397
      $region66: #{forward.5} parent=11 // pred_check_branch
        %521 = sbr.rel (%p519) target = $region68
      $region67: #{forward.5} parent=11 // pred_region
        _
      $region68: #{forward.5} parent=11 // pred_fallthru
        _
      // Predicated region
      $region69: #{forward.5} parent=11 // pred_check
        %p522 = pneg %p418
      $region70: #{forward.5} parent=11 // pred_check_branch
        %524 = sbr.rel (%p522) target = $region72
      $region71: #{forward.5} parent=11 // pred_region
        _
      $region72: #{forward.5} parent=11 // pred_fallthru
        _
      // Predicated region
      $region73: #{forward.5} parent=11 // pred_check
        %p525 = pneg %p439
      $region74: #{forward.5} parent=11 // pred_check_branch
        %527 = sbr.rel (%p525) target = $region76
      $region75: #{forward.5} parent=11 // pred_region
        _
      $region76: #{forward.5} parent=11 // pred_fallthru
        _
    $region12: #{forward.5} parent=5 // pred_fallthru
      _
    %p528 = scmp.lt.s32.totalorder %s25, 2
    // Predicated region
    $region77: #{forward.5} parent=5 // pred_check
      %p529 = pneg %p528
    $region78: #{forward.5} parent=5 // pred_check_branch
      %531 = sbr.rel (%p529) target = $region80
    $region79: #{forward.5} parent=5 // pred_region
      // Predicated region
      $region81: #{forward.5} parent=79 // pred_check
        %p532 = pneg %p45
      $region82: #{forward.5} parent=79 // pred_check_branch
        %534 = sbr.rel (%p532) target = $region84
      $region83: #{forward.5} parent=79 // pred_region
        %p535 = scmp.lt.s32.totalorder %s25, 1
        %s536 = scalar_select %p535, %s25, 1
        %s537 = smul.addr %s536, 8
        %s538 = scalar_lea.vmem %s0, %s537
      $region84: #{forward.5} parent=79 // pred_fallthru
        _
      // Predicated region
      $region85: #{forward.5} parent=79 // pred_check
        %p539 = pneg %p71
      $region86: #{forward.5} parent=79 // pred_check_branch
        %541 = sbr.rel (%p539) target = $region88
      $region87: #{forward.5} parent=79 // pred_region
        %p542 = scmp.lt.s32.totalorder %s25, 1
        %s543 = scalar_select %p542, %s25, 1
        %s544 = scalar_lea.vmem %s1, %s543
      $region88: #{forward.5} parent=79 // pred_fallthru
        _
      // Predicated region
      $region89: #{forward.5} parent=79 // pred_check
        %p545 = pneg %p97
      $region90: #{forward.5} parent=79 // pred_check_branch
        %547 = sbr.rel (%p545) target = $region92
      $region91: #{forward.5} parent=79 // pred_region
        %p548 = scmp.lt.s32.totalorder %s25, 1
        %s549 = scalar_select %p548, %s25, 1
        %s550 = smul.addr %s549, 8
        %s551 = scalar_lea.vmem %s2, %s550
      $region92: #{forward.5} parent=79 // pred_fallthru
        _
    $region80: #{forward.5} parent=5 // pred_fallthru
      _
    %p552 = scmp.le.s32.totalorder 1, %s25
    %p553 = scmp.lt.s32.totalorder %s25, 3
    %p554 = pnand %p552, %p553
    %p555 = pneg %p554
    // Predicated region
    $region93: #{forward.5} parent=5 // pred_check
      _
    $region94: #{forward.5} parent=5 // pred_check_branch
      %557 = sbr.rel (%p554) target = $region96
    $region95: #{forward.5} parent=5 // pred_region
      %s558 = ssub.s32 %s25, 1
      %p559 = scmp.lt.s32.totalorder %s30, 1
      %s560 = scalar_select %p559, %s30, 1
      %s561 = smul.addr %s560, 8
      %s562 = scalar_lea.vmem %s0, %s561
      %p563 = pneg %p51
      %p564 = pneg %p48
      %p565 = scmp.lt.s32.totalorder %s30, 1
      %s566 = scalar_select %p565, %s30, 1
      %s567 = scalar_lea.vmem %s1, %s566
      %p568 = pneg %p77
      %p569 = pneg %p74
      %p570 = scmp.lt.s32.totalorder %s30, 1
      %s571 = scalar_select %p570, %s30, 1
      %s572 = smul.addr %s571, 8
      %s573 = scalar_lea.vmem %s2, %s572
      %p574 = pneg %p103
      %p575 = pneg %p100
      %p576 = pneg %p124
      %p577 = pneg %p121
      %p578 = pneg %p145
      %p579 = pneg %p142
      %p580 = pneg %p166
      %p581 = pneg %p163
      %p582 = pneg %p187
      %p583 = pneg %p184
      %p584 = pneg %p208
      %p585 = pneg %p205
      %p586 = pneg %p229
      %p587 = pneg %p226
      %p588 = pneg %p250
      %p589 = pneg %p247
      %p590 = pneg %p271
      %p591 = pneg %p268
      %p592 = pneg %p292
      %p593 = pneg %p289
      %p594 = pneg %p313
      %p595 = pneg %p310
      %p596 = pneg %p334
      %p597 = pneg %p331
      %p598 = pneg %p355
      %p599 = pneg %p352
      %p600 = pneg %p376
      %p601 = pneg %p373
      %p602 = pneg %p397
      %p603 = pneg %p394
      %p604 = pneg %p418
      %p605 = pneg %p415
      %p606 = pneg %p439
      %p607 = pneg %p436
      %p608 = pneg %p465
      %p609 = pneg %p462
      %p610 = scmp.lt.s32.totalorder %s30, 1
      %s611 = scalar_select %p610, %s30, 1
      %s612 = smul.addr %s611, 8
      %s613 = scalar_lea.vmem %s19, %s612
      %p614 = scmp.lt.s32.totalorder %s30, 1
      %s615 = scalar_select %p614, %s30, 1
      %s616 = smul.addr %s615, 8
      %s617 = scalar_lea.vmem %s0, %s616
      %p618 = scmp.lt.s32.totalorder %s30, 1
      %s619 = scalar_select %p618, %s30, 1
      %s620 = scalar_lea.vmem %s1, %s619
      %p621 = scmp.lt.s32.totalorder %s30, 1
      %s622 = scalar_select %p621, %s30, 1
      %s623 = smul.addr %s622, 8
      %s624 = scalar_lea.vmem %s2, %s623
      %p625 = scmp.lt.s32.totalorder %s30, 1
      %s626 = scalar_select %p625, %s30, 1
      %s627 = smul.addr %s626, 8
      %s628 = scalar_lea.vmem %s19, %s627
      %v630 = vld [vmem:[%s617] sm:$0xff]
      %v631 = vpack.c.bf16 %v630, %v630
      %v632 = vld [vmem:[%s3] sm:$0xf]
      %v633 = vld [vmem:[%s3 + $0x4] sm:$0xf]
      %v634 = vld [vmem:[%s3 + $0x8] sm:$0xf]
      %v635 = vld [vmem:[%s3 + $0xc] sm:$0xf]
      %v636 = vld [vmem:[%s3 + $0x10] sm:$0xf]
      %v637 = vld [vmem:[%s3 + $0x14] sm:$0xf]
      %v638 = vld [vmem:[%s3 + $0x18] sm:$0xf]
      %v639 = vld [vmem:[%s3 + $0x1c] sm:$0xf]
      %v640 = vld [vmem:[%s3 + $0x20] sm:$0xf]
      %v641 = vld [vmem:[%s3 + $0x24] sm:$0xf]
      %v642 = vld [vmem:[%s3 + $0x28] sm:$0xf]
      %v643 = vld [vmem:[%s3 + $0x2c] sm:$0xf]
      %v644 = vld [vmem:[%s3 + $0x30] sm:$0xf]
      %v645 = vld [vmem:[%s3 + $0x34] sm:$0xf]
      %v646 = vld [vmem:[%s3 + $0x38] sm:$0xf]
      %v647 = vld [vmem:[%s3 + $0x3c] sm:$0xf]
      %v648 = vld [vmem:[%s3 + $0x40] sm:$0xf]
      %v649 = vld [vmem:[%s3 + $0x44] sm:$0xf]
      %v650 = vld [vmem:[%s3 + $0x48] sm:$0xf]
      %v651 = vld [vmem:[%s3 + $0x4c] sm:$0xf]
      %v652 = vld [vmem:[%s3 + $0x50] sm:$0xf]
      %v653 = vld [vmem:[%s3 + $0x54] sm:$0xf]
      %v654 = vld [vmem:[%s3 + $0x58] sm:$0xf]
      %v655 = vld [vmem:[%s3 + $0x5c] sm:$0xf]
      %v656 = vld [vmem:[%s3 + $0x60] sm:$0xf]
      %v657 = vld [vmem:[%s3 + $0x64] sm:$0xf]
      %v658 = vld [vmem:[%s3 + $0x68] sm:$0xf]
      %v659 = vld [vmem:[%s3 + $0x6c] sm:$0xf]
      %v660 = vld [vmem:[%s3 + $0x70] sm:$0xf]
      %v661 = vld [vmem:[%s3 + $0x74] sm:$0xf]
      %v662 = vld [vmem:[%s3 + $0x78] sm:$0xf]
      %v663 = vld [vmem:[%s3 + $0x7c] sm:$0xf]
      %v664 = vld [vmem:[%s6] sm:$0x1]
      %v665 = vld [vmem:[%s6 + $0x1] sm:$0x1]
      %v666 = vld [vmem:[%s6 + $0x2] sm:$0x1]
      %v667 = vld [vmem:[%s6 + $0x3] sm:$0x1]
      %v668 = vld [vmem:[%s6 + $0x4] sm:$0x1]
      %v669 = vld [vmem:[%s6 + $0x5] sm:$0x1]
      %v670 = vld [vmem:[%s6 + $0x6] sm:$0x1]
      %v671 = vld [vmem:[%s6 + $0x7] sm:$0x1]
      %v680 = vperm.slane %v664, 0
      %v681 = vperm.slane %v665, 0
      %v682 = vperm.slane %v666, 0
      %v683 = vperm.slane %v667, 0
      %v684 = vperm.slane %v668, 0
      %v685 = vperm.slane %v669, 0
      %v686 = vperm.slane %v670, 0
      %v687 = vperm.slane %v671, 0
      %v700 = vunpack.c.l.b16 %v632
      %v701 = vunpack.c.l.b16 %v633
      %v702 = vunpack.c.l.b16 %v634
      %v703 = vunpack.c.l.b16 %v635
      %v704 = vpack.c.b16 %v701, %v700
      %v705 = vpack.c.b16 %v703, %v702
      %vm708 = vcmask 261120
      %v710 = vsel %vm708, %v631, 0
      %712 = vmatpush.bf16.msra.mxu0 0
      %713 = vmatpush.bf16.msra.mxu0 0
      %714 = vmatpush.bf16.msra.mxu0 0
      %715 = vmatpush.bf16.msra.mxu0 0
      %716 = vmatpush.bf16.msra.mxu0 0
      %717 = vmatpush.bf16.msra.mxu0 0
      %718 = vmatpush.bf16.msra.mxu0 %v705
      %719 = vmatpush.bf16.msra.mxu0 %v704
      %720 = vmatmul.bf16.gmra.mxu0 %v710
      %v721 = vpop.f32.mrf.mxu0
      %v722 = vadd.f32 %v680, %v721
      %v723 = vpop.f32.mrf.mxu0
      %724 = vdwg.mxu0
      %v729 = vunpack.c.l.b16 %v636
      %v730 = vunpack.c.l.b16 %v637
      %v731 = vunpack.c.l.b16 %v638
      %v732 = vunpack.c.l.b16 %v639
      %v733 = vpack.c.b16 %v730, %v729
      %v734 = vpack.c.b16 %v732, %v731
      %737 = vmatpush.bf16.msra.mxu0 0
      %738 = vmatpush.bf16.msra.mxu0 0
      %739 = vmatpush.bf16.msra.mxu0 0
      %740 = vmatpush.bf16.msra.mxu0 0
      %741 = vmatpush.bf16.msra.mxu0 0
      %742 = vmatpush.bf16.msra.mxu0 0
      %743 = vmatpush.bf16.msra.mxu0 %v734
      %744 = vmatpush.bf16.msra.mxu0 %v733
      %745 = vmatmul.bf16.gmra.mxu0 %v710
      %v746 = vpop.f32.mrf.mxu0
      %v747 = vadd.f32 %v681, %v746
      %v748 = vpop.f32.mrf.mxu0
      %749 = vdwg.mxu0
      %v754 = vunpack.c.l.b16 %v640
      %v755 = vunpack.c.l.b16 %v641
      %v756 = vunpack.c.l.b16 %v642
      %v757 = vunpack.c.l.b16 %v643
      %v758 = vpack.c.b16 %v755, %v754
      %v759 = vpack.c.b16 %v757, %v756
      %762 = vmatpush.bf16.msra.mxu0 0
      %763 = vmatpush.bf16.msra.mxu0 0
      %764 = vmatpush.bf16.msra.mxu0 0
      %765 = vmatpush.bf16.msra.mxu0 0
      %766 = vmatpush.bf16.msra.mxu0 0
      %767 = vmatpush.bf16.msra.mxu0 0
      %768 = vmatpush.bf16.msra.mxu0 %v759
      %769 = vmatpush.bf16.msra.mxu0 %v758
      %770 = vmatmul.bf16.gmra.mxu0 %v710
      %v771 = vpop.f32.mrf.mxu0
      %v772 = vadd.f32 %v682, %v771
      %v773 = vpop.f32.mrf.mxu0
      %774 = vdwg.mxu0
      %v779 = vunpack.c.l.b16 %v644
      %v780 = vunpack.c.l.b16 %v645
      %v781 = vunpack.c.l.b16 %v646
      %v782 = vunpack.c.l.b16 %v647
      %v783 = vpack.c.b16 %v780, %v779
      %v784 = vpack.c.b16 %v782, %v781
      %787 = vmatpush.bf16.msra.mxu0 0
      %788 = vmatpush.bf16.msra.mxu0 0
      %789 = vmatpush.bf16.msra.mxu0 0
      %790 = vmatpush.bf16.msra.mxu0 0
      %791 = vmatpush.bf16.msra.mxu0 0
      %792 = vmatpush.bf16.msra.mxu0 0
      %793 = vmatpush.bf16.msra.mxu0 %v784
      %794 = vmatpush.bf16.msra.mxu0 %v783
      %795 = vmatmul.bf16.gmra.mxu0 %v710
      %v796 = vpop.f32.mrf.mxu0
      %v797 = vadd.f32 %v683, %v796
      %v798 = vpop.f32.mrf.mxu0
      %799 = vdwg.mxu0
      %v804 = vunpack.c.l.b16 %v648
      %v805 = vunpack.c.l.b16 %v649
      %v806 = vunpack.c.l.b16 %v650
      %v807 = vunpack.c.l.b16 %v651
      %v808 = vpack.c.b16 %v805, %v804
      %v809 = vpack.c.b16 %v807, %v806
      %812 = vmatpush.bf16.msra.mxu0 0
      %813 = vmatpush.bf16.msra.mxu0 0
      %814 = vmatpush.bf16.msra.mxu0 0
      %815 = vmatpush.bf16.msra.mxu0 0
      %816 = vmatpush.bf16.msra.mxu0 0
      %817 = vmatpush.bf16.msra.mxu0 0
      %818 = vmatpush.bf16.msra.mxu0 %v809
      %819 = vmatpush.bf16.msra.mxu0 %v808
      %820 = vmatmul.bf16.gmra.mxu0 %v710
      %v821 = vpop.f32.mrf.mxu0
      %v822 = vadd.f32 %v684, %v821
      %v823 = vpop.f32.mrf.mxu0
      %824 = vdwg.mxu0
      %v829 = vunpack.c.l.b16 %v652
      %v830 = vunpack.c.l.b16 %v653
      %v831 = vunpack.c.l.b16 %v654
      %v832 = vunpack.c.l.b16 %v655
      %v833 = vpack.c.b16 %v830, %v829
      %v834 = vpack.c.b16 %v832, %v831
      %837 = vmatpush.bf16.msra.mxu0 0
      %838 = vmatpush.bf16.msra.mxu0 0
      %839 = vmatpush.bf16.msra.mxu0 0
      %840 = vmatpush.bf16.msra.mxu0 0
      %841 = vmatpush.bf16.msra.mxu0 0
      %842 = vmatpush.bf16.msra.mxu0 0
      %843 = vmatpush.bf16.msra.mxu0 %v834
      %844 = vmatpush.bf16.msra.mxu0 %v833
      %845 = vmatmul.bf16.gmra.mxu0 %v710
      %v846 = vpop.f32.mrf.mxu0
      %v847 = vadd.f32 %v685, %v846
      %v848 = vpop.f32.mrf.mxu0
      %849 = vdwg.mxu0
      %v854 = vunpack.c.l.b16 %v656
      %v855 = vunpack.c.l.b16 %v657
      %v856 = vunpack.c.l.b16 %v658
      %v857 = vunpack.c.l.b16 %v659
      %v858 = vpack.c.b16 %v855, %v854
      %v859 = vpack.c.b16 %v857, %v856
      %862 = vmatpush.bf16.msra.mxu0 0
      %863 = vmatpush.bf16.msra.mxu0 0
      %864 = vmatpush.bf16.msra.mxu0 0
      %865 = vmatpush.bf16.msra.mxu0 0
      %866 = vmatpush.bf16.msra.mxu0 0
      %867 = vmatpush.bf16.msra.mxu0 0
      %868 = vmatpush.bf16.msra.mxu0 %v859
      %869 = vmatpush.bf16.msra.mxu0 %v858
      %870 = vmatmul.bf16.gmra.mxu0 %v710
      %v871 = vpop.f32.mrf.mxu0
      %v872 = vadd.f32 %v686, %v871
      %v873 = vpop.f32.mrf.mxu0
      %874 = vdwg.mxu0
      %v879 = vunpack.c.l.b16 %v660
      %v880 = vunpack.c.l.b16 %v661
      %v881 = vunpack.c.l.b16 %v662
      %v882 = vunpack.c.l.b16 %v663
      %v883 = vpack.c.b16 %v880, %v879
      %v884 = vpack.c.b16 %v882, %v881
      %887 = vmatpush.bf16.msra.mxu0 0
      %888 = vmatpush.bf16.msra.mxu0 0
      %889 = vmatpush.bf16.msra.mxu0 0
      %890 = vmatpush.bf16.msra.mxu0 0
      %891 = vmatpush.bf16.msra.mxu0 0
      %892 = vmatpush.bf16.msra.mxu0 0
      %893 = vmatpush.bf16.msra.mxu0 %v884
      %894 = vmatpush.bf16.msra.mxu0 %v883
      %895 = vmatmul.bf16.gmra.mxu0 %v710
      %v896 = vpop.f32.mrf.mxu0
      %v897 = vadd.f32 %v687, %v896
      %v898 = vpop.f32.mrf.mxu0
      %899 = vdwg.mxu0
      %v900 = vld [vmem:[%s4] sm:$0xf]
      %v901 = vld [vmem:[%s4 + $0x4] sm:$0xf]
      %v902 = vld [vmem:[%s4 + $0x8] sm:$0xf]
      %v903 = vld [vmem:[%s4 + $0xc] sm:$0xf]
      %v904 = vld [vmem:[%s4 + $0x10] sm:$0xf]
      %v905 = vld [vmem:[%s4 + $0x14] sm:$0xf]
      %v906 = vld [vmem:[%s4 + $0x18] sm:$0xf]
      %v907 = vld [vmem:[%s4 + $0x1c] sm:$0xf]
      %v908 = vld [vmem:[%s4 + $0x20] sm:$0xf]
      %v909 = vld [vmem:[%s4 + $0x24] sm:$0xf]
      %v910 = vld [vmem:[%s4 + $0x28] sm:$0xf]
      %v911 = vld [vmem:[%s4 + $0x2c] sm:$0xf]
      %v912 = vld [vmem:[%s4 + $0x30] sm:$0xf]
      %v913 = vld [vmem:[%s4 + $0x34] sm:$0xf]
      %v914 = vld [vmem:[%s4 + $0x38] sm:$0xf]
      %v915 = vld [vmem:[%s4 + $0x3c] sm:$0xf]
      %v916 = vld [vmem:[%s4 + $0x40] sm:$0xf]
      %v917 = vld [vmem:[%s4 + $0x44] sm:$0xf]
      %v918 = vld [vmem:[%s4 + $0x48] sm:$0xf]
      %v919 = vld [vmem:[%s4 + $0x4c] sm:$0xf]
      %v920 = vld [vmem:[%s4 + $0x50] sm:$0xf]
      %v921 = vld [vmem:[%s4 + $0x54] sm:$0xf]
      %v922 = vld [vmem:[%s4 + $0x58] sm:$0xf]
      %v923 = vld [vmem:[%s4 + $0x5c] sm:$0xf]
      %v924 = vld [vmem:[%s4 + $0x60] sm:$0xf]
      %v925 = vld [vmem:[%s4 + $0x64] sm:$0xf]
      %v926 = vld [vmem:[%s4 + $0x68] sm:$0xf]
      %v927 = vld [vmem:[%s4 + $0x6c] sm:$0xf]
      %v928 = vld [vmem:[%s4 + $0x70] sm:$0xf]
      %v929 = vld [vmem:[%s4 + $0x74] sm:$0xf]
      %v930 = vld [vmem:[%s4 + $0x78] sm:$0xf]
      %v931 = vld [vmem:[%s4 + $0x7c] sm:$0xf]
      %v932 = vld [vmem:[%s7] sm:$0x1]
      %v933 = vld [vmem:[%s7 + $0x1] sm:$0x1]
      %v934 = vld [vmem:[%s7 + $0x2] sm:$0x1]
      %v935 = vld [vmem:[%s7 + $0x3] sm:$0x1]
      %v936 = vld [vmem:[%s7 + $0x4] sm:$0x1]
      %v937 = vld [vmem:[%s7 + $0x5] sm:$0x1]
      %v938 = vld [vmem:[%s7 + $0x6] sm:$0x1]
      %v939 = vld [vmem:[%s7 + $0x7] sm:$0x1]
      %v948 = vperm.slane %v932, 0
      %v949 = vperm.slane %v933, 0
      %v950 = vperm.slane %v934, 0
      %v951 = vperm.slane %v935, 0
      %v952 = vperm.slane %v936, 0
      %v953 = vperm.slane %v937, 0
      %v954 = vperm.slane %v938, 0
      %v955 = vperm.slane %v939, 0
      %v968 = vunpack.c.l.b16 %v900
      %v969 = vunpack.c.l.b16 %v901
      %v970 = vunpack.c.l.b16 %v902
      %v971 = vunpack.c.l.b16 %v903
      %v972 = vpack.c.b16 %v969, %v968
      %v973 = vpack.c.b16 %v971, %v970
      %976 = vmatpush.bf16.msra.mxu0 0
      %977 = vmatpush.bf16.msra.mxu0 0
      %978 = vmatpush.bf16.msra.mxu0 0
      %979 = vmatpush.bf16.msra.mxu0 0
      %980 = vmatpush.bf16.msra.mxu0 0
      %981 = vmatpush.bf16.msra.mxu0 0
      %982 = vmatpush.bf16.msra.mxu0 %v973
      %983 = vmatpush.bf16.msra.mxu0 %v972
      %984 = vmatmul.bf16.gmra.mxu0 %v710
      %v985 = vpop.f32.mrf.mxu0
      %v986 = vadd.f32 %v948, %v985
      %v987 = vpop.f32.mrf.mxu0
      %988 = vdwg.mxu0
      %v993 = vunpack.c.l.b16 %v904
      %v994 = vunpack.c.l.b16 %v905
      %v995 = vunpack.c.l.b16 %v906
      %v996 = vunpack.c.l.b16 %v907
      %v997 = vpack.c.b16 %v994, %v993
      %v998 = vpack.c.b16 %v996, %v995
      %1001 = vmatpush.bf16.msra.mxu0 0
      %1002 = vmatpush.bf16.msra.mxu0 0
      %1003 = vmatpush.bf16.msra.mxu0 0
      %1004 = vmatpush.bf16.msra.mxu0 0
      %1005 = vmatpush.bf16.msra.mxu0 0
      %1006 = vmatpush.bf16.msra.mxu0 0
      %1007 = vmatpush.bf16.msra.mxu0 %v998
      %1008 = vmatpush.bf16.msra.mxu0 %v997
      %1009 = vmatmul.bf16.gmra.mxu0 %v710
      %v1010 = vpop.f32.mrf.mxu0
      %v1011 = vadd.f32 %v949, %v1010
      %v1012 = vpop.f32.mrf.mxu0
      %1013 = vdwg.mxu0
      %v1018 = vunpack.c.l.b16 %v908
      %v1019 = vunpack.c.l.b16 %v909
      %v1020 = vunpack.c.l.b16 %v910
      %v1021 = vunpack.c.l.b16 %v911
      %v1022 = vpack.c.b16 %v1019, %v1018
      %v1023 = vpack.c.b16 %v1021, %v1020
      %1026 = vmatpush.bf16.msra.mxu0 0
      %1027 = vmatpush.bf16.msra.mxu0 0
      %1028 = vmatpush.bf16.msra.mxu0 0
      %1029 = vmatpush.bf16.msra.mxu0 0
      %1030 = vmatpush.bf16.msra.mxu0 0
      %1031 = vmatpush.bf16.msra.mxu0 0
      %1032 = vmatpush.bf16.msra.mxu0 %v1023
      %1033 = vmatpush.bf16.msra.mxu0 %v1022
      %1034 = vmatmul.bf16.gmra.mxu0 %v710
      %v1035 = vpop.f32.mrf.mxu0
      %v1036 = vadd.f32 %v950, %v1035
      %v1037 = vpop.f32.mrf.mxu0
      %1038 = vdwg.mxu0
      %v1043 = vunpack.c.l.b16 %v912
      %v1044 = vunpack.c.l.b16 %v913
      %v1045 = vunpack.c.l.b16 %v914
      %v1046 = vunpack.c.l.b16 %v915
      %v1047 = vpack.c.b16 %v1044, %v1043
      %v1048 = vpack.c.b16 %v1046, %v1045
      %1051 = vmatpush.bf16.msra.mxu0 0
      %1052 = vmatpush.bf16.msra.mxu0 0
      %1053 = vmatpush.bf16.msra.mxu0 0
      %1054 = vmatpush.bf16.msra.mxu0 0
      %1055 = vmatpush.bf16.msra.mxu0 0
      %1056 = vmatpush.bf16.msra.mxu0 0
      %1057 = vmatpush.bf16.msra.mxu0 %v1048
      %1058 = vmatpush.bf16.msra.mxu0 %v1047
      %1059 = vmatmul.bf16.gmra.mxu0 %v710
      %v1060 = vpop.f32.mrf.mxu0
      %v1061 = vadd.f32 %v951, %v1060
      %v1062 = vpop.f32.mrf.mxu0
      %1063 = vdwg.mxu0
      %v1068 = vunpack.c.l.b16 %v916
      %v1069 = vunpack.c.l.b16 %v917
      %v1070 = vunpack.c.l.b16 %v918
      %v1071 = vunpack.c.l.b16 %v919
      %v1072 = vpack.c.b16 %v1069, %v1068
      %v1073 = vpack.c.b16 %v1071, %v1070
      %1076 = vmatpush.bf16.msra.mxu0 0
      %1077 = vmatpush.bf16.msra.mxu0 0
      %1078 = vmatpush.bf16.msra.mxu0 0
      %1079 = vmatpush.bf16.msra.mxu0 0
      %1080 = vmatpush.bf16.msra.mxu0 0
      %1081 = vmatpush.bf16.msra.mxu0 0
      %1082 = vmatpush.bf16.msra.mxu0 %v1073
      %1083 = vmatpush.bf16.msra.mxu0 %v1072
      %1084 = vmatmul.bf16.gmra.mxu0 %v710
      %v1085 = vpop.f32.mrf.mxu0
      %v1086 = vadd.f32 %v952, %v1085
      %v1087 = vpop.f32.mrf.mxu0
      %1088 = vdwg.mxu0
      %v1093 = vunpack.c.l.b16 %v920
      %v1094 = vunpack.c.l.b16 %v921
      %v1095 = vunpack.c.l.b16 %v922
      %v1096 = vunpack.c.l.b16 %v923
      %v1097 = vpack.c.b16 %v1094, %v1093
      %v1098 = vpack.c.b16 %v1096, %v1095
      %1101 = vmatpush.bf16.msra.mxu0 0
      %1102 = vmatpush.bf16.msra.mxu0 0
      %1103 = vmatpush.bf16.msra.mxu0 0
      %1104 = vmatpush.bf16.msra.mxu0 0
      %1105 = vmatpush.bf16.msra.mxu0 0
      %1106 = vmatpush.bf16.msra.mxu0 0
      %1107 = vmatpush.bf16.msra.mxu0 %v1098
      %1108 = vmatpush.bf16.msra.mxu0 %v1097
      %1109 = vmatmul.bf16.gmra.mxu0 %v710
      %v1110 = vpop.f32.mrf.mxu0
      %v1111 = vadd.f32 %v953, %v1110
      %v1112 = vpop.f32.mrf.mxu0
      %1113 = vdwg.mxu0
      %v1118 = vunpack.c.l.b16 %v924
      %v1119 = vunpack.c.l.b16 %v925
      %v1120 = vunpack.c.l.b16 %v926
      %v1121 = vunpack.c.l.b16 %v927
      %v1122 = vpack.c.b16 %v1119, %v1118
      %v1123 = vpack.c.b16 %v1121, %v1120
      %1126 = vmatpush.bf16.msra.mxu0 0
      %1127 = vmatpush.bf16.msra.mxu0 0
      %1128 = vmatpush.bf16.msra.mxu0 0
      %1129 = vmatpush.bf16.msra.mxu0 0
      %1130 = vmatpush.bf16.msra.mxu0 0
      %1131 = vmatpush.bf16.msra.mxu0 0
      %1132 = vmatpush.bf16.msra.mxu0 %v1123
      %1133 = vmatpush.bf16.msra.mxu0 %v1122
      %1134 = vmatmul.bf16.gmra.mxu0 %v710
      %v1135 = vpop.f32.mrf.mxu0
      %v1136 = vadd.f32 %v954, %v1135
      %v1137 = vpop.f32.mrf.mxu0
      %1138 = vdwg.mxu0
      %v1143 = vunpack.c.l.b16 %v928
      %v1144 = vunpack.c.l.b16 %v929
      %v1145 = vunpack.c.l.b16 %v930
      %v1146 = vunpack.c.l.b16 %v931
      %v1147 = vpack.c.b16 %v1144, %v1143
      %v1148 = vpack.c.b16 %v1146, %v1145
      %1151 = vmatpush.bf16.msra.mxu0 0
      %1152 = vmatpush.bf16.msra.mxu0 0
      %1153 = vmatpush.bf16.msra.mxu0 0
      %1154 = vmatpush.bf16.msra.mxu0 0
      %1155 = vmatpush.bf16.msra.mxu0 0
      %1156 = vmatpush.bf16.msra.mxu0 0
      %1157 = vmatpush.bf16.msra.mxu0 %v1148
      %1158 = vmatpush.bf16.msra.mxu0 %v1147
      %1159 = vmatmul.bf16.gmra.mxu0 %v710
      %v1160 = vpop.f32.mrf.mxu0
      %v1161 = vadd.f32 %v955, %v1160
      %v1162 = vpop.f32.mrf.mxu0
      %1163 = vdwg.mxu0
      %v1164 = vld [vmem:[%s5] sm:$0xf]
      %v1165 = vld [vmem:[%s5 + $0x4] sm:$0xf]
      %v1166 = vld [vmem:[%s5 + $0x8] sm:$0xf]
      %v1167 = vld [vmem:[%s5 + $0xc] sm:$0xf]
      %v1168 = vld [vmem:[%s5 + $0x10] sm:$0xf]
      %v1169 = vld [vmem:[%s5 + $0x14] sm:$0xf]
      %v1170 = vld [vmem:[%s5 + $0x18] sm:$0xf]
      %v1171 = vld [vmem:[%s5 + $0x1c] sm:$0xf]
      %v1172 = vld [vmem:[%s5 + $0x20] sm:$0xf]
      %v1173 = vld [vmem:[%s5 + $0x24] sm:$0xf]
      %v1174 = vld [vmem:[%s5 + $0x28] sm:$0xf]
      %v1175 = vld [vmem:[%s5 + $0x2c] sm:$0xf]
      %v1176 = vld [vmem:[%s5 + $0x30] sm:$0xf]
      %v1177 = vld [vmem:[%s5 + $0x34] sm:$0xf]
      %v1178 = vld [vmem:[%s5 + $0x38] sm:$0xf]
      %v1179 = vld [vmem:[%s5 + $0x3c] sm:$0xf]
      %v1180 = vld [vmem:[%s5 + $0x40] sm:$0xf]
      %v1181 = vld [vmem:[%s5 + $0x44] sm:$0xf]
      %v1182 = vld [vmem:[%s5 + $0x48] sm:$0xf]
      %v1183 = vld [vmem:[%s5 + $0x4c] sm:$0xf]
      %v1184 = vld [vmem:[%s5 + $0x50] sm:$0xf]
      %v1185 = vld [vmem:[%s5 + $0x54] sm:$0xf]
      %v1186 = vld [vmem:[%s5 + $0x58] sm:$0xf]
      %v1187 = vld [vmem:[%s5 + $0x5c] sm:$0xf]
      %v1188 = vld [vmem:[%s5 + $0x60] sm:$0xf]
      %v1189 = vld [vmem:[%s5 + $0x64] sm:$0xf]
      %v1190 = vld [vmem:[%s5 + $0x68] sm:$0xf]
      %v1191 = vld [vmem:[%s5 + $0x6c] sm:$0xf]
      %v1192 = vld [vmem:[%s5 + $0x70] sm:$0xf]
      %v1193 = vld [vmem:[%s5 + $0x74] sm:$0xf]
      %v1194 = vld [vmem:[%s5 + $0x78] sm:$0xf]
      %v1195 = vld [vmem:[%s5 + $0x7c] sm:$0xf]
      %v1196 = vld [vmem:[%s8] sm:$0x1]
      %v1197 = vld [vmem:[%s8 + $0x1] sm:$0x1]
      %v1198 = vld [vmem:[%s8 + $0x2] sm:$0x1]
      %v1199 = vld [vmem:[%s8 + $0x3] sm:$0x1]
      %v1200 = vld [vmem:[%s8 + $0x4] sm:$0x1]
      %v1201 = vld [vmem:[%s8 + $0x5] sm:$0x1]
      %v1202 = vld [vmem:[%s8 + $0x6] sm:$0x1]
      %v1203 = vld [vmem:[%s8 + $0x7] sm:$0x1]
      %v1212 = vperm.slane %v1196, 0
      %v1213 = vperm.slane %v1197, 0
      %v1214 = vperm.slane %v1198, 0
      %v1215 = vperm.slane %v1199, 0
      %v1216 = vperm.slane %v1200, 0
      %v1217 = vperm.slane %v1201, 0
      %v1218 = vperm.slane %v1202, 0
      %v1219 = vperm.slane %v1203, 0
      %v1232 = vunpack.c.l.b16 %v1164
      %v1233 = vunpack.c.l.b16 %v1165
      %v1234 = vunpack.c.l.b16 %v1166
      %v1235 = vunpack.c.l.b16 %v1167
      %v1236 = vpack.c.b16 %v1233, %v1232
      %v1237 = vpack.c.b16 %v1235, %v1234
      %1240 = vmatpush.bf16.msra.mxu0 0
      %1241 = vmatpush.bf16.msra.mxu0 0
      %1242 = vmatpush.bf16.msra.mxu0 0
      %1243 = vmatpush.bf16.msra.mxu0 0
      %1244 = vmatpush.bf16.msra.mxu0 0
      %1245 = vmatpush.bf16.msra.mxu0 0
      %1246 = vmatpush.bf16.msra.mxu0 %v1237
      %1247 = vmatpush.bf16.msra.mxu0 %v1236
      %1248 = vmatmul.bf16.gmra.mxu0 %v710
      %v1249 = vpop.f32.mrf.mxu0
      %v1250 = vadd.f32 %v1212, %v1249
      %v1251 = vpop.f32.mrf.mxu0
      %1252 = vdwg.mxu0
      %v1257 = vunpack.c.l.b16 %v1168
      %v1258 = vunpack.c.l.b16 %v1169
      %v1259 = vunpack.c.l.b16 %v1170
      %v1260 = vunpack.c.l.b16 %v1171
      %v1261 = vpack.c.b16 %v1258, %v1257
      %v1262 = vpack.c.b16 %v1260, %v1259
      %1265 = vmatpush.bf16.msra.mxu0 0
      %1266 = vmatpush.bf16.msra.mxu0 0
      %1267 = vmatpush.bf16.msra.mxu0 0
      %1268 = vmatpush.bf16.msra.mxu0 0
      %1269 = vmatpush.bf16.msra.mxu0 0
      %1270 = vmatpush.bf16.msra.mxu0 0
      %1271 = vmatpush.bf16.msra.mxu0 %v1262
      %1272 = vmatpush.bf16.msra.mxu0 %v1261
      %1273 = vmatmul.bf16.gmra.mxu0 %v710
      %v1274 = vpop.f32.mrf.mxu0
      %v1275 = vadd.f32 %v1213, %v1274
      %v1276 = vpop.f32.mrf.mxu0
      %1277 = vdwg.mxu0
      %v1282 = vunpack.c.l.b16 %v1172
      %v1283 = vunpack.c.l.b16 %v1173
      %v1284 = vunpack.c.l.b16 %v1174
      %v1285 = vunpack.c.l.b16 %v1175
      %v1286 = vpack.c.b16 %v1283, %v1282
      %v1287 = vpack.c.b16 %v1285, %v1284
      %1290 = vmatpush.bf16.msra.mxu0 0
      %1291 = vmatpush.bf16.msra.mxu0 0
      %1292 = vmatpush.bf16.msra.mxu0 0
      %1293 = vmatpush.bf16.msra.mxu0 0
      %1294 = vmatpush.bf16.msra.mxu0 0
      %1295 = vmatpush.bf16.msra.mxu0 0
      %1296 = vmatpush.bf16.msra.mxu0 %v1287
      %1297 = vmatpush.bf16.msra.mxu0 %v1286
      %1298 = vmatmul.bf16.gmra.mxu0 %v710
      %v1299 = vpop.f32.mrf.mxu0
      %v1300 = vadd.f32 %v1214, %v1299
      %v1301 = vpop.f32.mrf.mxu0
      %1302 = vdwg.mxu0
      %v1307 = vunpack.c.l.b16 %v1176
      %v1308 = vunpack.c.l.b16 %v1177
      %v1309 = vunpack.c.l.b16 %v1178
      %v1310 = vunpack.c.l.b16 %v1179
      %v1311 = vpack.c.b16 %v1308, %v1307
      %v1312 = vpack.c.b16 %v1310, %v1309
      %1315 = vmatpush.bf16.msra.mxu0 0
      %1316 = vmatpush.bf16.msra.mxu0 0
      %1317 = vmatpush.bf16.msra.mxu0 0
      %1318 = vmatpush.bf16.msra.mxu0 0
      %1319 = vmatpush.bf16.msra.mxu0 0
      %1320 = vmatpush.bf16.msra.mxu0 0
      %1321 = vmatpush.bf16.msra.mxu0 %v1312
      %1322 = vmatpush.bf16.msra.mxu0 %v1311
      %1323 = vmatmul.bf16.gmra.mxu0 %v710
      %v1324 = vpop.f32.mrf.mxu0
      %v1325 = vadd.f32 %v1215, %v1324
      %v1326 = vpop.f32.mrf.mxu0
      %1327 = vdwg.mxu0
      %v1332 = vunpack.c.l.b16 %v1180
      %v1333 = vunpack.c.l.b16 %v1181
      %v1334 = vunpack.c.l.b16 %v1182
      %v1335 = vunpack.c.l.b16 %v1183
      %v1336 = vpack.c.b16 %v1333, %v1332
      %v1337 = vpack.c.b16 %v1335, %v1334
      %1340 = vmatpush.bf16.msra.mxu0 0
      %1341 = vmatpush.bf16.msra.mxu0 0
      %1342 = vmatpush.bf16.msra.mxu0 0
      %1343 = vmatpush.bf16.msra.mxu0 0
      %1344 = vmatpush.bf16.msra.mxu0 0
      %1345 = vmatpush.bf16.msra.mxu0 0
      %1346 = vmatpush.bf16.msra.mxu0 %v1337
      %1347 = vmatpush.bf16.msra.mxu0 %v1336
      %1348 = vmatmul.bf16.gmra.mxu0 %v710
      %v1349 = vpop.f32.mrf.mxu0
      %v1350 = vadd.f32 %v1216, %v1349
      %v1351 = vpop.f32.mrf.mxu0
      %1352 = vdwg.mxu0
      %v1357 = vunpack.c.l.b16 %v1184
      %v1358 = vunpack.c.l.b16 %v1185
      %v1359 = vunpack.c.l.b16 %v1186
      %v1360 = vunpack.c.l.b16 %v1187
      %v1361 = vpack.c.b16 %v1358, %v1357
      %v1362 = vpack.c.b16 %v1360, %v1359
      %1365 = vmatpush.bf16.msra.mxu0 0
      %1366 = vmatpush.bf16.msra.mxu0 0
      %1367 = vmatpush.bf16.msra.mxu0 0
      %1368 = vmatpush.bf16.msra.mxu0 0
      %1369 = vmatpush.bf16.msra.mxu0 0
      %1370 = vmatpush.bf16.msra.mxu0 0
      %1371 = vmatpush.bf16.msra.mxu0 %v1362
      %1372 = vmatpush.bf16.msra.mxu0 %v1361
      %1373 = vmatmul.bf16.gmra.mxu0 %v710
      %v1374 = vpop.f32.mrf.mxu0
      %v1375 = vadd.f32 %v1217, %v1374
      %v1376 = vpop.f32.mrf.mxu0
      %1377 = vdwg.mxu0
      %v1382 = vunpack.c.l.b16 %v1188
      %v1383 = vunpack.c.l.b16 %v1189
      %v1384 = vunpack.c.l.b16 %v1190
      %v1385 = vunpack.c.l.b16 %v1191
      %v1386 = vpack.c.b16 %v1383, %v1382
      %v1387 = vpack.c.b16 %v1385, %v1384
      %1390 = vmatpush.bf16.msra.mxu0 0
      %1391 = vmatpush.bf16.msra.mxu0 0
      %1392 = vmatpush.bf16.msra.mxu0 0
      %1393 = vmatpush.bf16.msra.mxu0 0
      %1394 = vmatpush.bf16.msra.mxu0 0
      %1395 = vmatpush.bf16.msra.mxu0 0
      %1396 = vmatpush.bf16.msra.mxu0 %v1387
      %1397 = vmatpush.bf16.msra.mxu0 %v1386
      %1398 = vmatmul.bf16.gmra.mxu0 %v710
      %v1399 = vpop.f32.mrf.mxu0
      %v1400 = vadd.f32 %v1218, %v1399
      %v1401 = vpop.f32.mrf.mxu0
      %1402 = vdwg.mxu0
      %v1407 = vunpack.c.l.b16 %v1192
      %v1408 = vunpack.c.l.b16 %v1193
      %v1409 = vunpack.c.l.b16 %v1194
      %v1410 = vunpack.c.l.b16 %v1195
      %v1411 = vpack.c.b16 %v1408, %v1407
      %v1412 = vpack.c.b16 %v1410, %v1409
      %1415 = vmatpush.bf16.msra.mxu0 0
      %1416 = vmatpush.bf16.msra.mxu0 0
      %1417 = vmatpush.bf16.msra.mxu0 0
      %1418 = vmatpush.bf16.msra.mxu0 0
      %1419 = vmatpush.bf16.msra.mxu0 0
      %1420 = vmatpush.bf16.msra.mxu0 0
      %1421 = vmatpush.bf16.msra.mxu0 %v1412
      %1422 = vmatpush.bf16.msra.mxu0 %v1411
      %1423 = vmatmul.bf16.gmra.mxu0 %v710
      %v1424 = vpop.f32.mrf.mxu0
      %v1425 = vadd.f32 %v1219, %v1424
      %v1426 = vpop.f32.mrf.mxu0
      %1427 = vdwg.mxu0
      %v1428 = vld [vmem:[%s620] sm:$0x1]
      %vm1429 = vcmp.gt.f32.partialorder %v1428, 0.0
      %v1430 = vsel %vm1429, 0.0, -1e+09
      %v1431 = vpack.c.bf16 %v722, %v722
      %v1432 = vpack.c.bf16 %v747, %v747
      %v1433 = vpack.c.bf16 %v772, %v772
      %v1434 = vpack.c.bf16 %v797, %v797
      %v1435 = vpack.c.bf16 %v822, %v822
      %v1436 = vpack.c.bf16 %v847, %v847
      %v1437 = vpack.c.bf16 %v872, %v872
      %v1438 = vpack.c.bf16 %v897, %v897
      %v1439 = vpack.c.bf16 %v986, %v986
      %v1440 = vpack.c.bf16 %v1011, %v1011
      %v1441 = vpack.c.bf16 %v1036, %v1036
      %v1442 = vpack.c.bf16 %v1061, %v1061
      %v1443 = vpack.c.bf16 %v1086, %v1086
      %v1444 = vpack.c.bf16 %v1111, %v1111
      %v1445 = vpack.c.bf16 %v1136, %v1136
      %v1446 = vpack.c.bf16 %v1161, %v1161
      %vm1447 = vcmask 31744
      %v1449 = vsel %vm1447, %v1431, 0
      %v1452 = vsel %vm1447, %v1439, 0
      %1454 = vmatpush.bf16.xpose.msra.mxu0 0
      %1455 = vmatpush.bf16.xpose.msra.mxu0 0
      %1456 = vmatpush.bf16.xpose.msra.mxu0 0
      %1457 = vmatpush.bf16.xpose.msra.mxu0 0
      %1458 = vmatpush.bf16.xpose.msra.mxu0 0
      %1459 = vmatpush.bf16.xpose.msra.mxu0 0
      %1460 = vmatpush.bf16.xpose.msra.mxu0 0
      %1461 = vmatpush.bf16.xpose.msra.mxu0 %v1452
      %1462 = vmatmul.bf16.gmra.mxu0 %v1449
      %v1463 = vpop.f32.mrf.mxu0
      %v1464 = vadd.f32 0.0, %v1463
      %v1465 = vpop.f32.mrf.mxu0
      %1466 = vdwg.mxu0
      %v1468 = vsel %vm1447, %v1432, 0
      %v1471 = vsel %vm1447, %v1440, 0
      %1473 = vmatpush.bf16.xpose.msra.mxu0 0
      %1474 = vmatpush.bf16.xpose.msra.mxu0 0
      %1475 = vmatpush.bf16.xpose.msra.mxu0 0
      %1476 = vmatpush.bf16.xpose.msra.mxu0 0
      %1477 = vmatpush.bf16.xpose.msra.mxu0 0
      %1478 = vmatpush.bf16.xpose.msra.mxu0 0
      %1479 = vmatpush.bf16.xpose.msra.mxu0 0
      %1480 = vmatpush.bf16.xpose.msra.mxu0 %v1471
      %1481 = vmatmul.bf16.gmra.mxu0 %v1468
      %v1482 = vpop.f32.mrf.mxu0
      %v1483 = vadd.f32 0.0, %v1482
      %v1484 = vpop.f32.mrf.mxu0
      %1485 = vdwg.mxu0
      %v1487 = vsel %vm1447, %v1433, 0
      %v1490 = vsel %vm1447, %v1441, 0
      %1492 = vmatpush.bf16.xpose.msra.mxu0 0
      %1493 = vmatpush.bf16.xpose.msra.mxu0 0
      %1494 = vmatpush.bf16.xpose.msra.mxu0 0
      %1495 = vmatpush.bf16.xpose.msra.mxu0 0
      %1496 = vmatpush.bf16.xpose.msra.mxu0 0
      %1497 = vmatpush.bf16.xpose.msra.mxu0 0
      %1498 = vmatpush.bf16.xpose.msra.mxu0 0
      %1499 = vmatpush.bf16.xpose.msra.mxu0 %v1490
      %1500 = vmatmul.bf16.gmra.mxu0 %v1487
      %v1501 = vpop.f32.mrf.mxu0
      %v1502 = vadd.f32 0.0, %v1501
      %v1503 = vpop.f32.mrf.mxu0
      %1504 = vdwg.mxu0
      %v1506 = vsel %vm1447, %v1434, 0
      %v1509 = vsel %vm1447, %v1442, 0
      %1511 = vmatpush.bf16.xpose.msra.mxu0 0
      %1512 = vmatpush.bf16.xpose.msra.mxu0 0
      %1513 = vmatpush.bf16.xpose.msra.mxu0 0
      %1514 = vmatpush.bf16.xpose.msra.mxu0 0
      %1515 = vmatpush.bf16.xpose.msra.mxu0 0
      %1516 = vmatpush.bf16.xpose.msra.mxu0 0
      %1517 = vmatpush.bf16.xpose.msra.mxu0 0
      %1518 = vmatpush.bf16.xpose.msra.mxu0 %v1509
      %1519 = vmatmul.bf16.gmra.mxu0 %v1506
      %v1520 = vpop.f32.mrf.mxu0
      %v1521 = vadd.f32 0.0, %v1520
      %v1522 = vpop.f32.mrf.mxu0
      %1523 = vdwg.mxu0
      %v1525 = vsel %vm1447, %v1435, 0
      %v1528 = vsel %vm1447, %v1443, 0
      %1530 = vmatpush.bf16.xpose.msra.mxu0 0
      %1531 = vmatpush.bf16.xpose.msra.mxu0 0
      %1532 = vmatpush.bf16.xpose.msra.mxu0 0
      %1533 = vmatpush.bf16.xpose.msra.mxu0 0
      %1534 = vmatpush.bf16.xpose.msra.mxu0 0
      %1535 = vmatpush.bf16.xpose.msra.mxu0 0
      %1536 = vmatpush.bf16.xpose.msra.mxu0 0
      %1537 = vmatpush.bf16.xpose.msra.mxu0 %v1528
      %1538 = vmatmul.bf16.gmra.mxu0 %v1525
      %v1539 = vpop.f32.mrf.mxu0
      %v1540 = vadd.f32 0.0, %v1539
      %v1541 = vpop.f32.mrf.mxu0
      %1542 = vdwg.mxu0
      %v1544 = vsel %vm1447, %v1436, 0
      %v1547 = vsel %vm1447, %v1444, 0
      %1549 = vmatpush.bf16.xpose.msra.mxu0 0
      %1550 = vmatpush.bf16.xpose.msra.mxu0 0
      %1551 = vmatpush.bf16.xpose.msra.mxu0 0
      %1552 = vmatpush.bf16.xpose.msra.mxu0 0
      %1553 = vmatpush.bf16.xpose.msra.mxu0 0
      %1554 = vmatpush.bf16.xpose.msra.mxu0 0
      %1555 = vmatpush.bf16.xpose.msra.mxu0 0
      %1556 = vmatpush.bf16.xpose.msra.mxu0 %v1547
      %1557 = vmatmul.bf16.gmra.mxu0 %v1544
      %v1558 = vpop.f32.mrf.mxu0
      %v1559 = vadd.f32 0.0, %v1558
      %v1560 = vpop.f32.mrf.mxu0
      %1561 = vdwg.mxu0
      %v1563 = vsel %vm1447, %v1437, 0
      %v1566 = vsel %vm1447, %v1445, 0
      %1568 = vmatpush.bf16.xpose.msra.mxu0 0
      %1569 = vmatpush.bf16.xpose.msra.mxu0 0
      %1570 = vmatpush.bf16.xpose.msra.mxu0 0
      %1571 = vmatpush.bf16.xpose.msra.mxu0 0
      %1572 = vmatpush.bf16.xpose.msra.mxu0 0
      %1573 = vmatpush.bf16.xpose.msra.mxu0 0
      %1574 = vmatpush.bf16.xpose.msra.mxu0 0
      %1575 = vmatpush.bf16.xpose.msra.mxu0 %v1566
      %1576 = vmatmul.bf16.gmra.mxu0 %v1563
      %v1577 = vpop.f32.mrf.mxu0
      %v1578 = vadd.f32 0.0, %v1577
      %v1579 = vpop.f32.mrf.mxu0
      %1580 = vdwg.mxu0
      %v1582 = vsel %vm1447, %v1438, 0
      %v1585 = vsel %vm1447, %v1446, 0
      %1587 = vmatpush.bf16.xpose.msra.mxu0 0
      %1588 = vmatpush.bf16.xpose.msra.mxu0 0
      %1589 = vmatpush.bf16.xpose.msra.mxu0 0
      %1590 = vmatpush.bf16.xpose.msra.mxu0 0
      %1591 = vmatpush.bf16.xpose.msra.mxu0 0
      %1592 = vmatpush.bf16.xpose.msra.mxu0 0
      %1593 = vmatpush.bf16.xpose.msra.mxu0 0
      %1594 = vmatpush.bf16.xpose.msra.mxu0 %v1585
      %1595 = vmatmul.bf16.gmra.mxu0 %v1582
      %v1596 = vpop.f32.mrf.mxu0
      %v1597 = vadd.f32 0.0, %v1596
      %v1598 = vpop.f32.mrf.mxu0
      %1599 = vdwg.mxu0
      %v1600 = vmul.f32 %v1464, 0.5
      %v1601 = vmul.f32 %v1483, 0.5
      %v1602 = vmul.f32 %v1502, 0.5
      %v1603 = vmul.f32 %v1521, 0.5
      %v1604 = vmul.f32 %v1540, 0.5
      %v1605 = vmul.f32 %v1559, 0.5
      %v1606 = vmul.f32 %v1578, 0.5
      %v1607 = vmul.f32 %v1597, 0.5
      %v1609 = vperm.slane %v1430, 0
      %v1611 = vadd.f32 %v1600, %v1609
      %v1612 = vadd.f32 %v1601, %v1609
      %v1613 = vadd.f32 %v1602, %v1609
      %v1614 = vadd.f32 %v1603, %v1609
      %v1615 = vadd.f32 %v1604, %v1609
      %v1616 = vadd.f32 %v1605, %v1609
      %v1617 = vadd.f32 %v1606, %v1609
      %v1618 = vadd.f32 %v1607, %v1609
      %vm1619 = vcmask 64512
      %v1620 = vsel %vm1619, %v1611, -inf
      %1621 = vmax.xlane.f32.xlu0 %v1620
      %v1622 = vpop.xlane.xlu0 %1621
      %v1623 = vsel %vm1619, %v1612, -inf
      %1624 = vmax.xlane.f32.xlu0 %v1623
      %v1625 = vpop.xlane.xlu0 %1624
      %v1626 = vsel %vm1619, %v1613, -inf
      %1627 = vmax.xlane.f32.xlu0 %v1626
      %v1628 = vpop.xlane.xlu0 %1627
      %v1629 = vsel %vm1619, %v1614, -inf
      %1630 = vmax.xlane.f32.xlu0 %v1629
      %v1631 = vpop.xlane.xlu0 %1630
      %v1632 = vsel %vm1619, %v1615, -inf
      %1633 = vmax.xlane.f32.xlu0 %v1632
      %v1634 = vpop.xlane.xlu0 %1633
      %v1635 = vsel %vm1619, %v1616, -inf
      %1636 = vmax.xlane.f32.xlu0 %v1635
      %v1637 = vpop.xlane.xlu0 %1636
      %v1638 = vsel %vm1619, %v1617, -inf
      %1639 = vmax.xlane.f32.xlu0 %v1638
      %v1640 = vpop.xlane.xlu0 %1639
      %v1641 = vsel %vm1619, %v1618, -inf
      %1642 = vmax.xlane.f32.xlu0 %v1641
      %v1643 = vpop.xlane.xlu0 %1642
      %v1644 = vsub.f32 %v1611, %v1622
      %v1645 = vsub.f32 %v1612, %v1625
      %v1646 = vsub.f32 %v1613, %v1628
      %v1647 = vsub.f32 %v1614, %v1631
      %v1648 = vsub.f32 %v1615, %v1634
      %v1649 = vsub.f32 %v1616, %v1637
      %v1650 = vsub.f32 %v1617, %v1640
      %v1651 = vsub.f32 %v1618, %v1643
      %v1652 = vmul.f32 %v1644, 1.442695
      %v1653 = vpow.pop %v1652
      %v1654 = vmul.f32 %v1645, 1.442695
      %v1655 = vpow.pop %v1654
      %v1656 = vmul.f32 %v1646, 1.442695
      %v1657 = vpow.pop %v1656
      %v1658 = vmul.f32 %v1647, 1.442695
      %v1659 = vpow.pop %v1658
      %v1660 = vmul.f32 %v1648, 1.442695
      %v1661 = vpow.pop %v1660
      %v1662 = vmul.f32 %v1649, 1.442695
      %v1663 = vpow.pop %v1662
      %v1664 = vmul.f32 %v1650, 1.442695
      %v1665 = vpow.pop %v1664
      %v1666 = vmul.f32 %v1651, 1.442695
      %v1667 = vpow.pop %v1666
      %v1668 = vsel %vm1619, %v1653, 0.0
      %1669 = vadd.xlane.f32.xlu0 %v1668
      %v1670 = vpop.xlane.xlu0 %1669
      %v1671 = vsel %vm1619, %v1655, 0.0
      %1672 = vadd.xlane.f32.xlu0 %v1671
      %v1673 = vpop.xlane.xlu0 %1672
      %v1674 = vsel %vm1619, %v1657, 0.0
      %1675 = vadd.xlane.f32.xlu0 %v1674
      %v1676 = vpop.xlane.xlu0 %1675
      %v1677 = vsel %vm1619, %v1659, 0.0
      %1678 = vadd.xlane.f32.xlu0 %v1677
      %v1679 = vpop.xlane.xlu0 %1678
      %v1680 = vsel %vm1619, %v1661, 0.0
      %1681 = vadd.xlane.f32.xlu0 %v1680
      %v1682 = vpop.xlane.xlu0 %1681
      %v1683 = vsel %vm1619, %v1663, 0.0
      %1684 = vadd.xlane.f32.xlu0 %v1683
      %v1685 = vpop.xlane.xlu0 %1684
      %v1686 = vsel %vm1619, %v1665, 0.0
      %1687 = vadd.xlane.f32.xlu0 %v1686
      %v1688 = vpop.xlane.xlu0 %1687
      %v1689 = vsel %vm1619, %v1667, 0.0
      %1690 = vadd.xlane.f32.xlu0 %v1689
      %v1691 = vpop.xlane.xlu0 %1690
      %v1692 = vrcp.pop %v1670
      %v1693 = vmul.f32 %v1670, %v1692
      %v1694 = vsub.f32 1.0, %v1693
      %v1695 = vmul.f32 %v1692, %v1694
      %v1696 = vadd.f32 %v1692, %v1695
      %vm1697 = vweird.f32 %v1670
      %vm1698 = vweird.f32 %v1692
      %vm1699 = vmor %vm1697, %vm1698
      %v1700 = vsel %vm1699, %v1692, %v1696
      %v1701 = vand.u32 2147483647, %v1670
      %vm1702 = vcmp.eq.f32.partialorder %v1701, 8.507059e+37
      %v1703 = vand.u32 %v1670, 2147483648
      %v1704 = vor.u32 1.1754944e-38, %v1703
      %v1705 = vsel %vm1702, %v1704, %v1700
      %v1706 = vmul.f32 %v1653, %v1705
      %v1707 = vrcp.pop %v1673
      %v1708 = vmul.f32 %v1673, %v1707
      %v1709 = vsub.f32 1.0, %v1708
      %v1710 = vmul.f32 %v1707, %v1709
      %v1711 = vadd.f32 %v1707, %v1710
      %vm1712 = vweird.f32 %v1673
      %vm1713 = vweird.f32 %v1707
      %vm1714 = vmor %vm1712, %vm1713
      %v1715 = vsel %vm1714, %v1707, %v1711
      %v1716 = vand.u32 2147483647, %v1673
      %vm1717 = vcmp.eq.f32.partialorder %v1716, 8.507059e+37
      %v1718 = vand.u32 %v1673, 2147483648
      %v1719 = vor.u32 1.1754944e-38, %v1718
      %v1720 = vsel %vm1717, %v1719, %v1715
      %v1721 = vmul.f32 %v1655, %v1720
      %v1722 = vrcp.pop %v1676
      %v1723 = vmul.f32 %v1676, %v1722
      %v1724 = vsub.f32 1.0, %v1723
      %v1725 = vmul.f32 %v1722, %v1724
      %v1726 = vadd.f32 %v1722, %v1725
      %vm1727 = vweird.f32 %v1676
      %vm1728 = vweird.f32 %v1722
      %vm1729 = vmor %vm1727, %vm1728
      %v1730 = vsel %vm1729, %v1722, %v1726
      %v1731 = vand.u32 2147483647, %v1676
      %vm1732 = vcmp.eq.f32.partialorder %v1731, 8.507059e+37
      %v1733 = vand.u32 %v1676, 2147483648
      %v1734 = vor.u32 1.1754944e-38, %v1733
      %v1735 = vsel %vm1732, %v1734, %v1730
      %v1736 = vmul.f32 %v1657, %v1735
      %v1737 = vrcp.pop %v1679
      %v1738 = vmul.f32 %v1679, %v1737
      %v1739 = vsub.f32 1.0, %v1738
      %v1740 = vmul.f32 %v1737, %v1739
      %v1741 = vadd.f32 %v1737, %v1740
      %vm1742 = vweird.f32 %v1679
      %vm1743 = vweird.f32 %v1737
      %vm1744 = vmor %vm1742, %vm1743
      %v1745 = vsel %vm1744, %v1737, %v1741
      %v1746 = vand.u32 2147483647, %v1679
      %vm1747 = vcmp.eq.f32.partialorder %v1746, 8.507059e+37
      %v1748 = vand.u32 %v1679, 2147483648
      %v1749 = vor.u32 1.1754944e-38, %v1748
      %v1750 = vsel %vm1747, %v1749, %v1745
      %v1751 = vmul.f32 %v1659, %v1750
      %v1752 = vrcp.pop %v1682
      %v1753 = vmul.f32 %v1682, %v1752
      %v1754 = vsub.f32 1.0, %v1753
      %v1755 = vmul.f32 %v1752, %v1754
      %v1756 = vadd.f32 %v1752, %v1755
      %vm1757 = vweird.f32 %v1682
      %vm1758 = vweird.f32 %v1752
      %vm1759 = vmor %vm1757, %vm1758
      %v1760 = vsel %vm1759, %v1752, %v1756
      %v1761 = vand.u32 2147483647, %v1682
      %vm1762 = vcmp.eq.f32.partialorder %v1761, 8.507059e+37
      %v1763 = vand.u32 %v1682, 2147483648
      %v1764 = vor.u32 1.1754944e-38, %v1763
      %v1765 = vsel %vm1762, %v1764, %v1760
      %v1766 = vmul.f32 %v1661, %v1765
      %v1767 = vrcp.pop %v1685
      %v1768 = vmul.f32 %v1685, %v1767
      %v1769 = vsub.f32 1.0, %v1768
      %v1770 = vmul.f32 %v1767, %v1769
      %v1771 = vadd.f32 %v1767, %v1770
      %vm1772 = vweird.f32 %v1685
      %vm1773 = vweird.f32 %v1767
      %vm1774 = vmor %vm1772, %vm1773
      %v1775 = vsel %vm1774, %v1767, %v1771
      %v1776 = vand.u32 2147483647, %v1685
      %vm1777 = vcmp.eq.f32.partialorder %v1776, 8.507059e+37
      %v1778 = vand.u32 %v1685, 2147483648
      %v1779 = vor.u32 1.1754944e-38, %v1778
      %v1780 = vsel %vm1777, %v1779, %v1775
      %v1781 = vmul.f32 %v1663, %v1780
      %v1782 = vrcp.pop %v1688
      %v1783 = vmul.f32 %v1688, %v1782
      %v1784 = vsub.f32 1.0, %v1783
      %v1785 = vmul.f32 %v1782, %v1784
      %v1786 = vadd.f32 %v1782, %v1785
      %vm1787 = vweird.f32 %v1688
      %vm1788 = vweird.f32 %v1782
      %vm1789 = vmor %vm1787, %vm1788
      %v1790 = vsel %vm1789, %v1782, %v1786
      %v1791 = vand.u32 2147483647, %v1688
      %vm1792 = vcmp.eq.f32.partialorder %v1791, 8.507059e+37
      %v1793 = vand.u32 %v1688, 2147483648
      %v1794 = vor.u32 1.1754944e-38, %v1793
      %v1795 = vsel %vm1792, %v1794, %v1790
      %v1796 = vmul.f32 %v1665, %v1795
      %v1797 = vrcp.pop %v1691
      %v1798 = vmul.f32 %v1691, %v1797
      %v1799 = vsub.f32 1.0, %v1798
      %v1800 = vmul.f32 %v1797, %v1799
      %v1801 = vadd.f32 %v1797, %v1800
      %vm1802 = vweird.f32 %v1691
      %vm1803 = vweird.f32 %v1797
      %vm1804 = vmor %vm1802, %vm1803
      %v1805 = vsel %vm1804, %v1797, %v1801
      %v1806 = vand.u32 2147483647, %v1691
      %vm1807 = vcmp.eq.f32.partialorder %v1806, 8.507059e+37
      %v1808 = vand.u32 %v1691, 2147483648
      %v1809 = vor.u32 1.1754944e-38, %v1808
      %v1810 = vsel %vm1807, %v1809, %v1805
      %v1811 = vmul.f32 %v1667, %v1810
      %v1812 = vpack.c.bf16 %v1706, %v1706
      %v1813 = vpack.c.bf16 %v1721, %v1721
      %v1814 = vpack.c.bf16 %v1736, %v1736
      %v1815 = vpack.c.bf16 %v1751, %v1751
      %v1816 = vpack.c.bf16 %v1766, %v1766
      %v1817 = vpack.c.bf16 %v1781, %v1781
      %v1818 = vpack.c.bf16 %v1796, %v1796
      %v1819 = vpack.c.bf16 %v1811, %v1811
      %v1820 = vpack.c.bf16 %v1250, %v1250
      %v1821 = vpack.c.bf16 %v1275, %v1275
      %v1822 = vpack.c.bf16 %v1300, %v1300
      %v1823 = vpack.c.bf16 %v1325, %v1325
      %v1824 = vpack.c.bf16 %v1350, %v1350
      %v1825 = vpack.c.bf16 %v1375, %v1375
      %v1826 = vpack.c.bf16 %v1400, %v1400
      %v1827 = vpack.c.bf16 %v1425, %v1425
      %v1829 = vsel %vm1619, %v1812, 0
      %vm1831 = vcmask 1043456
      %v1833 = vsel %vm1831, %v1820, 0
      %1835 = vmatpush.bf16.msra.mxu0 0
      %1836 = vmatpush.bf16.msra.mxu0 0
      %1837 = vmatpush.bf16.msra.mxu0 0
      %1838 = vmatpush.bf16.msra.mxu0 0
      %1839 = vmatpush.bf16.msra.mxu0 0
      %1840 = vmatpush.bf16.msra.mxu0 0
      %1841 = vmatpush.bf16.msra.mxu0 0
      %1842 = vmatpush.bf16.msra.mxu0 %v1833
      %1843 = vmatmul.bf16.gmra.mxu0 %v1829
      %v1844 = vpop.f32.mrf.mxu0
      %v1845 = vadd.f32 0.0, %v1844
      %v1846 = vpop.f32.mrf.mxu0
      %1847 = vdwg.mxu0
      %v1849 = vsel %vm1619, %v1813, 0
      %v1852 = vsel %vm1831, %v1821, 0
      %1854 = vmatpush.bf16.msra.mxu0 0
      %1855 = vmatpush.bf16.msra.mxu0 0
      %1856 = vmatpush.bf16.msra.mxu0 0
      %1857 = vmatpush.bf16.msra.mxu0 0
      %1858 = vmatpush.bf16.msra.mxu0 0
      %1859 = vmatpush.bf16.msra.mxu0 0
      %1860 = vmatpush.bf16.msra.mxu0 0
      %1861 = vmatpush.bf16.msra.mxu0 %v1852
      %1862 = vmatmul.bf16.gmra.mxu0 %v1849
      %v1863 = vpop.f32.mrf.mxu0
      %v1864 = vadd.f32 0.0, %v1863
      %v1865 = vpop.f32.mrf.mxu0
      %1866 = vdwg.mxu0
      %v1868 = vsel %vm1619, %v1814, 0
      %v1871 = vsel %vm1831, %v1822, 0
      %1873 = vmatpush.bf16.msra.mxu0 0
      %1874 = vmatpush.bf16.msra.mxu0 0
      %1875 = vmatpush.bf16.msra.mxu0 0
      %1876 = vmatpush.bf16.msra.mxu0 0
      %1877 = vmatpush.bf16.msra.mxu0 0
      %1878 = vmatpush.bf16.msra.mxu0 0
      %1879 = vmatpush.bf16.msra.mxu0 0
      %1880 = vmatpush.bf16.msra.mxu0 %v1871
      %1881 = vmatmul.bf16.gmra.mxu0 %v1868
      %v1882 = vpop.f32.mrf.mxu0
      %v1883 = vadd.f32 0.0, %v1882
      %v1884 = vpop.f32.mrf.mxu0
      %1885 = vdwg.mxu0
      %v1887 = vsel %vm1619, %v1815, 0
      %v1890 = vsel %vm1831, %v1823, 0
      %1892 = vmatpush.bf16.msra.mxu0 0
      %1893 = vmatpush.bf16.msra.mxu0 0
      %1894 = vmatpush.bf16.msra.mxu0 0
      %1895 = vmatpush.bf16.msra.mxu0 0
      %1896 = vmatpush.bf16.msra.mxu0 0
      %1897 = vmatpush.bf16.msra.mxu0 0
      %1898 = vmatpush.bf16.msra.mxu0 0
      %1899 = vmatpush.bf16.msra.mxu0 %v1890
      %1900 = vmatmul.bf16.gmra.mxu0 %v1887
      %v1901 = vpop.f32.mrf.mxu0
      %v1902 = vadd.f32 0.0, %v1901
      %v1903 = vpop.f32.mrf.mxu0
      %1904 = vdwg.mxu0
      %v1906 = vsel %vm1619, %v1816, 0
      %v1909 = vsel %vm1831, %v1824, 0
      %1911 = vmatpush.bf16.msra.mxu0 0
      %1912 = vmatpush.bf16.msra.mxu0 0
      %1913 = vmatpush.bf16.msra.mxu0 0
      %1914 = vmatpush.bf16.msra.mxu0 0
      %1915 = vmatpush.bf16.msra.mxu0 0
      %1916 = vmatpush.bf16.msra.mxu0 0
      %1917 = vmatpush.bf16.msra.mxu0 0
      %1918 = vmatpush.bf16.msra.mxu0 %v1909
      %1919 = vmatmul.bf16.gmra.mxu0 %v1906
      %v1920 = vpop.f32.mrf.mxu0
      %v1921 = vadd.f32 0.0, %v1920
      %v1922 = vpop.f32.mrf.mxu0
      %1923 = vdwg.mxu0
      %v1925 = vsel %vm1619, %v1817, 0
      %v1928 = vsel %vm1831, %v1825, 0
      %1930 = vmatpush.bf16.msra.mxu0 0
      %1931 = vmatpush.bf16.msra.mxu0 0
      %1932 = vmatpush.bf16.msra.mxu0 0
      %1933 = vmatpush.bf16.msra.mxu0 0
      %1934 = vmatpush.bf16.msra.mxu0 0
      %1935 = vmatpush.bf16.msra.mxu0 0
      %1936 = vmatpush.bf16.msra.mxu0 0
      %1937 = vmatpush.bf16.msra.mxu0 %v1928
      %1938 = vmatmul.bf16.gmra.mxu0 %v1925
      %v1939 = vpop.f32.mrf.mxu0
      %v1940 = vadd.f32 0.0, %v1939
      %v1941 = vpop.f32.mrf.mxu0
      %1942 = vdwg.mxu0
      %v1944 = vsel %vm1619, %v1818, 0
      %v1947 = vsel %vm1831, %v1826, 0
      %1949 = vmatpush.bf16.msra.mxu0 0
      %1950 = vmatpush.bf16.msra.mxu0 0
      %1951 = vmatpush.bf16.msra.mxu0 0
      %1952 = vmatpush.bf16.msra.mxu0 0
      %1953 = vmatpush.bf16.msra.mxu0 0
      %1954 = vmatpush.bf16.msra.mxu0 0
      %1955 = vmatpush.bf16.msra.mxu0 0
      %1956 = vmatpush.bf16.msra.mxu0 %v1947
      %1957 = vmatmul.bf16.gmra.mxu0 %v1944
      %v1958 = vpop.f32.mrf.mxu0
      %v1959 = vadd.f32 0.0, %v1958
      %v1960 = vpop.f32.mrf.mxu0
      %1961 = vdwg.mxu0
      %v1963 = vsel %vm1619, %v1819, 0
      %v1966 = vsel %vm1831, %v1827, 0
      %1968 = vmatpush.bf16.msra.mxu0 0
      %1969 = vmatpush.bf16.msra.mxu0 0
      %1970 = vmatpush.bf16.msra.mxu0 0
      %1971 = vmatpush.bf16.msra.mxu0 0
      %1972 = vmatpush.bf16.msra.mxu0 0
      %1973 = vmatpush.bf16.msra.mxu0 0
      %1974 = vmatpush.bf16.msra.mxu0 0
      %1975 = vmatpush.bf16.msra.mxu0 %v1966
      %1976 = vmatmul.bf16.gmra.mxu0 %v1963
      %v1977 = vpop.f32.mrf.mxu0
      %v1978 = vadd.f32 0.0, %v1977
      %v1979 = vpop.f32.mrf.mxu0
      %1980 = vdwg.mxu0
      %v1981 = vpack.c.bf16 %v1845, %v1845
      %v1982 = vpack.c.bf16 %v1864, %v1864
      %v1983 = vpack.c.bf16 %v1883, %v1883
      %v1984 = vpack.c.bf16 %v1902, %v1902
      %v1985 = vpack.c.bf16 %v1921, %v1921
      %v1986 = vpack.c.bf16 %v1940, %v1940
      %v1987 = vpack.c.bf16 %v1959, %v1959
      %v1988 = vpack.c.bf16 %v1978, %v1978
      %v1989 = vld [vmem:[%s9] sm:$0x3]
      %v1990 = vld [vmem:[%s9 + $0x2] sm:$0x3]
      %v1991 = vld [vmem:[%s9 + $0x4] sm:$0x3]
      %v1992 = vld [vmem:[%s9 + $0x6] sm:$0x3]
      %v1993 = vld [vmem:[%s9 + $0x8] sm:$0x3]
      %v1994 = vld [vmem:[%s9 + $0xa] sm:$0x3]
      %v1995 = vld [vmem:[%s9 + $0xc] sm:$0x3]
      %v1996 = vld [vmem:[%s9 + $0xe] sm:$0x3]
      %v1998 = vsel %vm1447, %v1981, 0
      %vm2000 = vcmask 1041408
      %v2002 = vsel %vm2000, %v1989, 0
      %2004 = vmatpush.bf16.msra.mxu0 0
      %2005 = vmatpush.bf16.msra.mxu0 0
      %2006 = vmatpush.bf16.msra.mxu0 0
      %2007 = vmatpush.bf16.msra.mxu0 0
      %2008 = vmatpush.bf16.msra.mxu0 0
      %2009 = vmatpush.bf16.msra.mxu0 0
      %2010 = vmatpush.bf16.msra.mxu0 0
      %2011 = vmatpush.bf16.msra.mxu0 %v2002
      %2012 = vmatmul.bf16.gmra.mxu0 %v1998
      %v2013 = vpop.f32.mrf.mxu0
      %v2014 = vadd.f32 0.0, %v2013
      %v2015 = vpop.f32.mrf.mxu0
      %2016 = vdwg.mxu0
      %v2018 = vsel %vm1447, %v1982, 0
      %v2021 = vsel %vm2000, %v1990, 0
      %2023 = vmatpush.bf16.msra.mxu0 0
      %2024 = vmatpush.bf16.msra.mxu0 0
      %2025 = vmatpush.bf16.msra.mxu0 0
      %2026 = vmatpush.bf16.msra.mxu0 0
      %2027 = vmatpush.bf16.msra.mxu0 0
      %2028 = vmatpush.bf16.msra.mxu0 0
      %2029 = vmatpush.bf16.msra.mxu0 0
      %2030 = vmatpush.bf16.msra.mxu0 %v2021
      %2031 = vmatmul.bf16.gmra.mxu0 %v2018
      %v2032 = vpop.f32.mrf.mxu0
      %v2033 = vadd.f32 0.0, %v2032
      %v2034 = vpop.f32.mrf.mxu0
      %2035 = vdwg.mxu0
      %v2037 = vsel %vm1447, %v1983, 0
      %v2040 = vsel %vm2000, %v1991, 0
      %2042 = vmatpush.bf16.msra.mxu0 0
      %2043 = vmatpush.bf16.msra.mxu0 0
      %2044 = vmatpush.bf16.msra.mxu0 0
      %2045 = vmatpush.bf16.msra.mxu0 0
      %2046 = vmatpush.bf16.msra.mxu0 0
      %2047 = vmatpush.bf16.msra.mxu0 0
      %2048 = vmatpush.bf16.msra.mxu0 0
      %2049 = vmatpush.bf16.msra.mxu0 %v2040
      %2050 = vmatmul.bf16.gmra.mxu0 %v2037
      %v2051 = vpop.f32.mrf.mxu0
      %v2052 = vadd.f32 0.0, %v2051
      %v2053 = vpop.f32.mrf.mxu0
      %2054 = vdwg.mxu0
      %v2056 = vsel %vm1447, %v1984, 0
      %v2059 = vsel %vm2000, %v1992, 0
      %2061 = vmatpush.bf16.msra.mxu0 0
      %2062 = vmatpush.bf16.msra.mxu0 0
      %2063 = vmatpush.bf16.msra.mxu0 0
      %2064 = vmatpush.bf16.msra.mxu0 0
      %2065 = vmatpush.bf16.msra.mxu0 0
      %2066 = vmatpush.bf16.msra.mxu0 0
      %2067 = vmatpush.bf16.msra.mxu0 0
      %2068 = vmatpush.bf16.msra.mxu0 %v2059
      %2069 = vmatmul.bf16.gmra.mxu0 %v2056
      %v2070 = vpop.f32.mrf.mxu0
      %v2071 = vadd.f32 0.0, %v2070
      %v2072 = vpop.f32.mrf.mxu0
      %2073 = vdwg.mxu0
      %v2075 = vsel %vm1447, %v1985, 0
      %v2078 = vsel %vm2000, %v1993, 0
      %2080 = vmatpush.bf16.msra.mxu0 0
      %2081 = vmatpush.bf16.msra.mxu0 0
      %2082 = vmatpush.bf16.msra.mxu0 0
      %2083 = vmatpush.bf16.msra.mxu0 0
      %2084 = vmatpush.bf16.msra.mxu0 0
      %2085 = vmatpush.bf16.msra.mxu0 0
      %2086 = vmatpush.bf16.msra.mxu0 0
      %2087 = vmatpush.bf16.msra.mxu0 %v2078
      %2088 = vmatmul.bf16.gmra.mxu0 %v2075
      %v2089 = vpop.f32.mrf.mxu0
      %v2090 = vadd.f32 0.0, %v2089
      %v2091 = vpop.f32.mrf.mxu0
      %2092 = vdwg.mxu0
      %v2094 = vsel %vm1447, %v1986, 0
      %v2097 = vsel %vm2000, %v1994, 0
      %2099 = vmatpush.bf16.msra.mxu0 0
      %2100 = vmatpush.bf16.msra.mxu0 0
      %2101 = vmatpush.bf16.msra.mxu0 0
      %2102 = vmatpush.bf16.msra.mxu0 0
      %2103 = vmatpush.bf16.msra.mxu0 0
      %2104 = vmatpush.bf16.msra.mxu0 0
      %2105 = vmatpush.bf16.msra.mxu0 0
      %2106 = vmatpush.bf16.msra.mxu0 %v2097
      %2107 = vmatmul.bf16.gmra.mxu0 %v2094
      %v2108 = vpop.f32.mrf.mxu0
      %v2109 = vadd.f32 0.0, %v2108
      %v2110 = vpop.f32.mrf.mxu0
      %2111 = vdwg.mxu0
      %v2113 = vsel %vm1447, %v1987, 0
      %v2116 = vsel %vm2000, %v1995, 0
      %2118 = vmatpush.bf16.msra.mxu0 0
      %2119 = vmatpush.bf16.msra.mxu0 0
      %2120 = vmatpush.bf16.msra.mxu0 0
      %2121 = vmatpush.bf16.msra.mxu0 0
      %2122 = vmatpush.bf16.msra.mxu0 0
      %2123 = vmatpush.bf16.msra.mxu0 0
      %2124 = vmatpush.bf16.msra.mxu0 0
      %2125 = vmatpush.bf16.msra.mxu0 %v2116
      %2126 = vmatmul.bf16.gmra.mxu0 %v2113
      %v2127 = vpop.f32.mrf.mxu0
      %v2128 = vadd.f32 0.0, %v2127
      %v2129 = vpop.f32.mrf.mxu0
      %2130 = vdwg.mxu0
      %v2132 = vsel %vm1447, %v1988, 0
      %v2135 = vsel %vm2000, %v1996, 0
      %2137 = vmatpush.bf16.msra.mxu0 0
      %2138 = vmatpush.bf16.msra.mxu0 0
      %2139 = vmatpush.bf16.msra.mxu0 0
      %2140 = vmatpush.bf16.msra.mxu0 0
      %2141 = vmatpush.bf16.msra.mxu0 0
      %2142 = vmatpush.bf16.msra.mxu0 0
      %2143 = vmatpush.bf16.msra.mxu0 0
      %2144 = vmatpush.bf16.msra.mxu0 %v2135
      %2145 = vmatmul.bf16.gmra.mxu0 %v2132
      %v2146 = vpop.f32.mrf.mxu0
      %v2147 = vadd.f32 0.0, %v2146
      %v2148 = vpop.f32.mrf.mxu0
      %2149 = vdwg.mxu0
      %v2150 = vsel %vm708, %v2014, 0.0
      %v2151 = vsel %vm708, %v2033, 0.0
      %v2152 = vadd.f32 %v2150, %v2151
      %v2153 = vsel %vm708, %v2052, 0.0
      %v2154 = vadd.f32 %v2152, %v2153
      %v2155 = vsel %vm708, %v2071, 0.0
      %v2156 = vadd.f32 %v2154, %v2155
      %v2157 = vsel %vm708, %v2090, 0.0
      %v2158 = vadd.f32 %v2156, %v2157
      %v2159 = vsel %vm708, %v2109, 0.0
      %v2160 = vadd.f32 %v2158, %v2159
      %v2161 = vsel %vm708, %v2128, 0.0
      %v2162 = vadd.f32 %v2160, %v2161
      %v2163 = vsel %vm708, %v2147, 0.0
      %v2164 = vadd.f32 %v2162, %v2163
      %v2165 = vld [vmem:[%s10] sm:$0x1]
      %v2167 = vperm.slane %v2165, 0
      %v2169 = vadd.f32 %v2164, %v2167
      %v2170 = vadd.f32 %v630, %v2169
      %v2171 = vld [vmem:[%s11] sm:$0x1]
      %v2172 = vld [vmem:[%s12] sm:$0x1]
      %v2173 = vsel %vm708, %v2170, 0.0
      %2174 = vadd.xlane.f32.xlu0 %v2173
      %v2175 = vpop.xlane.xlu0 %2174
      %v2176 = vrcp.pop 32.0
      %v2177 = vmul.f32 32.0, %v2176
      %v2178 = vsub.f32 1.0, %v2177
      %v2179 = vmul.f32 %v2176, %v2178
      %v2180 = vadd.f32 %v2176, %v2179
      %vm2181 = vweird.f32 %v2176
      %v2182 = vsel %vm2181, %v2176, %v2180
      %v2183 = vmul.f32 %v2175, %v2182
      %v2184 = vsub.f32 %v2170, %v2183
      %v2185 = vmul.f32 %v2184, %v2184
      %v2186 = vsel %vm708, %v2185, 0.0
      %2187 = vadd.xlane.f32.xlu0 %v2186
      %v2188 = vpop.xlane.xlu0 %2187
      %v2189 = vmul.f32 %v2188, %v2182
      %v2190 = vadd.f32 %v2189, 1e-05
      %v2191 = vrsqrt.pop %v2190
      %v2192 = vmul.f32 %v2191, %v2190
      %v2193 = vmul.f32 %v2192, %v2191
      %v2194 = vmul.f32 0.5, %v2193
      %v2195 = vsub.f32 1.5, %v2194
      %v2196 = vmul.f32 %v2191, %v2195
      %vm2197 = vweird.f32 %v2190
      %vm2198 = vweird.f32 %v2191
      %vm2199 = vmor %vm2197, %vm2198
      %v2200 = vsel %vm2199, %v2191, %v2196
      %v2201 = vmul.f32 %v2184, %v2200
      %v2203 = vperm.slane %v2171, 0
      %v2205 = vmul.f32 %v2201, %v2203
      %v2207 = vperm.slane %v2172, 0
      %v2209 = vadd.f32 %v2205, %v2207
      %v2210 = vpack.c.bf16 %v2209, %v2209
      %v2211 = vld [vmem:[%s13] sm:$0xf]
      %v2212 = vld [vmem:[%s13 + $0x4] sm:$0xf]
      %v2213 = vld [vmem:[%s13 + $0x8] sm:$0xf]
      %v2214 = vld [vmem:[%s13 + $0xc] sm:$0xf]
      %v2215 = vld [vmem:[%s14] sm:$0x1]
      %v2217 = vperm.slane %v2215, 0
      %v2223 = vunpack.c.l.b16 %v2211
      %v2224 = vunpack.c.l.b16 %v2212
      %v2225 = vunpack.c.l.b16 %v2213
      %v2226 = vunpack.c.l.b16 %v2214
      %v2227 = vpack.c.b16 %v2224, %v2223
      %v2228 = vpack.c.b16 %v2226, %v2225
      %v2232 = vsel %vm708, %v2210, 0
      %2234 = vmatpush.bf16.msra.mxu0 0
      %2235 = vmatpush.bf16.msra.mxu0 0
      %2236 = vmatpush.bf16.msra.mxu0 0
      %2237 = vmatpush.bf16.msra.mxu0 0
      %2238 = vmatpush.bf16.msra.mxu0 0
      %2239 = vmatpush.bf16.msra.mxu0 0
      %2240 = vmatpush.bf16.msra.mxu0 %v2228
      %2241 = vmatpush.bf16.msra.mxu0 %v2227
      %2242 = vmatmul.bf16.gmra.mxu0 %v2232
      %v2243 = vpop.f32.mrf.mxu0
      %v2244 = vadd.f32 %v2217, %v2243
      %v2245 = vpop.f32.mrf.mxu0
      %2246 = vdwg.mxu0
      %v2247 = vmul.f32 %v2244, %v2244
      %v2248 = vmul.f32 %v2244, %v2247
      %v2249 = vmul.f32 %v2248, 0.044715
      %v2250 = vadd.f32 %v2244, %v2249
      %v2251 = vmul.f32 %v2250, 0.7978846
      %v2252 = vtanh.pop %v2251
      %v2253 = vadd.f32 %v2252, 1.0
      %v2254 = vmul.f32 %v2253, 0.5
      %v2255 = vmul.f32 %v2244, %v2254
      %v2256 = vpack.c.bf16 %v2255, %v2255
      %v2257 = vld [vmem:[%s15] sm:$0xf]
      %v2258 = vld [vmem:[%s15 + $0x4] sm:$0xf]
      %v2259 = vld [vmem:[%s15 + $0x8] sm:$0xf]
      %v2260 = vld [vmem:[%s15 + $0xc] sm:$0xf]
      %v2261 = vld [vmem:[%s15 + $0x10] sm:$0xf]
      %v2262 = vld [vmem:[%s15 + $0x14] sm:$0xf]
      %v2263 = vld [vmem:[%s15 + $0x18] sm:$0xf]
      %v2264 = vld [vmem:[%s15 + $0x1c] sm:$0xf]
      %v2265 = vld [vmem:[%s16] sm:$0x1]
      %v2267 = vperm.slane %v2265, 0
      %v2277 = vunpack.c.l.b16 %v2257
      %v2278 = vunpack.c.l.b16 %v2258
      %v2279 = vunpack.c.l.b16 %v2259
      %v2280 = vunpack.c.l.b16 %v2260
      %v2281 = vunpack.c.l.b16 %v2261
      %v2282 = vunpack.c.l.b16 %v2262
      %v2283 = vunpack.c.l.b16 %v2263
      %v2284 = vunpack.c.l.b16 %v2264
      %v2285 = vpack.c.b16 %v2278, %v2277
      %v2286 = vpack.c.b16 %v2280, %v2279
      %v2287 = vpack.c.b16 %v2282, %v2281
      %v2288 = vpack.c.b16 %v2284, %v2283
      %vm2293 = vcmask 523264
      %v2295 = vsel %vm2293, %v2256, 0
      %2297 = vmatpush.bf16.msra.mxu0 0
      %2298 = vmatpush.bf16.msra.mxu0 0
      %2299 = vmatpush.bf16.msra.mxu0 0
      %2300 = vmatpush.bf16.msra.mxu0 0
      %2301 = vmatpush.bf16.msra.mxu0 %v2288
      %2302 = vmatpush.bf16.msra.mxu0 %v2287
      %2303 = vmatpush.bf16.msra.mxu0 %v2286
      %2304 = vmatpush.bf16.msra.mxu0 %v2285
      %2305 = vmatmul.bf16.gmra.mxu0 %v2295
      %v2306 = vpop.f32.mrf.mxu0
      %v2307 = vadd.f32 %v2267, %v2306
      %v2308 = vpop.f32.mrf.mxu0
      %2309 = vdwg.mxu0
      %v2310 = vadd.f32 %v2209, %v2307
      %v2311 = vld [vmem:[%s17] sm:$0x1]
      %v2312 = vld [vmem:[%s18] sm:$0x1]
      %v2313 = vsel %vm708, %v2310, 0.0
      %2314 = vadd.xlane.f32.xlu0 %v2313
      %v2315 = vpop.xlane.xlu0 %2314
      %v2316 = vmul.f32 %v2315, %v2182
      %v2317 = vsub.f32 %v2310, %v2316
      %v2318 = vmul.f32 %v2317, %v2317
      %v2319 = vsel %vm708, %v2318, 0.0
      %2320 = vadd.xlane.f32.xlu0 %v2319
      %v2321 = vpop.xlane.xlu0 %2320
      %v2322 = vmul.f32 %v2321, %v2182
      %v2323 = vadd.f32 %v2322, 1e-05
      %v2324 = vrsqrt.pop %v2323
      %v2325 = vmul.f32 %v2324, %v2323
      %v2326 = vmul.f32 %v2325, %v2324
      %v2327 = vmul.f32 0.5, %v2326
      %v2328 = vsub.f32 1.5, %v2327
      %v2329 = vmul.f32 %v2324, %v2328
      %vm2330 = vweird.f32 %v2323
      %vm2331 = vweird.f32 %v2324
      %vm2332 = vmor %vm2330, %vm2331
      %v2333 = vsel %vm2332, %v2324, %v2329
      %v2334 = vmul.f32 %v2317, %v2333
      %v2336 = vperm.slane %v2311, 0
      %v2338 = vmul.f32 %v2334, %v2336
      %v2340 = vperm.slane %v2312, 0
      %v2342 = vadd.f32 %v2338, %v2340
      %2343 = vst.msk [vmem:[%s628] sm:$0xff] %vm708, %v2342
      %p2344 = scmp.lt.s32.totalorder %s30, 1
      %s2345 = scalar_select %p2344, %s30, 1
      %s2346 = smul.addr %s2345, 8
      %s2347 = scalar_lea.vmem %s19, %s2346
      // Predicated region
      $region97: #{forward.5} parent=95 // pred_check
        %p2348 = pneg %p462
      $region98: #{forward.5} parent=95 // pred_check_branch
        %2350 = sbr.rel (%p2348) target = $region100
      $region99: #{forward.5} parent=95 // pred_region
        _
      $region100: #{forward.5} parent=95 // pred_fallthru
        _
    $region96: #{forward.5} parent=5 // pred_fallthru
      _
    %p2351 = scmp.le.s32.totalorder 2, %s25
    // Predicated region
    $region101: #{forward.5} parent=5 // pred_check
      %p2352 = pneg %p2351
    $region102: #{forward.5} parent=5 // pred_check_branch
      %2354 = sbr.rel (%p2352) target = $region104
    $region103: #{forward.5} parent=5 // pred_region
      %s2355 = ssub.s32 %s25, 2
      // Predicated region
      $region105: #{forward.5} parent=103 // pred_check
        %p2356 = pneg %p468
      $region106: #{forward.5} parent=103 // pred_check_branch
        %2358 = sbr.rel (%p2356) target = $region108
      $region107: #{forward.5} parent=103 // pred_region
        %p2359 = scmp.lt.s32.totalorder %s31, 1
        %s2360 = scalar_select %p2359, %s31, 1
        %s2361 = smul.addr %s2360, 8
        %s2362 = scalar_lea.vmem %s19, %s2361
      $region108: #{forward.5} parent=103 // pred_fallthru
        _
    $region104: #{forward.5} parent=5 // pred_fallthru
      _
  $region6: #{forward.5} parent=0 // loop_footer
    %s29 = sadd.s32 1, %s25
  $region7: #{forward.5} parent=0 // loop_footer_branch
    %24 = sbr.rel target = $region3
  $region8: #{forward.5} parent=0 // loop_exit
    _

// kernel: forward.6
$region0: #{forward.6}
  #allocation0 [shape = 'u32[]', space=smem, size = 0x4, offset = 0x4, fixed_abs, tag = 'smem constant byte address 0x4 - core index']
  #allocation1 [shape = 'u32[72,128]{1,0:T(1,128)}', space=vmem, size = 0x9000, scoped, tag = 'internal scratch']
  %s0 = inlined_call_operand.vmem [shape: f32[2,8,32], index: 0, kind: input, shape index: {}]
  %s1 = inlined_call_operand.vmem [shape: f32[2,1,8], index: 1, kind: input, shape index: {}]
  %s2 = inlined_call_operand.vmem [shape: f32[2,8,1], index: 2, kind: input, shape index: {}]
  %s3 = inlined_call_operand.vmem [shape: bf16[8,32,4], index: 3, kind: input, shape index: {}]
  %s4 = inlined_call_operand.vmem [shape: bf16[8,32,4], index: 4, kind: input, shape index: {}]
  %s5 = inlined_call_operand.vmem [shape: bf16[8,32,4], index: 5, kind: input, shape index: {}]
  %s6 = inlined_call_operand.vmem [shape: f32[8,1,4], index: 6, kind: input, shape index: {}]
  %s7 = inlined_call_operand.vmem [shape: f32[8,1,4], index: 7, kind: input, shape index: {}]
  %s8 = inlined_call_operand.vmem [shape: f32[8,1,4], index: 8, kind: input, shape index: {}]
  %s9 = inlined_call_operand.vmem [shape: bf16[8,4,32], index: 9, kind: input, shape index: {}]
  %s10 = inlined_call_operand.vmem [shape: f32[1,32], index: 10, kind: input, shape index: {}]
  %s11 = inlined_call_operand.vmem [shape: f32[1,32], index: 11, kind: input, shape index: {}]
  %s12 = inlined_call_operand.vmem [shape: f32[1,32], index: 12, kind: input, shape index: {}]
  %s13 = inlined_call_operand.vmem [shape: bf16[32,64], index: 13, kind: input, shape index: {}]
  %s14 = inlined_call_operand.vmem [shape: f32[1,64], index: 14, kind: input, shape index: {}]
  %s15 = inlined_call_operand.vmem [shape: bf16[64,32], index: 15, kind: input, shape index: {}]
  %s16 = inlined_call_operand.vmem [shape: f32[1,32], index: 16, kind: input, shape index: {}]
  %s17 = inlined_call_operand.vmem [shape: f32[1,32], index: 17, kind: input, shape index: {}]
  %s18 = inlined_call_operand.vmem [shape: f32[1,32], index: 18, kind: input, shape index: {}]
  %s19 = inlined_call_operand.vmem [shape: f32[2,8,32], index: 19, kind: output, shape index: {}]
  %s20 = sld [smem:[#allocation0]]
  $region109: #{forward.6} parent=0
    _
  %s22 = ssub.s32 1, %s20
  %s23 = scalar_select 0, %s22, %s20
  loop: start=0, step=1, limit=4
  $region2: #{forward.6} parent=0 // loop_pre_header
    _
  $region3: #{forward.6} parent=0 // loop_header
    %s25 = sphi 0, %s29
    %p26 = scmp.ge.s32.totalorder %s25, 4
    %s35 = sphi 0, %s37
    %s38 = sphi 0, %s35
    %s39 = sphi 0, %s38
    %s55 = sphi 0, %s39
    %s61 = sphi 0, %s63
    %s64 = sphi 0, %s61
    %s65 = sphi 0, %s64
    %s81 = sphi 0, %s65
    %s87 = sphi 0, %s89
    %s90 = sphi 0, %s87
    %s91 = sphi 0, %s90
    %s107 = sphi 0, %s91
    %s111 = sphi 0, %s111
    %s113 = sphi 0, %s111
    %s114 = sphi 0, %s113
    %s128 = sphi 0, %s114
    %s132 = sphi 0, %s132
    %s134 = sphi 0, %s132
    %s135 = sphi 0, %s134
    %s149 = sphi 0, %s135
    %s153 = sphi 0, %s153
    %s155 = sphi 0, %s153
    %s156 = sphi 0, %s155
    %s170 = sphi 0, %s156
    %s174 = sphi 0, %s174
    %s176 = sphi 0, %s174
    %s177 = sphi 0, %s176
    %s191 = sphi 0, %s177
    %s195 = sphi 0, %s195
    %s197 = sphi 0, %s195
    %s198 = sphi 0, %s197
    %s212 = sphi 0, %s198
    %s216 = sphi 0, %s216
    %s218 = sphi 0, %s216
    %s219 = sphi 0, %s218
    %s233 = sphi 0, %s219
    %s237 = sphi 0, %s237
    %s239 = sphi 0, %s237
    %s240 = sphi 0, %s239
    %s254 = sphi 0, %s240
    %s258 = sphi 0, %s258
    %s260 = sphi 0, %s258
    %s261 = sphi 0, %s260
    %s275 = sphi 0, %s261
    %s279 = sphi 0, %s279
    %s281 = sphi 0, %s279
    %s282 = sphi 0, %s281
    %s296 = sphi 0, %s282
    %s300 = sphi 0, %s300
    %s302 = sphi 0, %s300
    %s303 = sphi 0, %s302
    %s317 = sphi 0, %s303
    %s321 = sphi 0, %s321
    %s323 = sphi 0, %s321
    %s324 = sphi 0, %s323
    %s338 = sphi 0, %s324
    %s342 = sphi 0, %s342
    %s344 = sphi 0, %s342
    %s345 = sphi 0, %s344
    %s359 = sphi 0, %s345
    %s363 = sphi 0, %s363
    %s365 = sphi 0, %s363
    %s366 = sphi 0, %s365
    %s380 = sphi 0, %s366
    %s384 = sphi 0, %s384
    %s386 = sphi 0, %s384
    %s387 = sphi 0, %s386
    %s401 = sphi 0, %s387
    %s405 = sphi 0, %s405
    %s407 = sphi 0, %s405
    %s408 = sphi 0, %s407
    %s422 = sphi 0, %s408
    %s426 = sphi 0, %s426
    %s428 = sphi 0, %s426
    %s429 = sphi 0, %s428
    %s443 = sphi 0, %s429
    %s449 = sphi 0, %s451
    %s452 = sphi 0, %s449
    %s453 = sphi 0, %s452
    %s469 = sphi 0, %s453
  $region4: #{forward.6} parent=0 // loop_header_branch
    %28 = sbr.rel (%p26) target = $region8
  $region5: #{forward.6} parent=0 // loop_body
    %s30 = ssub.s32 %s25, 1
    %s31 = ssub.s32 %s25, 2
    %s32 = sadd.s32 %s25, 1
    %s33 = ssub.s32 %s25, %s32
    %p34 = scmp.eq.s32.totalorder %s33, 0
    %s36 = sadd.s32 %s35, 1
    %s37 = scalar_select %p34, %s35, %s36
    %p40 = pneg %p34
    %p41 = scmp.eq.s32.totalorder %s25, 1
    %p42 = por %p40, %p41
    %p43 = scmp.ne.s32.totalorder %s35, %s38
    %p44 = scmp.eq.s32.totalorder %s25, 0
    %p45 = por %p43, %p44
    %p46 = scmp.ne.s32.totalorder %s35, %s38
    %p47 = scmp.eq.s32.totalorder %s30, 1
    %p48 = por %p46, %p47
    %p49 = scmp.ne.s32.totalorder %s38, %s39
    %p50 = scmp.eq.s32.totalorder %s30, 0
    %p51 = por %p49, %p50
    %p52 = scmp.ne.s32.totalorder %s38, %s39
    %p53 = scmp.eq.s32.totalorder %s31, 1
    %p54 = por %p52, %p53
    %p56 = scmp.ne.s32.totalorder %s39, %s55
    %p57 = scmp.eq.s32.totalorder %s31, 0
    %p58 = por %p56, %p57
    %s59 = ssub.s32 %s25, %s32
    %p60 = scmp.eq.s32.totalorder %s59, 0
    %s62 = sadd.s32 %s61, 1
    %s63 = scalar_select %p60, %s61, %s62
    %p66 = pneg %p60
    %p67 = scmp.eq.s32.totalorder %s25, 1
    %p68 = por %p66, %p67
    %p69 = scmp.ne.s32.totalorder %s61, %s64
    %p70 = scmp.eq.s32.totalorder %s25, 0
    %p71 = por %p69, %p70
    %p72 = scmp.ne.s32.totalorder %s61, %s64
    %p73 = scmp.eq.s32.totalorder %s30, 1
    %p74 = por %p72, %p73
    %p75 = scmp.ne.s32.totalorder %s64, %s65
    %p76 = scmp.eq.s32.totalorder %s30, 0
    %p77 = por %p75, %p76
    %p78 = scmp.ne.s32.totalorder %s64, %s65
    %p79 = scmp.eq.s32.totalorder %s31, 1
    %p80 = por %p78, %p79
    %p82 = scmp.ne.s32.totalorder %s65, %s81
    %p83 = scmp.eq.s32.totalorder %s31, 0
    %p84 = por %p82, %p83
    %s85 = ssub.s32 %s25, %s32
    %p86 = scmp.eq.s32.totalorder %s85, 0
    %s88 = sadd.s32 %s87, 1
    %s89 = scalar_select %p86, %s87, %s88
    %p92 = pneg %p86
    %p93 = scmp.eq.s32.totalorder %s25, 1
    %p94 = por %p92, %p93
    %p95 = scmp.ne.s32.totalorder %s87, %s90
    %p96 = scmp.eq.s32.totalorder %s25, 0
    %p97 = por %p95, %p96
    %p98 = scmp.ne.s32.totalorder %s87, %s90
    %p99 = scmp.eq.s32.totalorder %s30, 1
    %p100 = por %p98, %p99
    %p101 = scmp.ne.s32.totalorder %s90, %s91
    %p102 = scmp.eq.s32.totalorder %s30, 0
    %p103 = por %p101, %p102
    %p104 = scmp.ne.s32.totalorder %s90, %s91
    %p105 = scmp.eq.s32.totalorder %s31, 1
    %p106 = por %p104, %p105
    %p108 = scmp.ne.s32.totalorder %s91, %s107
    %p109 = scmp.eq.s32.totalorder %s31, 0
    %p110 = por %p108, %p109
    %s112 = sadd.s32 %s111, 1
    %p115 = scmp.eq.s32.totalorder %s25, 1
    %p116 = scmp.ne.s32.totalorder %s111, %s113
    %p117 = scmp.eq.s32.totalorder %s25, 0
    %p118 = por %p116, %p117
    %p119 = scmp.ne.s32.totalorder %s111, %s113
    %p120 = scmp.eq.s32.totalorder %s30, 1
    %p121 = por %p119, %p120
    %p122 = scmp.ne.s32.totalorder %s113, %s114
    %p123 = scmp.eq.s32.totalorder %s30, 0
    %p124 = por %p122, %p123
    %p125 = scmp.ne.s32.totalorder %s113, %s114
    %p126 = scmp.eq.s32.totalorder %s31, 1
    %p127 = por %p125, %p126
    %p129 = scmp.ne.s32.totalorder %s114, %s128
    %p130 = scmp.eq.s32.totalorder %s31, 0
    %p131 = por %p129, %p130
    %s133 = sadd.s32 %s132, 1
    %p136 = scmp.eq.s32.totalorder %s25, 1
    %p137 = scmp.ne.s32.totalorder %s132, %s134
    %p138 = scmp.eq.s32.totalorder %s25, 0
    %p139 = por %p137, %p138
    %p140 = scmp.ne.s32.totalorder %s132, %s134
    %p141 = scmp.eq.s32.totalorder %s30, 1
    %p142 = por %p140, %p141
    %p143 = scmp.ne.s32.totalorder %s134, %s135
    %p144 = scmp.eq.s32.totalorder %s30, 0
    %p145 = por %p143, %p144
    %p146 = scmp.ne.s32.totalorder %s134, %s135
    %p147 = scmp.eq.s32.totalorder %s31, 1
    %p148 = por %p146, %p147
    %p150 = scmp.ne.s32.totalorder %s135, %s149
    %p151 = scmp.eq.s32.totalorder %s31, 0
    %p152 = por %p150, %p151
    %s154 = sadd.s32 %s153, 1
    %p157 = scmp.eq.s32.totalorder %s25, 1
    %p158 = scmp.ne.s32.totalorder %s153, %s155
    %p159 = scmp.eq.s32.totalorder %s25, 0
    %p160 = por %p158, %p159
    %p161 = scmp.ne.s32.totalorder %s153, %s155
    %p162 = scmp.eq.s32.totalorder %s30, 1
    %p163 = por %p161, %p162
    %p164 = scmp.ne.s32.totalorder %s155, %s156
    %p165 = scmp.eq.s32.totalorder %s30, 0
    %p166 = por %p164, %p165
    %p167 = scmp.ne.s32.totalorder %s155, %s156
    %p168 = scmp.eq.s32.totalorder %s31, 1
    %p169 = por %p167, %p168
    %p171 = scmp.ne.s32.totalorder %s156, %s170
    %p172 = scmp.eq.s32.totalorder %s31, 0
    %p173 = por %p171, %p172
    %s175 = sadd.s32 %s174, 1
    %p178 = scmp.eq.s32.totalorder %s25, 1
    %p179 = scmp.ne.s32.totalorder %s174, %s176
    %p180 = scmp.eq.s32.totalorder %s25, 0
    %p181 = por %p179, %p180
    %p182 = scmp.ne.s32.totalorder %s174, %s176
    %p183 = scmp.eq.s32.totalorder %s30, 1
    %p184 = por %p182, %p183
    %p185 = scmp.ne.s32.totalorder %s176, %s177
    %p186 = scmp.eq.s32.totalorder %s30, 0
    %p187 = por %p185, %p186
    %p188 = scmp.ne.s32.totalorder %s176, %s177
    %p189 = scmp.eq.s32.totalorder %s31, 1
    %p190 = por %p188, %p189
    %p192 = scmp.ne.s32.totalorder %s177, %s191
    %p193 = scmp.eq.s32.totalorder %s31, 0
    %p194 = por %p192, %p193
    %s196 = sadd.s32 %s195, 1
    %p199 = scmp.eq.s32.totalorder %s25, 1
    %p200 = scmp.ne.s32.totalorder %s195, %s197
    %p201 = scmp.eq.s32.totalorder %s25, 0
    %p202 = por %p200, %p201
    %p203 = scmp.ne.s32.totalorder %s195, %s197
    %p204 = scmp.eq.s32.totalorder %s30, 1
    %p205 = por %p203, %p204
    %p206 = scmp.ne.s32.totalorder %s197, %s198
    %p207 = scmp.eq.s32.totalorder %s30, 0
    %p208 = por %p206, %p207
    %p209 = scmp.ne.s32.totalorder %s197, %s198
    %p210 = scmp.eq.s32.totalorder %s31, 1
    %p211 = por %p209, %p210
    %p213 = scmp.ne.s32.totalorder %s198, %s212
    %p214 = scmp.eq.s32.totalorder %s31, 0
    %p215 = por %p213, %p214
    %s217 = sadd.s32 %s216, 1
    %p220 = scmp.eq.s32.totalorder %s25, 1
    %p221 = scmp.ne.s32.totalorder %s216, %s218
    %p222 = scmp.eq.s32.totalorder %s25, 0
    %p223 = por %p221, %p222
    %p224 = scmp.ne.s32.totalorder %s216, %s218
    %p225 = scmp.eq.s32.totalorder %s30, 1
    %p226 = por %p224, %p225
    %p227 = scmp.ne.s32.totalorder %s218, %s219
    %p228 = scmp.eq.s32.totalorder %s30, 0
    %p229 = por %p227, %p228
    %p230 = scmp.ne.s32.totalorder %s218, %s219
    %p231 = scmp.eq.s32.totalorder %s31, 1
    %p232 = por %p230, %p231
    %p234 = scmp.ne.s32.totalorder %s219, %s233
    %p235 = scmp.eq.s32.totalorder %s31, 0
    %p236 = por %p234, %p235
    %s238 = sadd.s32 %s237, 1
    %p241 = scmp.eq.s32.totalorder %s25, 1
    %p242 = scmp.ne.s32.totalorder %s237, %s239
    %p243 = scmp.eq.s32.totalorder %s25, 0
    %p244 = por %p242, %p243
    %p245 = scmp.ne.s32.totalorder %s237, %s239
    %p246 = scmp.eq.s32.totalorder %s30, 1
    %p247 = por %p245, %p246
    %p248 = scmp.ne.s32.totalorder %s239, %s240
    %p249 = scmp.eq.s32.totalorder %s30, 0
    %p250 = por %p248, %p249
    %p251 = scmp.ne.s32.totalorder %s239, %s240
    %p252 = scmp.eq.s32.totalorder %s31, 1
    %p253 = por %p251, %p252
    %p255 = scmp.ne.s32.totalorder %s240, %s254
    %p256 = scmp.eq.s32.totalorder %s31, 0
    %p257 = por %p255, %p256
    %s259 = sadd.s32 %s258, 1
    %p262 = scmp.eq.s32.totalorder %s25, 1
    %p263 = scmp.ne.s32.totalorder %s258, %s260
    %p264 = scmp.eq.s32.totalorder %s25, 0
    %p265 = por %p263, %p264
    %p266 = scmp.ne.s32.totalorder %s258, %s260
    %p267 = scmp.eq.s32.totalorder %s30, 1
    %p268 = por %p266, %p267
    %p269 = scmp.ne.s32.totalorder %s260, %s261
    %p270 = scmp.eq.s32.totalorder %s30, 0
    %p271 = por %p269, %p270
    %p272 = scmp.ne.s32.totalorder %s260, %s261
    %p273 = scmp.eq.s32.totalorder %s31, 1
    %p274 = por %p272, %p273
    %p276 = scmp.ne.s32.totalorder %s261, %s275
    %p277 = scmp.eq.s32.totalorder %s31, 0
    %p278 = por %p276, %p277
    %s280 = sadd.s32 %s279, 1
    %p283 = scmp.eq.s32.totalorder %s25, 1
    %p284 = scmp.ne.s32.totalorder %s279, %s281
    %p285 = scmp.eq.s32.totalorder %s25, 0
    %p286 = por %p284, %p285
    %p287 = scmp.ne.s32.totalorder %s279, %s281
    %p288 = scmp.eq.s32.totalorder %s30, 1
    %p289 = por %p287, %p288
    %p290 = scmp.ne.s32.totalorder %s281, %s282
    %p291 = scmp.eq.s32.totalorder %s30, 0
    %p292 = por %p290, %p291
    %p293 = scmp.ne.s32.totalorder %s281, %s282
    %p294 = scmp.eq.s32.totalorder %s31, 1
    %p295 = por %p293, %p294
    %p297 = scmp.ne.s32.totalorder %s282, %s296
    %p298 = scmp.eq.s32.totalorder %s31, 0
    %p299 = por %p297, %p298
    %s301 = sadd.s32 %s300, 1
    %p304 = scmp.eq.s32.totalorder %s25, 1
    %p305 = scmp.ne.s32.totalorder %s300, %s302
    %p306 = scmp.eq.s32.totalorder %s25, 0
    %p307 = por %p305, %p306
    %p308 = scmp.ne.s32.totalorder %s300, %s302
    %p309 = scmp.eq.s32.totalorder %s30, 1
    %p310 = por %p308, %p309
    %p311 = scmp.ne.s32.totalorder %s302, %s303
    %p312 = scmp.eq.s32.totalorder %s30, 0
    %p313 = por %p311, %p312
    %p314 = scmp.ne.s32.totalorder %s302, %s303
    %p315 = scmp.eq.s32.totalorder %s31, 1
    %p316 = por %p314, %p315
    %p318 = scmp.ne.s32.totalorder %s303, %s317
    %p319 = scmp.eq.s32.totalorder %s31, 0
    %p320 = por %p318, %p319
    %s322 = sadd.s32 %s321, 1
    %p325 = scmp.eq.s32.totalorder %s25, 1
    %p326 = scmp.ne.s32.totalorder %s321, %s323
    %p327 = scmp.eq.s32.totalorder %s25, 0
    %p328 = por %p326, %p327
    %p329 = scmp.ne.s32.totalorder %s321, %s323
    %p330 = scmp.eq.s32.totalorder %s30, 1
    %p331 = por %p329, %p330
    %p332 = scmp.ne.s32.totalorder %s323, %s324
    %p333 = scmp.eq.s32.totalorder %s30, 0
    %p334 = por %p332, %p333
    %p335 = scmp.ne.s32.totalorder %s323, %s324
    %p336 = scmp.eq.s32.totalorder %s31, 1
    %p337 = por %p335, %p336
    %p339 = scmp.ne.s32.totalorder %s324, %s338
    %p340 = scmp.eq.s32.totalorder %s31, 0
    %p341 = por %p339, %p340
    %s343 = sadd.s32 %s342, 1
    %p346 = scmp.eq.s32.totalorder %s25, 1
    %p347 = scmp.ne.s32.totalorder %s342, %s344
    %p348 = scmp.eq.s32.totalorder %s25, 0
    %p349 = por %p347, %p348
    %p350 = scmp.ne.s32.totalorder %s342, %s344
    %p351 = scmp.eq.s32.totalorder %s30, 1
    %p352 = por %p350, %p351
    %p353 = scmp.ne.s32.totalorder %s344, %s345
    %p354 = scmp.eq.s32.totalorder %s30, 0
    %p355 = por %p353, %p354
    %p356 = scmp.ne.s32.totalorder %s344, %s345
    %p357 = scmp.eq.s32.totalorder %s31, 1
    %p358 = por %p356, %p357
    %p360 = scmp.ne.s32.totalorder %s345, %s359
    %p361 = scmp.eq.s32.totalorder %s31, 0
    %p362 = por %p360, %p361
    %s364 = sadd.s32 %s363, 1
    %p367 = scmp.eq.s32.totalorder %s25, 1
    %p368 = scmp.ne.s32.totalorder %s363, %s365
    %p369 = scmp.eq.s32.totalorder %s25, 0
    %p370 = por %p368, %p369
    %p371 = scmp.ne.s32.totalorder %s363, %s365
    %p372 = scmp.eq.s32.totalorder %s30, 1
    %p373 = por %p371, %p372
    %p374 = scmp.ne.s32.totalorder %s365, %s366
    %p375 = scmp.eq.s32.totalorder %s30, 0
    %p376 = por %p374, %p375
    %p377 = scmp.ne.s32.totalorder %s365, %s366
    %p378 = scmp.eq.s32.totalorder %s31, 1
    %p379 = por %p377, %p378
    %p381 = scmp.ne.s32.totalorder %s366, %s380
    %p382 = scmp.eq.s32.totalorder %s31, 0
    %p383 = por %p381, %p382
    %s385 = sadd.s32 %s384, 1
    %p388 = scmp.eq.s32.totalorder %s25, 1
    %p389 = scmp.ne.s32.totalorder %s384, %s386
    %p390 = scmp.eq.s32.totalorder %s25, 0
    %p391 = por %p389, %p390
    %p392 = scmp.ne.s32.totalorder %s384, %s386
    %p393 = scmp.eq.s32.totalorder %s30, 1
    %p394 = por %p392, %p393
    %p395 = scmp.ne.s32.totalorder %s386, %s387
    %p396 = scmp.eq.s32.totalorder %s30, 0
    %p397 = por %p395, %p396
    %p398 = scmp.ne.s32.totalorder %s386, %s387
    %p399 = scmp.eq.s32.totalorder %s31, 1
    %p400 = por %p398, %p399
    %p402 = scmp.ne.s32.totalorder %s387, %s401
    %p403 = scmp.eq.s32.totalorder %s31, 0
    %p404 = por %p402, %p403
    %s406 = sadd.s32 %s405, 1
    %p409 = scmp.eq.s32.totalorder %s25, 1
    %p410 = scmp.ne.s32.totalorder %s405, %s407
    %p411 = scmp.eq.s32.totalorder %s25, 0
    %p412 = por %p410, %p411
    %p413 = scmp.ne.s32.totalorder %s405, %s407
    %p414 = scmp.eq.s32.totalorder %s30, 1
    %p415 = por %p413, %p414
    %p416 = scmp.ne.s32.totalorder %s407, %s408
    %p417 = scmp.eq.s32.totalorder %s30, 0
    %p418 = por %p416, %p417
    %p419 = scmp.ne.s32.totalorder %s407, %s408
    %p420 = scmp.eq.s32.totalorder %s31, 1
    %p421 = por %p419, %p420
    %p423 = scmp.ne.s32.totalorder %s408, %s422
    %p424 = scmp.eq.s32.totalorder %s31, 0
    %p425 = por %p423, %p424
    %s427 = sadd.s32 %s426, 1
    %p430 = scmp.eq.s32.totalorder %s25, 1
    %p431 = scmp.ne.s32.totalorder %s426, %s428
    %p432 = scmp.eq.s32.totalorder %s25, 0
    %p433 = por %p431, %p432
    %p434 = scmp.ne.s32.totalorder %s426, %s428
    %p435 = scmp.eq.s32.totalorder %s30, 1
    %p436 = por %p434, %p435
    %p437 = scmp.ne.s32.totalorder %s428, %s429
    %p438 = scmp.eq.s32.totalorder %s30, 0
    %p439 = por %p437, %p438
    %p440 = scmp.ne.s32.totalorder %s428, %s429
    %p441 = scmp.eq.s32.totalorder %s31, 1
    %p442 = por %p440, %p441
    %p444 = scmp.ne.s32.totalorder %s429, %s443
    %p445 = scmp.eq.s32.totalorder %s31, 0
    %p446 = por %p444, %p445
    %s447 = ssub.s32 %s25, %s32
    %p448 = scmp.eq.s32.totalorder %s447, 0
    %s450 = sadd.s32 %s449, 1
    %s451 = scalar_select %p448, %s449, %s450
    %p454 = pneg %p448
    %p455 = scmp.eq.s32.totalorder %s25, 1
    %p456 = por %p454, %p455
    %p457 = scmp.ne.s32.totalorder %s449, %s452
    %p458 = scmp.eq.s32.totalorder %s25, 0
    %p459 = por %p457, %p458
    %p460 = scmp.ne.s32.totalorder %s449, %s452
    %p461 = scmp.eq.s32.totalorder %s30, 1
    %p462 = por %p460, %p461
    %p463 = scmp.ne.s32.totalorder %s452, %s453
    %p464 = scmp.eq.s32.totalorder %s30, 0
    %p465 = por %p463, %p464
    %p466 = scmp.ne.s32.totalorder %s452, %s453
    %p467 = scmp.eq.s32.totalorder %s31, 1
    %p468 = por %p466, %p467
    %p470 = scmp.ne.s32.totalorder %s453, %s469
    %p471 = scmp.eq.s32.totalorder %s31, 0
    %p472 = por %p470, %p471
    %p473 = scmp.le.s32.totalorder 1, %s25
    %p474 = scmp.lt.s32.totalorder %s25, 3
    %p475 = pnand %p473, %p474
    %p476 = pneg %p475
    // Predicated region
    $region9: #{forward.6} parent=5 // pred_check
      _
    $region10: #{forward.6} parent=5 // pred_check_branch
      %478 = sbr.rel (%p475) target = $region12
    $region11: #{forward.6} parent=5 // pred_region
      %s479 = ssub.s32 %s25, 1
      // Predicated region
      $region13: #{forward.6} parent=11 // pred_check
        %p480 = pneg %p124
      $region14: #{forward.6} parent=11 // pred_check_branch
        %482 = sbr.rel (%p480) target = $region16
      $region15: #{forward.6} parent=11 // pred_region
        _
      $region16: #{forward.6} parent=11 // pred_fallthru
        _
      // Predicated region
      $region17: #{forward.6} parent=11 // pred_check
        %p483 = pneg %p145
      $region18: #{forward.6} parent=11 // pred_check_branch
        %485 = sbr.rel (%p483) target = $region20
      $region19: #{forward.6} parent=11 // pred_region
        _
      $region20: #{forward.6} parent=11 // pred_fallthru
        _
      // Predicated region
      $region21: #{forward.6} parent=11 // pred_check
        %p486 = pneg %p166
      $region22: #{forward.6} parent=11 // pred_check_branch
        %488 = sbr.rel (%p486) target = $region24
      $region23: #{forward.6} parent=11 // pred_region
        _
      $region24: #{forward.6} parent=11 // pred_fallthru
        _
      // Predicated region
      $region25: #{forward.6} parent=11 // pred_check
        %p489 = pneg %p187
      $region26: #{forward.6} parent=11 // pred_check_branch
        %491 = sbr.rel (%p489) target = $region28
      $region27: #{forward.6} parent=11 // pred_region
        _
      $region28: #{forward.6} parent=11 // pred_fallthru
        _
      // Predicated region
      $region29: #{forward.6} parent=11 // pred_check
        %p492 = pneg %p208
      $region30: #{forward.6} parent=11 // pred_check_branch
        %494 = sbr.rel (%p492) target = $region32
      $region31: #{forward.6} parent=11 // pred_region
        _
      $region32: #{forward.6} parent=11 // pred_fallthru
        _
      // Predicated region
      $region33: #{forward.6} parent=11 // pred_check
        %p495 = pneg %p229
      $region34: #{forward.6} parent=11 // pred_check_branch
        %497 = sbr.rel (%p495) target = $region36
      $region35: #{forward.6} parent=11 // pred_region
        _
      $region36: #{forward.6} parent=11 // pred_fallthru
        _
      // Predicated region
      $region37: #{forward.6} parent=11 // pred_check
        %p498 = pneg %p250
      $region38: #{forward.6} parent=11 // pred_check_branch
        %500 = sbr.rel (%p498) target = $region40
      $region39: #{forward.6} parent=11 // pred_region
        _
      $region40: #{forward.6} parent=11 // pred_fallthru
        _
      // Predicated region
      $region41: #{forward.6} parent=11 // pred_check
        %p501 = pneg %p271
      $region42: #{forward.6} parent=11 // pred_check_branch
        %503 = sbr.rel (%p501) target = $region44
      $region43: #{forward.6} parent=11 // pred_region
        _
      $region44: #{forward.6} parent=11 // pred_fallthru
        _
      // Predicated region
      $region45: #{forward.6} parent=11 // pred_check
        %p504 = pneg %p292
      $region46: #{forward.6} parent=11 // pred_check_branch
        %506 = sbr.rel (%p504) target = $region48
      $region47: #{forward.6} parent=11 // pred_region
        _
      $region48: #{forward.6} parent=11 // pred_fallthru
        _
      // Predicated region
      $region49: #{forward.6} parent=11 // pred_check
        %p507 = pneg %p313
      $region50: #{forward.6} parent=11 // pred_check_branch
        %509 = sbr.rel (%p507) target = $region52
      $region51: #{forward.6} parent=11 // pred_region
        _
      $region52: #{forward.6} parent=11 // pred_fallthru
        _
      // Predicated region
      $region53: #{forward.6} parent=11 // pred_check
        %p510 = pneg %p334
      $region54: #{forward.6} parent=11 // pred_check_branch
        %512 = sbr.rel (%p510) target = $region56
      $region55: #{forward.6} parent=11 // pred_region
        _
      $region56: #{forward.6} parent=11 // pred_fallthru
        _
      // Predicated region
      $region57: #{forward.6} parent=11 // pred_check
        %p513 = pneg %p355
      $region58: #{forward.6} parent=11 // pred_check_branch
        %515 = sbr.rel (%p513) target = $region60
      $region59: #{forward.6} parent=11 // pred_region
        _
      $region60: #{forward.6} parent=11 // pred_fallthru
        _
      // Predicated region
      $region61: #{forward.6} parent=11 // pred_check
        %p516 = pneg %p376
      $region62: #{forward.6} parent=11 // pred_check_branch
        %518 = sbr.rel (%p516) target = $region64
      $region63: #{forward.6} parent=11 // pred_region
        _
      $region64: #{forward.6} parent=11 // pred_fallthru
        _
      // Predicated region
      $region65: #{forward.6} parent=11 // pred_check
        %p519 = pneg %p397
      $region66: #{forward.6} parent=11 // pred_check_branch
        %521 = sbr.rel (%p519) target = $region68
      $region67: #{forward.6} parent=11 // pred_region
        _
      $region68: #{forward.6} parent=11 // pred_fallthru
        _
      // Predicated region
      $region69: #{forward.6} parent=11 // pred_check
        %p522 = pneg %p418
      $region70: #{forward.6} parent=11 // pred_check_branch
        %524 = sbr.rel (%p522) target = $region72
      $region71: #{forward.6} parent=11 // pred_region
        _
      $region72: #{forward.6} parent=11 // pred_fallthru
        _
      // Predicated region
      $region73: #{forward.6} parent=11 // pred_check
        %p525 = pneg %p439
      $region74: #{forward.6} parent=11 // pred_check_branch
        %527 = sbr.rel (%p525) target = $region76
      $region75: #{forward.6} parent=11 // pred_region
        _
      $region76: #{forward.6} parent=11 // pred_fallthru
        _
    $region12: #{forward.6} parent=5 // pred_fallthru
      _
    %p528 = scmp.lt.s32.totalorder %s25, 2
    // Predicated region
    $region77: #{forward.6} parent=5 // pred_check
      %p529 = pneg %p528
    $region78: #{forward.6} parent=5 // pred_check_branch
      %531 = sbr.rel (%p529) target = $region80
    $region79: #{forward.6} parent=5 // pred_region
      // Predicated region
      $region81: #{forward.6} parent=79 // pred_check
        %p532 = pneg %p45
      $region82: #{forward.6} parent=79 // pred_check_branch
        %534 = sbr.rel (%p532) target = $region84
      $region83: #{forward.6} parent=79 // pred_region
        %p535 = scmp.lt.s32.totalorder %s25, 1
        %s536 = scalar_select %p535, %s25, 1
        %s537 = smul.addr %s536, 8
        %s538 = scalar_lea.vmem %s0, %s537
      $region84: #{forward.6} parent=79 // pred_fallthru
        _
      // Predicated region
      $region85: #{forward.6} parent=79 // pred_check
        %p539 = pneg %p71
      $region86: #{forward.6} parent=79 // pred_check_branch
        %541 = sbr.rel (%p539) target = $region88
      $region87: #{forward.6} parent=79 // pred_region
        %p542 = scmp.lt.s32.totalorder %s25, 1
        %s543 = scalar_select %p542, %s25, 1
        %s544 = scalar_lea.vmem %s1, %s543
      $region88: #{forward.6} parent=79 // pred_fallthru
        _
      // Predicated region
      $region89: #{forward.6} parent=79 // pred_check
        %p545 = pneg %p97
      $region90: #{forward.6} parent=79 // pred_check_branch
        %547 = sbr.rel (%p545) target = $region92
      $region91: #{forward.6} parent=79 // pred_region
        %p548 = scmp.lt.s32.totalorder %s25, 1
        %s549 = scalar_select %p548, %s25, 1
        %s550 = smul.addr %s549, 8
        %s551 = scalar_lea.vmem %s2, %s550
      $region92: #{forward.6} parent=79 // pred_fallthru
        _
    $region80: #{forward.6} parent=5 // pred_fallthru
      _
    %p552 = scmp.le.s32.totalorder 1, %s25
    %p553 = scmp.lt.s32.totalorder %s25, 3
    %p554 = pnand %p552, %p553
    %p555 = pneg %p554
    // Predicated region
    $region93: #{forward.6} parent=5 // pred_check
      _
    $region94: #{forward.6} parent=5 // pred_check_branch
      %557 = sbr.rel (%p554) target = $region96
    $region95: #{forward.6} parent=5 // pred_region
      %s558 = ssub.s32 %s25, 1
      %p559 = scmp.lt.s32.totalorder %s30, 1
      %s560 = scalar_select %p559, %s30, 1
      %s561 = smul.addr %s560, 8
      %s562 = scalar_lea.vmem %s0, %s561
      %p563 = pneg %p51
      %p564 = pneg %p48
      %p565 = scmp.lt.s32.totalorder %s30, 1
      %s566 = scalar_select %p565, %s30, 1
      %s567 = scalar_lea.vmem %s1, %s566
      %p568 = pneg %p77
      %p569 = pneg %p74
      %p570 = scmp.lt.s32.totalorder %s30, 1
      %s571 = scalar_select %p570, %s30, 1
      %s572 = smul.addr %s571, 8
      %s573 = scalar_lea.vmem %s2, %s572
      %p574 = pneg %p103
      %p575 = pneg %p100
      %p576 = pneg %p124
      %p577 = pneg %p121
      %p578 = pneg %p145
      %p579 = pneg %p142
      %p580 = pneg %p166
      %p581 = pneg %p163
      %p582 = pneg %p187
      %p583 = pneg %p184
      %p584 = pneg %p208
      %p585 = pneg %p205
      %p586 = pneg %p229
      %p587 = pneg %p226
      %p588 = pneg %p250
      %p589 = pneg %p247
      %p590 = pneg %p271
      %p591 = pneg %p268
      %p592 = pneg %p292
      %p593 = pneg %p289
      %p594 = pneg %p313
      %p595 = pneg %p310
      %p596 = pneg %p334
      %p597 = pneg %p331
      %p598 = pneg %p355
      %p599 = pneg %p352
      %p600 = pneg %p376
      %p601 = pneg %p373
      %p602 = pneg %p397
      %p603 = pneg %p394
      %p604 = pneg %p418
      %p605 = pneg %p415
      %p606 = pneg %p439
      %p607 = pneg %p436
      %p608 = pneg %p465
      %p609 = pneg %p462
      %p610 = scmp.lt.s32.totalorder %s30, 1
      %s611 = scalar_select %p610, %s30, 1
      %s612 = smul.addr %s611, 8
      %s613 = scalar_lea.vmem %s19, %s612
      %p614 = scmp.lt.s32.totalorder %s30, 1
      %s615 = scalar_select %p614, %s30, 1
      %s616 = smul.addr %s615, 8
      %s617 = scalar_lea.vmem %s0, %s616
      %p618 = scmp.lt.s32.totalorder %s30, 1
      %s619 = scalar_select %p618, %s30, 1
      %s620 = scalar_lea.vmem %s1, %s619
      %p621 = scmp.lt.s32.totalorder %s30, 1
      %s622 = scalar_select %p621, %s30, 1
      %s623 = smul.addr %s622, 8
      %s624 = scalar_lea.vmem %s2, %s623
      %p625 = scmp.lt.s32.totalorder %s30, 1
      %s626 = scalar_select %p625, %s30, 1
      %s627 = smul.addr %s626, 8
      %s628 = scalar_lea.vmem %s19, %s627
      %v630 = vld [vmem:[%s617] sm:$0xff]
      %v631 = vpack.c.bf16 %v630, %v630
      %v632 = vld [vmem:[%s3] sm:$0xf]
      %v633 = vld [vmem:[%s3 + $0x4] sm:$0xf]
      %v634 = vld [vmem:[%s3 + $0x8] sm:$0xf]
      %v635 = vld [vmem:[%s3 + $0xc] sm:$0xf]
      %v636 = vld [vmem:[%s3 + $0x10] sm:$0xf]
      %v637 = vld [vmem:[%s3 + $0x14] sm:$0xf]
      %v638 = vld [vmem:[%s3 + $0x18] sm:$0xf]
      %v639 = vld [vmem:[%s3 + $0x1c] sm:$0xf]
      %v640 = vld [vmem:[%s3 + $0x20] sm:$0xf]
      %v641 = vld [vmem:[%s3 + $0x24] sm:$0xf]
      %v642 = vld [vmem:[%s3 + $0x28] sm:$0xf]
      %v643 = vld [vmem:[%s3 + $0x2c] sm:$0xf]
      %v644 = vld [vmem:[%s3 + $0x30] sm:$0xf]
      %v645 = vld [vmem:[%s3 + $0x34] sm:$0xf]
      %v646 = vld [vmem:[%s3 + $0x38] sm:$0xf]
      %v647 = vld [vmem:[%s3 + $0x3c] sm:$0xf]
      %v648 = vld [vmem:[%s3 + $0x40] sm:$0xf]
      %v649 = vld [vmem:[%s3 + $0x44] sm:$0xf]
      %v650 = vld [vmem:[%s3 + $0x48] sm:$0xf]
      %v651 = vld [vmem:[%s3 + $0x4c] sm:$0xf]
      %v652 = vld [vmem:[%s3 + $0x50] sm:$0xf]
      %v653 = vld [vmem:[%s3 + $0x54] sm:$0xf]
      %v654 = vld [vmem:[%s3 + $0x58] sm:$0xf]
      %v655 = vld [vmem:[%s3 + $0x5c] sm:$0xf]
      %v656 = vld [vmem:[%s3 + $0x60] sm:$0xf]
      %v657 = vld [vmem:[%s3 + $0x64] sm:$0xf]
      %v658 = vld [vmem:[%s3 + $0x68] sm:$0xf]
      %v659 = vld [vmem:[%s3 + $0x6c] sm:$0xf]
      %v660 = vld [vmem:[%s3 + $0x70] sm:$0xf]
      %v661 = vld [vmem:[%s3 + $0x74] sm:$0xf]
      %v662 = vld [vmem:[%s3 + $0x78] sm:$0xf]
      %v663 = vld [vmem:[%s3 + $0x7c] sm:$0xf]
      %v664 = vld [vmem:[%s6] sm:$0x1]
      %v665 = vld [vmem:[%s6 + $0x1] sm:$0x1]
      %v666 = vld [vmem:[%s6 + $0x2] sm:$0x1]
      %v667 = vld [vmem:[%s6 + $0x3] sm:$0x1]
      %v668 = vld [vmem:[%s6 + $0x4] sm:$0x1]
      %v669 = vld [vmem:[%s6 + $0x5] sm:$0x1]
      %v670 = vld [vmem:[%s6 + $0x6] sm:$0x1]
      %v671 = vld [vmem:[%s6 + $0x7] sm:$0x1]
      %v680 = vperm.slane %v664, 0
      %v681 = vperm.slane %v665, 0
      %v682 = vperm.slane %v666, 0
      %v683 = vperm.slane %v667, 0
      %v684 = vperm.slane %v668, 0
      %v685 = vperm.slane %v669, 0
      %v686 = vperm.slane %v670, 0
      %v687 = vperm.slane %v671, 0
      %v700 = vunpack.c.l.b16 %v632
      %v701 = vunpack.c.l.b16 %v633
      %v702 = vunpack.c.l.b16 %v634
      %v703 = vunpack.c.l.b16 %v635
      %v704 = vpack.c.b16 %v701, %v700
      %v705 = vpack.c.b16 %v703, %v702
      %vm708 = vcmask 261120
      %v710 = vsel %vm708, %v631, 0
      %712 = vmatpush.bf16.msra.mxu0 0
      %713 = vmatpush.bf16.msra.mxu0 0
      %714 = vmatpush.bf16.msra.mxu0 0
      %715 = vmatpush.bf16.msra.mxu0 0
      %716 = vmatpush.bf16.msra.mxu0 0
      %717 = vmatpush.bf16.msra.mxu0 0
      %718 = vmatpush.bf16.msra.mxu0 %v705
      %719 = vmatpush.bf16.msra.mxu0 %v704
      %720 = vmatmul.bf16.gmra.mxu0 %v710
      %v721 = vpop.f32.mrf.mxu0
      %v722 = vadd.f32 %v680, %v721
      %v723 = vpop.f32.mrf.mxu0
      %724 = vdwg.mxu0
      %v729 = vunpack.c.l.b16 %v636
      %v730 = vunpack.c.l.b16 %v637
      %v731 = vunpack.c.l.b16 %v638
      %v732 = vunpack.c.l.b16 %v639
      %v733 = vpack.c.b16 %v730, %v729
      %v734 = vpack.c.b16 %v732, %v731
      %737 = vmatpush.bf16.msra.mxu0 0
      %738 = vmatpush.bf16.msra.mxu0 0
      %739 = vmatpush.bf16.msra.mxu0 0
      %740 = vmatpush.bf16.msra.mxu0 0
      %741 = vmatpush.bf16.msra.mxu0 0
      %742 = vmatpush.bf16.msra.mxu0 0
      %743 = vmatpush.bf16.msra.mxu0 %v734
      %744 = vmatpush.bf16.msra.mxu0 %v733
      %745 = vmatmul.bf16.gmra.mxu0 %v710
      %v746 = vpop.f32.mrf.mxu0
      %v747 = vadd.f32 %v681, %v746
      %v748 = vpop.f32.mrf.mxu0
      %749 = vdwg.mxu0
      %v754 = vunpack.c.l.b16 %v640
      %v755 = vunpack.c.l.b16 %v641
      %v756 = vunpack.c.l.b16 %v642
      %v757 = vunpack.c.l.b16 %v643
      %v758 = vpack.c.b16 %v755, %v754
      %v759 = vpack.c.b16 %v757, %v756
      %762 = vmatpush.bf16.msra.mxu0 0
      %763 = vmatpush.bf16.msra.mxu0 0
      %764 = vmatpush.bf16.msra.mxu0 0
      %765 = vmatpush.bf16.msra.mxu0 0
      %766 = vmatpush.bf16.msra.mxu0 0
      %767 = vmatpush.bf16.msra.mxu0 0
      %768 = vmatpush.bf16.msra.mxu0 %v759
      %769 = vmatpush.bf16.msra.mxu0 %v758
      %770 = vmatmul.bf16.gmra.mxu0 %v710
      %v771 = vpop.f32.mrf.mxu0
      %v772 = vadd.f32 %v682, %v771
      %v773 = vpop.f32.mrf.mxu0
      %774 = vdwg.mxu0
      %v779 = vunpack.c.l.b16 %v644
      %v780 = vunpack.c.l.b16 %v645
      %v781 = vunpack.c.l.b16 %v646
      %v782 = vunpack.c.l.b16 %v647
      %v783 = vpack.c.b16 %v780, %v779
      %v784 = vpack.c.b16 %v782, %v781
      %787 = vmatpush.bf16.msra.mxu0 0
      %788 = vmatpush.bf16.msra.mxu0 0
      %789 = vmatpush.bf16.msra.mxu0 0
      %790 = vmatpush.bf16.msra.mxu0 0
      %791 = vmatpush.bf16.msra.mxu0 0
      %792 = vmatpush.bf16.msra.mxu0 0
      %793 = vmatpush.bf16.msra.mxu0 %v784
      %794 = vmatpush.bf16.msra.mxu0 %v783
      %795 = vmatmul.bf16.gmra.mxu0 %v710
      %v796 = vpop.f32.mrf.mxu0
      %v797 = vadd.f32 %v683, %v796
      %v798 = vpop.f32.mrf.mxu0
      %799 = vdwg.mxu0
      %v804 = vunpack.c.l.b16 %v648
      %v805 = vunpack.c.l.b16 %v649
      %v806 = vunpack.c.l.b16 %v650
      %v807 = vunpack.c.l.b16 %v651
      %v808 = vpack.c.b16 %v805, %v804
      %v809 = vpack.c.b16 %v807, %v806
      %812 = vmatpush.bf16.msra.mxu0 0
      %813 = vmatpush.bf16.msra.mxu0 0
      %814 = vmatpush.bf16.msra.mxu0 0
      %815 = vmatpush.bf16.msra.mxu0 0
      %816 = vmatpush.bf16.msra.mxu0 0
      %817 = vmatpush.bf16.msra.mxu0 0
      %818 = vmatpush.bf16.msra.mxu0 %v809
      %819 = vmatpush.bf16.msra.mxu0 %v808
      %820 = vmatmul.bf16.gmra.mxu0 %v710
      %v821 = vpop.f32.mrf.mxu0
      %v822 = vadd.f32 %v684, %v821
      %v823 = vpop.f32.mrf.mxu0
      %824 = vdwg.mxu0
      %v829 = vunpack.c.l.b16 %v652
      %v830 = vunpack.c.l.b16 %v653
      %v831 = vunpack.c.l.b16 %v654
      %v832 = vunpack.c.l.b16 %v655
      %v833 = vpack.c.b16 %v830, %v829
      %v834 = vpack.c.b16 %v832, %v831
      %837 = vmatpush.bf16.msra.mxu0 0
      %838 = vmatpush.bf16.msra.mxu0 0
      %839 = vmatpush.bf16.msra.mxu0 0
      %840 = vmatpush.bf16.msra.mxu0 0
      %841 = vmatpush.bf16.msra.mxu0 0
      %842 = vmatpush.bf16.msra.mxu0 0
      %843 = vmatpush.bf16.msra.mxu0 %v834
      %844 = vmatpush.bf16.msra.mxu0 %v833
      %845 = vmatmul.bf16.gmra.mxu0 %v710
      %v846 = vpop.f32.mrf.mxu0
      %v847 = vadd.f32 %v685, %v846
      %v848 = vpop.f32.mrf.mxu0
      %849 = vdwg.mxu0
      %v854 = vunpack.c.l.b16 %v656
      %v855 = vunpack.c.l.b16 %v657
      %v856 = vunpack.c.l.b16 %v658
      %v857 = vunpack.c.l.b16 %v659
      %v858 = vpack.c.b16 %v855, %v854
      %v859 = vpack.c.b16 %v857, %v856
      %862 = vmatpush.bf16.msra.mxu0 0
      %863 = vmatpush.bf16.msra.mxu0 0
      %864 = vmatpush.bf16.msra.mxu0 0
      %865 = vmatpush.bf16.msra.mxu0 0
      %866 = vmatpush.bf16.msra.mxu0 0
      %867 = vmatpush.bf16.msra.mxu0 0
      %868 = vmatpush.bf16.msra.mxu0 %v859
      %869 = vmatpush.bf16.msra.mxu0 %v858
      %870 = vmatmul.bf16.gmra.mxu0 %v710
      %v871 = vpop.f32.mrf.mxu0
      %v872 = vadd.f32 %v686, %v871
      %v873 = vpop.f32.mrf.mxu0
      %874 = vdwg.mxu0
      %v879 = vunpack.c.l.b16 %v660
      %v880 = vunpack.c.l.b16 %v661
      %v881 = vunpack.c.l.b16 %v662
      %v882 = vunpack.c.l.b16 %v663
      %v883 = vpack.c.b16 %v880, %v879
      %v884 = vpack.c.b16 %v882, %v881
      %887 = vmatpush.bf16.msra.mxu0 0
      %888 = vmatpush.bf16.msra.mxu0 0
      %889 = vmatpush.bf16.msra.mxu0 0
      %890 = vmatpush.bf16.msra.mxu0 0
      %891 = vmatpush.bf16.msra.mxu0 0
      %892 = vmatpush.bf16.msra.mxu0 0
      %893 = vmatpush.bf16.msra.mxu0 %v884
      %894 = vmatpush.bf16.msra.mxu0 %v883
      %895 = vmatmul.bf16.gmra.mxu0 %v710
      %v896 = vpop.f32.mrf.mxu0
      %v897 = vadd.f32 %v687, %v896
      %v898 = vpop.f32.mrf.mxu0
      %899 = vdwg.mxu0
      %v900 = vld [vmem:[%s4] sm:$0xf]
      %v901 = vld [vmem:[%s4 + $0x4] sm:$0xf]
      %v902 = vld [vmem:[%s4 + $0x8] sm:$0xf]
      %v903 = vld [vmem:[%s4 + $0xc] sm:$0xf]
      %v904 = vld [vmem:[%s4 + $0x10] sm:$0xf]
      %v905 = vld [vmem:[%s4 + $0x14] sm:$0xf]
      %v906 = vld [vmem:[%s4 + $0x18] sm:$0xf]
      %v907 = vld [vmem:[%s4 + $0x1c] sm:$0xf]
      %v908 = vld [vmem:[%s4 + $0x20] sm:$0xf]
      %v909 = vld [vmem:[%s4 + $0x24] sm:$0xf]
      %v910 = vld [vmem:[%s4 + $0x28] sm:$0xf]
      %v911 = vld [vmem:[%s4 + $0x2c] sm:$0xf]
      %v912 = vld [vmem:[%s4 + $0x30] sm:$0xf]
      %v913 = vld [vmem:[%s4 + $0x34] sm:$0xf]
      %v914 = vld [vmem:[%s4 + $0x38] sm:$0xf]
      %v915 = vld [vmem:[%s4 + $0x3c] sm:$0xf]
      %v916 = vld [vmem:[%s4 + $0x40] sm:$0xf]
      %v917 = vld [vmem:[%s4 + $0x44] sm:$0xf]
      %v918 = vld [vmem:[%s4 + $0x48] sm:$0xf]
      %v919 = vld [vmem:[%s4 + $0x4c] sm:$0xf]
      %v920 = vld [vmem:[%s4 + $0x50] sm:$0xf]
      %v921 = vld [vmem:[%s4 + $0x54] sm:$0xf]
      %v922 = vld [vmem:[%s4 + $0x58] sm:$0xf]
      %v923 = vld [vmem:[%s4 + $0x5c] sm:$0xf]
      %v924 = vld [vmem:[%s4 + $0x60] sm:$0xf]
      %v925 = vld [vmem:[%s4 + $0x64] sm:$0xf]
      %v926 = vld [vmem:[%s4 + $0x68] sm:$0xf]
      %v927 = vld [vmem:[%s4 + $0x6c] sm:$0xf]
      %v928 = vld [vmem:[%s4 + $0x70] sm:$0xf]
      %v929 = vld [vmem:[%s4 + $0x74] sm:$0xf]
      %v930 = vld [vmem:[%s4 + $0x78] sm:$0xf]
      %v931 = vld [vmem:[%s4 + $0x7c] sm:$0xf]
      %v932 = vld [vmem:[%s7] sm:$0x1]
      %v933 = vld [vmem:[%s7 + $0x1] sm:$0x1]
      %v934 = vld [vmem:[%s7 + $0x2] sm:$0x1]
      %v935 = vld [vmem:[%s7 + $0x3] sm:$0x1]
      %v936 = vld [vmem:[%s7 + $0x4] sm:$0x1]
      %v937 = vld [vmem:[%s7 + $0x5] sm:$0x1]
      %v938 = vld [vmem:[%s7 + $0x6] sm:$0x1]
      %v939 = vld [vmem:[%s7 + $0x7] sm:$0x1]
      %v948 = vperm.slane %v932, 0
      %v949 = vperm.slane %v933, 0
      %v950 = vperm.slane %v934, 0
      %v951 = vperm.slane %v935, 0
      %v952 = vperm.slane %v936, 0
      %v953 = vperm.slane %v937, 0
      %v954 = vperm.slane %v938, 0
      %v955 = vperm.slane %v939, 0
      %v968 = vunpack.c.l.b16 %v900
      %v969 = vunpack.c.l.b16 %v901
      %v970 = vunpack.c.l.b16 %v902
      %v971 = vunpack.c.l.b16 %v903
      %v972 = vpack.c.b16 %v969, %v968
      %v973 = vpack.c.b16 %v971, %v970
      %976 = vmatpush.bf16.msra.mxu0 0
      %977 = vmatpush.bf16.msra.mxu0 0
      %978 = vmatpush.bf16.msra.mxu0 0
      %979 = vmatpush.bf16.msra.mxu0 0
      %980 = vmatpush.bf16.msra.mxu0 0
      %981 = vmatpush.bf16.msra.mxu0 0
      %982 = vmatpush.bf16.msra.mxu0 %v973
      %983 = vmatpush.bf16.msra.mxu0 %v972
      %984 = vmatmul.bf16.gmra.mxu0 %v710
      %v985 = vpop.f32.mrf.mxu0
      %v986 = vadd.f32 %v948, %v985
      %v987 = vpop.f32.mrf.mxu0
      %988 = vdwg.mxu0
      %v993 = vunpack.c.l.b16 %v904
      %v994 = vunpack.c.l.b16 %v905
      %v995 = vunpack.c.l.b16 %v906
      %v996 = vunpack.c.l.b16 %v907
      %v997 = vpack.c.b16 %v994, %v993
      %v998 = vpack.c.b16 %v996, %v995
      %1001 = vmatpush.bf16.msra.mxu0 0
      %1002 = vmatpush.bf16.msra.mxu0 0
      %1003 = vmatpush.bf16.msra.mxu0 0
      %1004 = vmatpush.bf16.msra.mxu0 0
      %1005 = vmatpush.bf16.msra.mxu0 0
      %1006 = vmatpush.bf16.msra.mxu0 0
      %1007 = vmatpush.bf16.msra.mxu0 %v998
      %1008 = vmatpush.bf16.msra.mxu0 %v997
      %1009 = vmatmul.bf16.gmra.mxu0 %v710
      %v1010 = vpop.f32.mrf.mxu0
      %v1011 = vadd.f32 %v949, %v1010
      %v1012 = vpop.f32.mrf.mxu0
      %1013 = vdwg.mxu0
      %v1018 = vunpack.c.l.b16 %v908
      %v1019 = vunpack.c.l.b16 %v909
      %v1020 = vunpack.c.l.b16 %v910
      %v1021 = vunpack.c.l.b16 %v911
      %v1022 = vpack.c.b16 %v1019, %v1018
      %v1023 = vpack.c.b16 %v1021, %v1020
      %1026 = vmatpush.bf16.msra.mxu0 0
      %1027 = vmatpush.bf16.msra.mxu0 0
      %1028 = vmatpush.bf16.msra.mxu0 0
      %1029 = vmatpush.bf16.msra.mxu0 0
      %1030 = vmatpush.bf16.msra.mxu0 0
      %1031 = vmatpush.bf16.msra.mxu0 0
      %1032 = vmatpush.bf16.msra.mxu0 %v1023
      %1033 = vmatpush.bf16.msra.mxu0 %v1022
      %1034 = vmatmul.bf16.gmra.mxu0 %v710
      %v1035 = vpop.f32.mrf.mxu0
      %v1036 = vadd.f32 %v950, %v1035
      %v1037 = vpop.f32.mrf.mxu0
      %1038 = vdwg.mxu0
      %v1043 = vunpack.c.l.b16 %v912
      %v1044 = vunpack.c.l.b16 %v913
      %v1045 = vunpack.c.l.b16 %v914
      %v1046 = vunpack.c.l.b16 %v915
      %v1047 = vpack.c.b16 %v1044, %v1043
      %v1048 = vpack.c.b16 %v1046, %v1045
      %1051 = vmatpush.bf16.msra.mxu0 0
      %1052 = vmatpush.bf16.msra.mxu0 0
      %1053 = vmatpush.bf16.msra.mxu0 0
      %1054 = vmatpush.bf16.msra.mxu0 0
      %1055 = vmatpush.bf16.msra.mxu0 0
      %1056 = vmatpush.bf16.msra.mxu0 0
      %1057 = vmatpush.bf16.msra.mxu0 %v1048
      %1058 = vmatpush.bf16.msra.mxu0 %v1047
      %1059 = vmatmul.bf16.gmra.mxu0 %v710
      %v1060 = vpop.f32.mrf.mxu0
      %v1061 = vadd.f32 %v951, %v1060
      %v1062 = vpop.f32.mrf.mxu0
      %1063 = vdwg.mxu0
      %v1068 = vunpack.c.l.b16 %v916
      %v1069 = vunpack.c.l.b16 %v917
      %v1070 = vunpack.c.l.b16 %v918
      %v1071 = vunpack.c.l.b16 %v919
      %v1072 = vpack.c.b16 %v1069, %v1068
      %v1073 = vpack.c.b16 %v1071, %v1070
      %1076 = vmatpush.bf16.msra.mxu0 0
      %1077 = vmatpush.bf16.msra.mxu0 0
      %1078 = vmatpush.bf16.msra.mxu0 0
      %1079 = vmatpush.bf16.msra.mxu0 0
      %1080 = vmatpush.bf16.msra.mxu0 0
      %1081 = vmatpush.bf16.msra.mxu0 0
      %1082 = vmatpush.bf16.msra.mxu0 %v1073
      %1083 = vmatpush.bf16.msra.mxu0 %v1072
      %1084 = vmatmul.bf16.gmra.mxu0 %v710
      %v1085 = vpop.f32.mrf.mxu0
      %v1086 = vadd.f32 %v952, %v1085
      %v1087 = vpop.f32.mrf.mxu0
      %1088 = vdwg.mxu0
      %v1093 = vunpack.c.l.b16 %v920
      %v1094 = vunpack.c.l.b16 %v921
      %v1095 = vunpack.c.l.b16 %v922
      %v1096 = vunpack.c.l.b16 %v923
      %v1097 = vpack.c.b16 %v1094, %v1093
      %v1098 = vpack.c.b16 %v1096, %v1095
      %1101 = vmatpush.bf16.msra.mxu0 0
      %1102 = vmatpush.bf16.msra.mxu0 0
      %1103 = vmatpush.bf16.msra.mxu0 0
      %1104 = vmatpush.bf16.msra.mxu0 0
      %1105 = vmatpush.bf16.msra.mxu0 0
      %1106 = vmatpush.bf16.msra.mxu0 0
      %1107 = vmatpush.bf16.msra.mxu0 %v1098
      %1108 = vmatpush.bf16.msra.mxu0 %v1097
      %1109 = vmatmul.bf16.gmra.mxu0 %v710
      %v1110 = vpop.f32.mrf.mxu0
      %v1111 = vadd.f32 %v953, %v1110
      %v1112 = vpop.f32.mrf.mxu0
      %1113 = vdwg.mxu0
      %v1118 = vunpack.c.l.b16 %v924
      %v1119 = vunpack.c.l.b16 %v925
      %v1120 = vunpack.c.l.b16 %v926
      %v1121 = vunpack.c.l.b16 %v927
      %v1122 = vpack.c.b16 %v1119, %v1118
      %v1123 = vpack.c.b16 %v1121, %v1120
      %1126 = vmatpush.bf16.msra.mxu0 0
      %1127 = vmatpush.bf16.msra.mxu0 0
      %1128 = vmatpush.bf16.msra.mxu0 0
      %1129 = vmatpush.bf16.msra.mxu0 0
      %1130 = vmatpush.bf16.msra.mxu0 0
      %1131 = vmatpush.bf16.msra.mxu0 0
      %1132 = vmatpush.bf16.msra.mxu0 %v1123
      %1133 = vmatpush.bf16.msra.mxu0 %v1122
      %1134 = vmatmul.bf16.gmra.mxu0 %v710
      %v1135 = vpop.f32.mrf.mxu0
      %v1136 = vadd.f32 %v954, %v1135
      %v1137 = vpop.f32.mrf.mxu0
      %1138 = vdwg.mxu0
      %v1143 = vunpack.c.l.b16 %v928
      %v1144 = vunpack.c.l.b16 %v929
      %v1145 = vunpack.c.l.b16 %v930
      %v1146 = vunpack.c.l.b16 %v931
      %v1147 = vpack.c.b16 %v1144, %v1143
      %v1148 = vpack.c.b16 %v1146, %v1145
      %1151 = vmatpush.bf16.msra.mxu0 0
      %1152 = vmatpush.bf16.msra.mxu0 0
      %1153 = vmatpush.bf16.msra.mxu0 0
      %1154 = vmatpush.bf16.msra.mxu0 0
      %1155 = vmatpush.bf16.msra.mxu0 0
      %1156 = vmatpush.bf16.msra.mxu0 0
      %1157 = vmatpush.bf16.msra.mxu0 %v1148
      %1158 = vmatpush.bf16.msra.mxu0 %v1147
      %1159 = vmatmul.bf16.gmra.mxu0 %v710
      %v1160 = vpop.f32.mrf.mxu0
      %v1161 = vadd.f32 %v955, %v1160
      %v1162 = vpop.f32.mrf.mxu0
      %1163 = vdwg.mxu0
      %v1164 = vld [vmem:[%s5] sm:$0xf]
      %v1165 = vld [vmem:[%s5 + $0x4] sm:$0xf]
      %v1166 = vld [vmem:[%s5 + $0x8] sm:$0xf]
      %v1167 = vld [vmem:[%s5 + $0xc] sm:$0xf]
      %v1168 = vld [vmem:[%s5 + $0x10] sm:$0xf]
      %v1169 = vld [vmem:[%s5 + $0x14] sm:$0xf]
      %v1170 = vld [vmem:[%s5 + $0x18] sm:$0xf]
      %v1171 = vld [vmem:[%s5 + $0x1c] sm:$0xf]
      %v1172 = vld [vmem:[%s5 + $0x20] sm:$0xf]
      %v1173 = vld [vmem:[%s5 + $0x24] sm:$0xf]
      %v1174 = vld [vmem:[%s5 + $0x28] sm:$0xf]
      %v1175 = vld [vmem:[%s5 + $0x2c] sm:$0xf]
      %v1176 = vld [vmem:[%s5 + $0x30] sm:$0xf]
      %v1177 = vld [vmem:[%s5 + $0x34] sm:$0xf]
      %v1178 = vld [vmem:[%s5 + $0x38] sm:$0xf]
      %v1179 = vld [vmem:[%s5 + $0x3c] sm:$0xf]
      %v1180 = vld [vmem:[%s5 + $0x40] sm:$0xf]
      %v1181 = vld [vmem:[%s5 + $0x44] sm:$0xf]
      %v1182 = vld [vmem:[%s5 + $0x48] sm:$0xf]
      %v1183 = vld [vmem:[%s5 + $0x4c] sm:$0xf]
      %v1184 = vld [vmem:[%s5 + $0x50] sm:$0xf]
      %v1185 = vld [vmem:[%s5 + $0x54] sm:$0xf]
      %v1186 = vld [vmem:[%s5 + $0x58] sm:$0xf]
      %v1187 = vld [vmem:[%s5 + $0x5c] sm:$0xf]
      %v1188 = vld [vmem:[%s5 + $0x60] sm:$0xf]
      %v1189 = vld [vmem:[%s5 + $0x64] sm:$0xf]
      %v1190 = vld [vmem:[%s5 + $0x68] sm:$0xf]
      %v1191 = vld [vmem:[%s5 + $0x6c] sm:$0xf]
      %v1192 = vld [vmem:[%s5 + $0x70] sm:$0xf]
      %v1193 = vld [vmem:[%s5 + $0x74] sm:$0xf]
      %v1194 = vld [vmem:[%s5 + $0x78] sm:$0xf]
      %v1195 = vld [vmem:[%s5 + $0x7c] sm:$0xf]
      %v1196 = vld [vmem:[%s8] sm:$0x1]
      %v1197 = vld [vmem:[%s8 + $0x1] sm:$0x1]
      %v1198 = vld [vmem:[%s8 + $0x2] sm:$0x1]
      %v1199 = vld [vmem:[%s8 + $0x3] sm:$0x1]
      %v1200 = vld [vmem:[%s8 + $0x4] sm:$0x1]
      %v1201 = vld [vmem:[%s8 + $0x5] sm:$0x1]
      %v1202 = vld [vmem:[%s8 + $0x6] sm:$0x1]
      %v1203 = vld [vmem:[%s8 + $0x7] sm:$0x1]
      %v1212 = vperm.slane %v1196, 0
      %v1213 = vperm.slane %v1197, 0
      %v1214 = vperm.slane %v1198, 0
      %v1215 = vperm.slane %v1199, 0
      %v1216 = vperm.slane %v1200, 0
      %v1217 = vperm.slane %v1201, 0
      %v1218 = vperm.slane %v1202, 0
      %v1219 = vperm.slane %v1203, 0
      %v1232 = vunpack.c.l.b16 %v1164
      %v1233 = vunpack.c.l.b16 %v1165
      %v1234 = vunpack.c.l.b16 %v1166
      %v1235 = vunpack.c.l.b16 %v1167
      %v1236 = vpack.c.b16 %v1233, %v1232
      %v1237 = vpack.c.b16 %v1235, %v1234
      %1240 = vmatpush.bf16.msra.mxu0 0
      %1241 = vmatpush.bf16.msra.mxu0 0
      %1242 = vmatpush.bf16.msra.mxu0 0
      %1243 = vmatpush.bf16.msra.mxu0 0
      %1244 = vmatpush.bf16.msra.mxu0 0
      %1245 = vmatpush.bf16.msra.mxu0 0
      %1246 = vmatpush.bf16.msra.mxu0 %v1237
      %1247 = vmatpush.bf16.msra.mxu0 %v1236
      %1248 = vmatmul.bf16.gmra.mxu0 %v710
      %v1249 = vpop.f32.mrf.mxu0
      %v1250 = vadd.f32 %v1212, %v1249
      %v1251 = vpop.f32.mrf.mxu0
      %1252 = vdwg.mxu0
      %v1257 = vunpack.c.l.b16 %v1168
      %v1258 = vunpack.c.l.b16 %v1169
      %v1259 = vunpack.c.l.b16 %v1170
      %v1260 = vunpack.c.l.b16 %v1171
      %v1261 = vpack.c.b16 %v1258, %v1257
      %v1262 = vpack.c.b16 %v1260, %v1259
      %1265 = vmatpush.bf16.msra.mxu0 0
      %1266 = vmatpush.bf16.msra.mxu0 0
      %1267 = vmatpush.bf16.msra.mxu0 0
      %1268 = vmatpush.bf16.msra.mxu0 0
      %1269 = vmatpush.bf16.msra.mxu0 0
      %1270 = vmatpush.bf16.msra.mxu0 0
      %1271 = vmatpush.bf16.msra.mxu0 %v1262
      %1272 = vmatpush.bf16.msra.mxu0 %v1261
      %1273 = vmatmul.bf16.gmra.mxu0 %v710
      %v1274 = vpop.f32.mrf.mxu0
      %v1275 = vadd.f32 %v1213, %v1274
      %v1276 = vpop.f32.mrf.mxu0
      %1277 = vdwg.mxu0
      %v1282 = vunpack.c.l.b16 %v1172
      %v1283 = vunpack.c.l.b16 %v1173
      %v1284 = vunpack.c.l.b16 %v1174
      %v1285 = vunpack.c.l.b16 %v1175
      %v1286 = vpack.c.b16 %v1283, %v1282
      %v1287 = vpack.c.b16 %v1285, %v1284
      %1290 = vmatpush.bf16.msra.mxu0 0
      %1291 = vmatpush.bf16.msra.mxu0 0
      %1292 = vmatpush.bf16.msra.mxu0 0
      %1293 = vmatpush.bf16.msra.mxu0 0
      %1294 = vmatpush.bf16.msra.mxu0 0
      %1295 = vmatpush.bf16.msra.mxu0 0
      %1296 = vmatpush.bf16.msra.mxu0 %v1287
      %1297 = vmatpush.bf16.msra.mxu0 %v1286
      %1298 = vmatmul.bf16.gmra.mxu0 %v710
      %v1299 = vpop.f32.mrf.mxu0
      %v1300 = vadd.f32 %v1214, %v1299
      %v1301 = vpop.f32.mrf.mxu0
      %1302 = vdwg.mxu0
      %v1307 = vunpack.c.l.b16 %v1176
      %v1308 = vunpack.c.l.b16 %v1177
      %v1309 = vunpack.c.l.b16 %v1178
      %v1310 = vunpack.c.l.b16 %v1179
      %v1311 = vpack.c.b16 %v1308, %v1307
      %v1312 = vpack.c.b16 %v1310, %v1309
      %1315 = vmatpush.bf16.msra.mxu0 0
      %1316 = vmatpush.bf16.msra.mxu0 0
      %1317 = vmatpush.bf16.msra.mxu0 0
      %1318 = vmatpush.bf16.msra.mxu0 0
      %1319 = vmatpush.bf16.msra.mxu0 0
      %1320 = vmatpush.bf16.msra.mxu0 0
      %1321 = vmatpush.bf16.msra.mxu0 %v1312
      %1322 = vmatpush.bf16.msra.mxu0 %v1311
      %1323 = vmatmul.bf16.gmra.mxu0 %v710
      %v1324 = vpop.f32.mrf.mxu0
      %v1325 = vadd.f32 %v1215, %v1324
      %v1326 = vpop.f32.mrf.mxu0
      %1327 = vdwg.mxu0
      %v1332 = vunpack.c.l.b16 %v1180
      %v1333 = vunpack.c.l.b16 %v1181
      %v1334 = vunpack.c.l.b16 %v1182
      %v1335 = vunpack.c.l.b16 %v1183
      %v1336 = vpack.c.b16 %v1333, %v1332
      %v1337 = vpack.c.b16 %v1335, %v1334
      %1340 = vmatpush.bf16.msra.mxu0 0
      %1341 = vmatpush.bf16.msra.mxu0 0
      %1342 = vmatpush.bf16.msra.mxu0 0
      %1343 = vmatpush.bf16.msra.mxu0 0
      %1344 = vmatpush.bf16.msra.mxu0 0
      %1345 = vmatpush.bf16.msra.mxu0 0
      %1346 = vmatpush.bf16.msra.mxu0 %v1337
      %1347 = vmatpush.bf16.msra.mxu0 %v1336
      %1348 = vmatmul.bf16.gmra.mxu0 %v710
      %v1349 = vpop.f32.mrf.mxu0
      %v1350 = vadd.f32 %v1216, %v1349
      %v1351 = vpop.f32.mrf.mxu0
      %1352 = vdwg.mxu0
      %v1357 = vunpack.c.l.b16 %v1184
      %v1358 = vunpack.c.l.b16 %v1185
      %v1359 = vunpack.c.l.b16 %v1186
      %v1360 = vunpack.c.l.b16 %v1187
      %v1361 = vpack.c.b16 %v1358, %v1357
      %v1362 = vpack.c.b16 %v1360, %v1359
      %1365 = vmatpush.bf16.msra.mxu0 0
      %1366 = vmatpush.bf16.msra.mxu0 0
      %1367 = vmatpush.bf16.msra.mxu0 0
      %1368 = vmatpush.bf16.msra.mxu0 0
      %1369 = vmatpush.bf16.msra.mxu0 0
      %1370 = vmatpush.bf16.msra.mxu0 0
      %1371 = vmatpush.bf16.msra.mxu0 %v1362
      %1372 = vmatpush.bf16.msra.mxu0 %v1361
      %1373 = vmatmul.bf16.gmra.mxu0 %v710
      %v1374 = vpop.f32.mrf.mxu0
      %v1375 = vadd.f32 %v1217, %v1374
      %v1376 = vpop.f32.mrf.mxu0
      %1377 = vdwg.mxu0
      %v1382 = vunpack.c.l.b16 %v1188
      %v1383 = vunpack.c.l.b16 %v1189
      %v1384 = vunpack.c.l.b16 %v1190
      %v1385 = vunpack.c.l.b16 %v1191
      %v1386 = vpack.c.b16 %v1383, %v1382
      %v1387 = vpack.c.b16 %v1385, %v1384
      %1390 = vmatpush.bf16.msra.mxu0 0
      %1391 = vmatpush.bf16.msra.mxu0 0
      %1392 = vmatpush.bf16.msra.mxu0 0
      %1393 = vmatpush.bf16.msra.mxu0 0
      %1394 = vmatpush.bf16.msra.mxu0 0
      %1395 = vmatpush.bf16.msra.mxu0 0
      %1396 = vmatpush.bf16.msra.mxu0 %v1387
      %1397 = vmatpush.bf16.msra.mxu0 %v1386
      %1398 = vmatmul.bf16.gmra.mxu0 %v710
      %v1399 = vpop.f32.mrf.mxu0
      %v1400 = vadd.f32 %v1218, %v1399
      %v1401 = vpop.f32.mrf.mxu0
      %1402 = vdwg.mxu0
      %v1407 = vunpack.c.l.b16 %v1192
      %v1408 = vunpack.c.l.b16 %v1193
      %v1409 = vunpack.c.l.b16 %v1194
      %v1410 = vunpack.c.l.b16 %v1195
      %v1411 = vpack.c.b16 %v1408, %v1407
      %v1412 = vpack.c.b16 %v1410, %v1409
      %1415 = vmatpush.bf16.msra.mxu0 0
      %1416 = vmatpush.bf16.msra.mxu0 0
      %1417 = vmatpush.bf16.msra.mxu0 0
      %1418 = vmatpush.bf16.msra.mxu0 0
      %1419 = vmatpush.bf16.msra.mxu0 0
      %1420 = vmatpush.bf16.msra.mxu0 0
      %1421 = vmatpush.bf16.msra.mxu0 %v1412
      %1422 = vmatpush.bf16.msra.mxu0 %v1411
      %1423 = vmatmul.bf16.gmra.mxu0 %v710
      %v1424 = vpop.f32.mrf.mxu0
      %v1425 = vadd.f32 %v1219, %v1424
      %v1426 = vpop.f32.mrf.mxu0
      %1427 = vdwg.mxu0
      %v1428 = vld [vmem:[%s620] sm:$0x1]
      %vm1429 = vcmp.gt.f32.partialorder %v1428, 0.0
      %v1430 = vsel %vm1429, 0.0, -1e+09
      %v1431 = vpack.c.bf16 %v722, %v722
      %v1432 = vpack.c.bf16 %v747, %v747
      %v1433 = vpack.c.bf16 %v772, %v772
      %v1434 = vpack.c.bf16 %v797, %v797
      %v1435 = vpack.c.bf16 %v822, %v822
      %v1436 = vpack.c.bf16 %v847, %v847
      %v1437 = vpack.c.bf16 %v872, %v872
      %v1438 = vpack.c.bf16 %v897, %v897
      %v1439 = vpack.c.bf16 %v986, %v986
      %v1440 = vpack.c.bf16 %v1011, %v1011
      %v1441 = vpack.c.bf16 %v1036, %v1036
      %v1442 = vpack.c.bf16 %v1061, %v1061
      %v1443 = vpack.c.bf16 %v1086, %v1086
      %v1444 = vpack.c.bf16 %v1111, %v1111
      %v1445 = vpack.c.bf16 %v1136, %v1136
      %v1446 = vpack.c.bf16 %v1161, %v1161
      %vm1447 = vcmask 31744
      %v1449 = vsel %vm1447, %v1431, 0
      %v1452 = vsel %vm1447, %v1439, 0
      %1454 = vmatpush.bf16.xpose.msra.mxu0 0
      %1455 = vmatpush.bf16.xpose.msra.mxu0 0
      %1456 = vmatpush.bf16.xpose.msra.mxu0 0
      %1457 = vmatpush.bf16.xpose.msra.mxu0 0
      %1458 = vmatpush.bf16.xpose.msra.mxu0 0
      %1459 = vmatpush.bf16.xpose.msra.mxu0 0
      %1460 = vmatpush.bf16.xpose.msra.mxu0 0
      %1461 = vmatpush.bf16.xpose.msra.mxu0 %v1452
      %1462 = vmatmul.bf16.gmra.mxu0 %v1449
      %v1463 = vpop.f32.mrf.mxu0
      %v1464 = vadd.f32 0.0, %v1463
      %v1465 = vpop.f32.mrf.mxu0
      %1466 = vdwg.mxu0
      %v1468 = vsel %vm1447, %v1432, 0
      %v1471 = vsel %vm1447, %v1440, 0
      %1473 = vmatpush.bf16.xpose.msra.mxu0 0
      %1474 = vmatpush.bf16.xpose.msra.mxu0 0
      %1475 = vmatpush.bf16.xpose.msra.mxu0 0
      %1476 = vmatpush.bf16.xpose.msra.mxu0 0
      %1477 = vmatpush.bf16.xpose.msra.mxu0 0
      %1478 = vmatpush.bf16.xpose.msra.mxu0 0
      %1479 = vmatpush.bf16.xpose.msra.mxu0 0
      %1480 = vmatpush.bf16.xpose.msra.mxu0 %v1471
      %1481 = vmatmul.bf16.gmra.mxu0 %v1468
      %v1482 = vpop.f32.mrf.mxu0
      %v1483 = vadd.f32 0.0, %v1482
      %v1484 = vpop.f32.mrf.mxu0
      %1485 = vdwg.mxu0
      %v1487 = vsel %vm1447, %v1433, 0
      %v1490 = vsel %vm1447, %v1441, 0
      %1492 = vmatpush.bf16.xpose.msra.mxu0 0
      %1493 = vmatpush.bf16.xpose.msra.mxu0 0
      %1494 = vmatpush.bf16.xpose.msra.mxu0 0
      %1495 = vmatpush.bf16.xpose.msra.mxu0 0
      %1496 = vmatpush.bf16.xpose.msra.mxu0 0
      %1497 = vmatpush.bf16.xpose.msra.mxu0 0
      %1498 = vmatpush.bf16.xpose.msra.mxu0 0
      %1499 = vmatpush.bf16.xpose.msra.mxu0 %v1490
      %1500 = vmatmul.bf16.gmra.mxu0 %v1487
      %v1501 = vpop.f32.mrf.mxu0
      %v1502 = vadd.f32 0.0, %v1501
      %v1503 = vpop.f32.mrf.mxu0
      %1504 = vdwg.mxu0
      %v1506 = vsel %vm1447, %v1434, 0
      %v1509 = vsel %vm1447, %v1442, 0
      %1511 = vmatpush.bf16.xpose.msra.mxu0 0
      %1512 = vmatpush.bf16.xpose.msra.mxu0 0
      %1513 = vmatpush.bf16.xpose.msra.mxu0 0
      %1514 = vmatpush.bf16.xpose.msra.mxu0 0
      %1515 = vmatpush.bf16.xpose.msra.mxu0 0
      %1516 = vmatpush.bf16.xpose.msra.mxu0 0
      %1517 = vmatpush.bf16.xpose.msra.mxu0 0
      %1518 = vmatpush.bf16.xpose.msra.mxu0 %v1509
      %1519 = vmatmul.bf16.gmra.mxu0 %v1506
      %v1520 = vpop.f32.mrf.mxu0
      %v1521 = vadd.f32 0.0, %v1520
      %v1522 = vpop.f32.mrf.mxu0
      %1523 = vdwg.mxu0
      %v1525 = vsel %vm1447, %v1435, 0
      %v1528 = vsel %vm1447, %v1443, 0
      %1530 = vmatpush.bf16.xpose.msra.mxu0 0
      %1531 = vmatpush.bf16.xpose.msra.mxu0 0
      %1532 = vmatpush.bf16.xpose.msra.mxu0 0
      %1533 = vmatpush.bf16.xpose.msra.mxu0 0
      %1534 = vmatpush.bf16.xpose.msra.mxu0 0
      %1535 = vmatpush.bf16.xpose.msra.mxu0 0
      %1536 = vmatpush.bf16.xpose.msra.mxu0 0
      %1537 = vmatpush.bf16.xpose.msra.mxu0 %v1528
      %1538 = vmatmul.bf16.gmra.mxu0 %v1525
      %v1539 = vpop.f32.mrf.mxu0
      %v1540 = vadd.f32 0.0, %v1539
      %v1541 = vpop.f32.mrf.mxu0
      %1542 = vdwg.mxu0
      %v1544 = vsel %vm1447, %v1436, 0
      %v1547 = vsel %vm1447, %v1444, 0
      %1549 = vmatpush.bf16.xpose.msra.mxu0 0
      %1550 = vmatpush.bf16.xpose.msra.mxu0 0
      %1551 = vmatpush.bf16.xpose.msra.mxu0 0
      %1552 = vmatpush.bf16.xpose.msra.mxu0 0
      %1553 = vmatpush.bf16.xpose.msra.mxu0 0
      %1554 = vmatpush.bf16.xpose.msra.mxu0 0
      %1555 = vmatpush.bf16.xpose.msra.mxu0 0
      %1556 = vmatpush.bf16.xpose.msra.mxu0 %v1547
      %1557 = vmatmul.bf16.gmra.mxu0 %v1544
      %v1558 = vpop.f32.mrf.mxu0
      %v1559 = vadd.f32 0.0, %v1558
      %v1560 = vpop.f32.mrf.mxu0
      %1561 = vdwg.mxu0
      %v1563 = vsel %vm1447, %v1437, 0
      %v1566 = vsel %vm1447, %v1445, 0
      %1568 = vmatpush.bf16.xpose.msra.mxu0 0
      %1569 = vmatpush.bf16.xpose.msra.mxu0 0
      %1570 = vmatpush.bf16.xpose.msra.mxu0 0
      %1571 = vmatpush.bf16.xpose.msra.mxu0 0
      %1572 = vmatpush.bf16.xpose.msra.mxu0 0
      %1573 = vmatpush.bf16.xpose.msra.mxu0 0
      %1574 = vmatpush.bf16.xpose.msra.mxu0 0
      %1575 = vmatpush.bf16.xpose.msra.mxu0 %v1566
      %1576 = vmatmul.bf16.gmra.mxu0 %v1563
      %v1577 = vpop.f32.mrf.mxu0
      %v1578 = vadd.f32 0.0, %v1577
      %v1579 = vpop.f32.mrf.mxu0
      %1580 = vdwg.mxu0
      %v1582 = vsel %vm1447, %v1438, 0
      %v1585 = vsel %vm1447, %v1446, 0
      %1587 = vmatpush.bf16.xpose.msra.mxu0 0
      %1588 = vmatpush.bf16.xpose.msra.mxu0 0
      %1589 = vmatpush.bf16.xpose.msra.mxu0 0
      %1590 = vmatpush.bf16.xpose.msra.mxu0 0
      %1591 = vmatpush.bf16.xpose.msra.mxu0 0
      %1592 = vmatpush.bf16.xpose.msra.mxu0 0
      %1593 = vmatpush.bf16.xpose.msra.mxu0 0
      %1594 = vmatpush.bf16.xpose.msra.mxu0 %v1585
      %1595 = vmatmul.bf16.gmra.mxu0 %v1582
      %v1596 = vpop.f32.mrf.mxu0
      %v1597 = vadd.f32 0.0, %v1596
      %v1598 = vpop.f32.mrf.mxu0
      %1599 = vdwg.mxu0
      %v1600 = vmul.f32 %v1464, 0.5
      %v1601 = vmul.f32 %v1483, 0.5
      %v1602 = vmul.f32 %v1502, 0.5
      %v1603 = vmul.f32 %v1521, 0.5
      %v1604 = vmul.f32 %v1540, 0.5
      %v1605 = vmul.f32 %v1559, 0.5
      %v1606 = vmul.f32 %v1578, 0.5
      %v1607 = vmul.f32 %v1597, 0.5
      %v1609 = vperm.slane %v1430, 0
      %v1611 = vadd.f32 %v1600, %v1609
      %v1612 = vadd.f32 %v1601, %v1609
      %v1613 = vadd.f32 %v1602, %v1609
      %v1614 = vadd.f32 %v1603, %v1609
      %v1615 = vadd.f32 %v1604, %v1609
      %v1616 = vadd.f32 %v1605, %v1609
      %v1617 = vadd.f32 %v1606, %v1609
      %v1618 = vadd.f32 %v1607, %v1609
      %vm1619 = vcmask 64512
      %v1620 = vsel %vm1619, %v1611, -inf
      %1621 = vmax.xlane.f32.xlu0 %v1620
      %v1622 = vpop.xlane.xlu0 %1621
      %v1623 = vsel %vm1619, %v1612, -inf
      %1624 = vmax.xlane.f32.xlu0 %v1623
      %v1625 = vpop.xlane.xlu0 %1624
      %v1626 = vsel %vm1619, %v1613, -inf
      %1627 = vmax.xlane.f32.xlu0 %v1626
      %v1628 = vpop.xlane.xlu0 %1627
      %v1629 = vsel %vm1619, %v1614, -inf
      %1630 = vmax.xlane.f32.xlu0 %v1629
      %v1631 = vpop.xlane.xlu0 %1630
      %v1632 = vsel %vm1619, %v1615, -inf
      %1633 = vmax.xlane.f32.xlu0 %v1632
      %v1634 = vpop.xlane.xlu0 %1633
      %v1635 = vsel %vm1619, %v1616, -inf
      %1636 = vmax.xlane.f32.xlu0 %v1635
      %v1637 = vpop.xlane.xlu0 %1636
      %v1638 = vsel %vm1619, %v1617, -inf
      %1639 = vmax.xlane.f32.xlu0 %v1638
      %v1640 = vpop.xlane.xlu0 %1639
      %v1641 = vsel %vm1619, %v1618, -inf
      %1642 = vmax.xlane.f32.xlu0 %v1641
      %v1643 = vpop.xlane.xlu0 %1642
      %v1644 = vsub.f32 %v1611, %v1622
      %v1645 = vsub.f32 %v1612, %v1625
      %v1646 = vsub.f32 %v1613, %v1628
      %v1647 = vsub.f32 %v1614, %v1631
      %v1648 = vsub.f32 %v1615, %v1634
      %v1649 = vsub.f32 %v1616, %v1637
      %v1650 = vsub.f32 %v1617, %v1640
      %v1651 = vsub.f32 %v1618, %v1643
      %v1652 = vmul.f32 %v1644, 1.442695
      %v1653 = vpow.pop %v1652
      %v1654 = vmul.f32 %v1645, 1.442695
      %v1655 = vpow.pop %v1654
      %v1656 = vmul.f32 %v1646, 1.442695
      %v1657 = vpow.pop %v1656
      %v1658 = vmul.f32 %v1647, 1.442695
      %v1659 = vpow.pop %v1658
      %v1660 = vmul.f32 %v1648, 1.442695
      %v1661 = vpow.pop %v1660
      %v1662 = vmul.f32 %v1649, 1.442695
      %v1663 = vpow.pop %v1662
      %v1664 = vmul.f32 %v1650, 1.442695
      %v1665 = vpow.pop %v1664
      %v1666 = vmul.f32 %v1651, 1.442695
      %v1667 = vpow.pop %v1666
      %v1668 = vsel %vm1619, %v1653, 0.0
      %1669 = vadd.xlane.f32.xlu0 %v1668
      %v1670 = vpop.xlane.xlu0 %1669
      %v1671 = vsel %vm1619, %v1655, 0.0
      %1672 = vadd.xlane.f32.xlu0 %v1671
      %v1673 = vpop.xlane.xlu0 %1672
      %v1674 = vsel %vm1619, %v1657, 0.0
      %1675 = vadd.xlane.f32.xlu0 %v1674
      %v1676 = vpop.xlane.xlu0 %1675
      %v1677 = vsel %vm1619, %v1659, 0.0
      %1678 = vadd.xlane.f32.xlu0 %v1677
      %v1679 = vpop.xlane.xlu0 %1678
      %v1680 = vsel %vm1619, %v1661, 0.0
      %1681 = vadd.xlane.f32.xlu0 %v1680
      %v1682 = vpop.xlane.xlu0 %1681
      %v1683 = vsel %vm1619, %v1663, 0.0
      %1684 = vadd.xlane.f32.xlu0 %v1683
      %v1685 = vpop.xlane.xlu0 %1684
      %v1686 = vsel %vm1619, %v1665, 0.0
      %1687 = vadd.xlane.f32.xlu0 %v1686
      %v1688 = vpop.xlane.xlu0 %1687
      %v1689 = vsel %vm1619, %v1667, 0.0
      %1690 = vadd.xlane.f32.xlu0 %v1689
      %v1691 = vpop.xlane.xlu0 %1690
      %v1692 = vrcp.pop %v1670
      %v1693 = vmul.f32 %v1670, %v1692
      %v1694 = vsub.f32 1.0, %v1693
      %v1695 = vmul.f32 %v1692, %v1694
      %v1696 = vadd.f32 %v1692, %v1695
      %vm1697 = vweird.f32 %v1670
      %vm1698 = vweird.f32 %v1692
      %vm1699 = vmor %vm1697, %vm1698
      %v1700 = vsel %vm1699, %v1692, %v1696
      %v1701 = vand.u32 2147483647, %v1670
      %vm1702 = vcmp.eq.f32.partialorder %v1701, 8.507059e+37
      %v1703 = vand.u32 %v1670, 2147483648
      %v1704 = vor.u32 1.1754944e-38, %v1703
      %v1705 = vsel %vm1702, %v1704, %v1700
      %v1706 = vmul.f32 %v1653, %v1705
      %v1707 = vrcp.pop %v1673
      %v1708 = vmul.f32 %v1673, %v1707
      %v1709 = vsub.f32 1.0, %v1708
      %v1710 = vmul.f32 %v1707, %v1709
      %v1711 = vadd.f32 %v1707, %v1710
      %vm1712 = vweird.f32 %v1673
      %vm1713 = vweird.f32 %v1707
      %vm1714 = vmor %vm1712, %vm1713
      %v1715 = vsel %vm1714, %v1707, %v1711
      %v1716 = vand.u32 2147483647, %v1673
      %vm1717 = vcmp.eq.f32.partialorder %v1716, 8.507059e+37
      %v1718 = vand.u32 %v1673, 2147483648
      %v1719 = vor.u32 1.1754944e-38, %v1718
      %v1720 = vsel %vm1717, %v1719, %v1715
      %v1721 = vmul.f32 %v1655, %v1720
      %v1722 = vrcp.pop %v1676
      %v1723 = vmul.f32 %v1676, %v1722
      %v1724 = vsub.f32 1.0, %v1723
      %v1725 = vmul.f32 %v1722, %v1724
      %v1726 = vadd.f32 %v1722, %v1725
      %vm1727 = vweird.f32 %v1676
      %vm1728 = vweird.f32 %v1722
      %vm1729 = vmor %vm1727, %vm1728
      %v1730 = vsel %vm1729, %v1722, %v1726
      %v1731 = vand.u32 2147483647, %v1676
      %vm1732 = vcmp.eq.f32.partialorder %v1731, 8.507059e+37
      %v1733 = vand.u32 %v1676, 2147483648
      %v1734 = vor.u32 1.1754944e-38, %v1733
      %v1735 = vsel %vm1732, %v1734, %v1730
      %v1736 = vmul.f32 %v1657, %v1735
      %v1737 = vrcp.pop %v1679
      %v1738 = vmul.f32 %v1679, %v1737
      %v1739 = vsub.f32 1.0, %v1738
      %v1740 = vmul.f32 %v1737, %v1739
      %v1741 = vadd.f32 %v1737, %v1740
      %vm1742 = vweird.f32 %v1679
      %vm1743 = vweird.f32 %v1737
      %vm1744 = vmor %vm1742, %vm1743
      %v1745 = vsel %vm1744, %v1737, %v1741
      %v1746 = vand.u32 2147483647, %v1679
      %vm1747 = vcmp.eq.f32.partialorder %v1746, 8.507059e+37
      %v1748 = vand.u32 %v1679, 2147483648
      %v1749 = vor.u32 1.1754944e-38, %v1748
      %v1750 = vsel %vm1747, %v1749, %v1745
      %v1751 = vmul.f32 %v1659, %v1750
      %v1752 = vrcp.pop %v1682
      %v1753 = vmul.f32 %v1682, %v1752
      %v1754 = vsub.f32 1.0, %v1753
      %v1755 = vmul.f32 %v1752, %v1754
      %v1756 = vadd.f32 %v1752, %v1755
      %vm1757 = vweird.f32 %v1682
      %vm1758 = vweird.f32 %v1752
      %vm1759 = vmor %vm1757, %vm1758
      %v1760 = vsel %vm1759, %v1752, %v1756
      %v1761 = vand.u32 2147483647, %v1682
      %vm1762 = vcmp.eq.f32.partialorder %v1761, 8.507059e+37
      %v1763 = vand.u32 %v1682, 2147483648
      %v1764 = vor.u32 1.1754944e-38, %v1763
      %v1765 = vsel %vm1762, %v1764, %v1760
      %v1766 = vmul.f32 %v1661, %v1765
      %v1767 = vrcp.pop %v1685
      %v1768 = vmul.f32 %v1685, %v1767
      %v1769 = vsub.f32 1.0, %v1768
      %v1770 = vmul.f32 %v1767, %v1769
      %v1771 = vadd.f32 %v1767, %v1770
      %vm1772 = vweird.f32 %v1685
      %vm1773 = vweird.f32 %v1767
      %vm1774 = vmor %vm1772, %vm1773
      %v1775 = vsel %vm1774, %v1767, %v1771
      %v1776 = vand.u32 2147483647, %v1685
      %vm1777 = vcmp.eq.f32.partialorder %v1776, 8.507059e+37
      %v1778 = vand.u32 %v1685, 2147483648
      %v1779 = vor.u32 1.1754944e-38, %v1778
      %v1780 = vsel %vm1777, %v1779, %v1775
      %v1781 = vmul.f32 %v1663, %v1780
      %v1782 = vrcp.pop %v1688
      %v1783 = vmul.f32 %v1688, %v1782
      %v1784 = vsub.f32 1.0, %v1783
      %v1785 = vmul.f32 %v1782, %v1784
      %v1786 = vadd.f32 %v1782, %v1785
      %vm1787 = vweird.f32 %v1688
      %vm1788 = vweird.f32 %v1782
      %vm1789 = vmor %vm1787, %vm1788
      %v1790 = vsel %vm1789, %v1782, %v1786
      %v1791 = vand.u32 2147483647, %v1688
      %vm1792 = vcmp.eq.f32.partialorder %v1791, 8.507059e+37
      %v1793 = vand.u32 %v1688, 2147483648
      %v1794 = vor.u32 1.1754944e-38, %v1793
      %v1795 = vsel %vm1792, %v1794, %v1790
      %v1796 = vmul.f32 %v1665, %v1795
      %v1797 = vrcp.pop %v1691
      %v1798 = vmul.f32 %v1691, %v1797
      %v1799 = vsub.f32 1.0, %v1798
      %v1800 = vmul.f32 %v1797, %v1799
      %v1801 = vadd.f32 %v1797, %v1800
      %vm1802 = vweird.f32 %v1691
      %vm1803 = vweird.f32 %v1797
      %vm1804 = vmor %vm1802, %vm1803
      %v1805 = vsel %vm1804, %v1797, %v1801
      %v1806 = vand.u32 2147483647, %v1691
      %vm1807 = vcmp.eq.f32.partialorder %v1806, 8.507059e+37
      %v1808 = vand.u32 %v1691, 2147483648
      %v1809 = vor.u32 1.1754944e-38, %v1808
      %v1810 = vsel %vm1807, %v1809, %v1805
      %v1811 = vmul.f32 %v1667, %v1810
      %v1812 = vpack.c.bf16 %v1706, %v1706
      %v1813 = vpack.c.bf16 %v1721, %v1721
      %v1814 = vpack.c.bf16 %v1736, %v1736
      %v1815 = vpack.c.bf16 %v1751, %v1751
      %v1816 = vpack.c.bf16 %v1766, %v1766
      %v1817 = vpack.c.bf16 %v1781, %v1781
      %v1818 = vpack.c.bf16 %v1796, %v1796
      %v1819 = vpack.c.bf16 %v1811, %v1811
      %v1820 = vpack.c.bf16 %v1250, %v1250
      %v1821 = vpack.c.bf16 %v1275, %v1275
      %v1822 = vpack.c.bf16 %v1300, %v1300
      %v1823 = vpack.c.bf16 %v1325, %v1325
      %v1824 = vpack.c.bf16 %v1350, %v1350
      %v1825 = vpack.c.bf16 %v1375, %v1375
      %v1826 = vpack.c.bf16 %v1400, %v1400
      %v1827 = vpack.c.bf16 %v1425, %v1425
      %v1829 = vsel %vm1619, %v1812, 0
      %vm1831 = vcmask 1043456
      %v1833 = vsel %vm1831, %v1820, 0
      %1835 = vmatpush.bf16.msra.mxu0 0
      %1836 = vmatpush.bf16.msra.mxu0 0
      %1837 = vmatpush.bf16.msra.mxu0 0
      %1838 = vmatpush.bf16.msra.mxu0 0
      %1839 = vmatpush.bf16.msra.mxu0 0
      %1840 = vmatpush.bf16.msra.mxu0 0
      %1841 = vmatpush.bf16.msra.mxu0 0
      %1842 = vmatpush.bf16.msra.mxu0 %v1833
      %1843 = vmatmul.bf16.gmra.mxu0 %v1829
      %v1844 = vpop.f32.mrf.mxu0
      %v1845 = vadd.f32 0.0, %v1844
      %v1846 = vpop.f32.mrf.mxu0
      %1847 = vdwg.mxu0
      %v1849 = vsel %vm1619, %v1813, 0
      %v1852 = vsel %vm1831, %v1821, 0
      %1854 = vmatpush.bf16.msra.mxu0 0
      %1855 = vmatpush.bf16.msra.mxu0 0
      %1856 = vmatpush.bf16.msra.mxu0 0
      %1857 = vmatpush.bf16.msra.mxu0 0
      %1858 = vmatpush.bf16.msra.mxu0 0
      %1859 = vmatpush.bf16.msra.mxu0 0
      %1860 = vmatpush.bf16.msra.mxu0 0
      %1861 = vmatpush.bf16.msra.mxu0 %v1852
      %1862 = vmatmul.bf16.gmra.mxu0 %v1849
      %v1863 = vpop.f32.mrf.mxu0
      %v1864 = vadd.f32 0.0, %v1863
      %v1865 = vpop.f32.mrf.mxu0
      %1866 = vdwg.mxu0
      %v1868 = vsel %vm1619, %v1814, 0
      %v1871 = vsel %vm1831, %v1822, 0
      %1873 = vmatpush.bf16.msra.mxu0 0
      %1874 = vmatpush.bf16.msra.mxu0 0
      %1875 = vmatpush.bf16.msra.mxu0 0
      %1876 = vmatpush.bf16.msra.mxu0 0
      %1877 = vmatpush.bf16.msra.mxu0 0
      %1878 = vmatpush.bf16.msra.mxu0 0
      %1879 = vmatpush.bf16.msra.mxu0 0
      %1880 = vmatpush.bf16.msra.mxu0 %v1871
      %1881 = vmatmul.bf16.gmra.mxu0 %v1868
      %v1882 = vpop.f32.mrf.mxu0
      %v1883 = vadd.f32 0.0, %v1882
      %v1884 = vpop.f32.mrf.mxu0
      %1885 = vdwg.mxu0
      %v1887 = vsel %vm1619, %v1815, 0
      %v1890 = vsel %vm1831, %v1823, 0
      %1892 = vmatpush.bf16.msra.mxu0 0
      %1893 = vmatpush.bf16.msra.mxu0 0
      %1894 = vmatpush.bf16.msra.mxu0 0
      %1895 = vmatpush.bf16.msra.mxu0 0
      %1896 = vmatpush.bf16.msra.mxu0 0
      %1897 = vmatpush.bf16.msra.mxu0 0
      %1898 = vmatpush.bf16.msra.mxu0 0
      %1899 = vmatpush.bf16.msra.mxu0 %v1890
      %1900 = vmatmul.bf16.gmra.mxu0 %v1887
      %v1901 = vpop.f32.mrf.mxu0
      %v1902 = vadd.f32 0.0, %v1901
      %v1903 = vpop.f32.mrf.mxu0
      %1904 = vdwg.mxu0
      %v1906 = vsel %vm1619, %v1816, 0
      %v1909 = vsel %vm1831, %v1824, 0
      %1911 = vmatpush.bf16.msra.mxu0 0
      %1912 = vmatpush.bf16.msra.mxu0 0
      %1913 = vmatpush.bf16.msra.mxu0 0
      %1914 = vmatpush.bf16.msra.mxu0 0
      %1915 = vmatpush.bf16.msra.mxu0 0
      %1916 = vmatpush.bf16.msra.mxu0 0
      %1917 = vmatpush.bf16.msra.mxu0 0
      %1918 = vmatpush.bf16.msra.mxu0 %v1909
      %1919 = vmatmul.bf16.gmra.mxu0 %v1906
      %v1920 = vpop.f32.mrf.mxu0
      %v1921 = vadd.f32 0.0, %v1920
      %v1922 = vpop.f32.mrf.mxu0
      %1923 = vdwg.mxu0
      %v1925 = vsel %vm1619, %v1817, 0
      %v1928 = vsel %vm1831, %v1825, 0
      %1930 = vmatpush.bf16.msra.mxu0 0
      %1931 = vmatpush.bf16.msra.mxu0 0
      %1932 = vmatpush.bf16.msra.mxu0 0
      %1933 = vmatpush.bf16.msra.mxu0 0
      %1934 = vmatpush.bf16.msra.mxu0 0
      %1935 = vmatpush.bf16.msra.mxu0 0
      %1936 = vmatpush.bf16.msra.mxu0 0
      %1937 = vmatpush.bf16.msra.mxu0 %v1928
      %1938 = vmatmul.bf16.gmra.mxu0 %v1925
      %v1939 = vpop.f32.mrf.mxu0
      %v1940 = vadd.f32 0.0, %v1939
      %v1941 = vpop.f32.mrf.mxu0
      %1942 = vdwg.mxu0
      %v1944 = vsel %vm1619, %v1818, 0
      %v1947 = vsel %vm1831, %v1826, 0
      %1949 = vmatpush.bf16.msra.mxu0 0
      %1950 = vmatpush.bf16.msra.mxu0 0
      %1951 = vmatpush.bf16.msra.mxu0 0
      %1952 = vmatpush.bf16.msra.mxu0 0
      %1953 = vmatpush.bf16.msra.mxu0 0
      %1954 = vmatpush.bf16.msra.mxu0 0
      %1955 = vmatpush.bf16.msra.mxu0 0
      %1956 = vmatpush.bf16.msra.mxu0 %v1947
      %1957 = vmatmul.bf16.gmra.mxu0 %v1944
      %v1958 = vpop.f32.mrf.mxu0
      %v1959 = vadd.f32 0.0, %v1958
      %v1960 = vpop.f32.mrf.mxu0
      %1961 = vdwg.mxu0
      %v1963 = vsel %vm1619, %v1819, 0
      %v1966 = vsel %vm1831, %v1827, 0
      %1968 = vmatpush.bf16.msra.mxu0 0
      %1969 = vmatpush.bf16.msra.mxu0 0
      %1970 = vmatpush.bf16.msra.mxu0 0
      %1971 = vmatpush.bf16.msra.mxu0 0
      %1972 = vmatpush.bf16.msra.mxu0 0
      %1973 = vmatpush.bf16.msra.mxu0 0
      %1974 = vmatpush.bf16.msra.mxu0 0
      %1975 = vmatpush.bf16.msra.mxu0 %v1966
      %1976 = vmatmul.bf16.gmra.mxu0 %v1963
      %v1977 = vpop.f32.mrf.mxu0
      %v1978 = vadd.f32 0.0, %v1977
      %v1979 = vpop.f32.mrf.mxu0
      %1980 = vdwg.mxu0
      %v1981 = vpack.c.bf16 %v1845, %v1845
      %v1982 = vpack.c.bf16 %v1864, %v1864
      %v1983 = vpack.c.bf16 %v1883, %v1883
      %v1984 = vpack.c.bf16 %v1902, %v1902
      %v1985 = vpack.c.bf16 %v1921, %v1921
      %v1986 = vpack.c.bf16 %v1940, %v1940
      %v1987 = vpack.c.bf16 %v1959, %v1959
      %v1988 = vpack.c.bf16 %v1978, %v1978
      %v1989 = vld [vmem:[%s9] sm:$0x3]
      %v1990 = vld [vmem:[%s9 + $0x2] sm:$0x3]
      %v1991 = vld [vmem:[%s9 + $0x4] sm:$0x3]
      %v1992 = vld [vmem:[%s9 + $0x6] sm:$0x3]
      %v1993 = vld [vmem:[%s9 + $0x8] sm:$0x3]
      %v1994 = vld [vmem:[%s9 + $0xa] sm:$0x3]
      %v1995 = vld [vmem:[%s9 + $0xc] sm:$0x3]
      %v1996 = vld [vmem:[%s9 + $0xe] sm:$0x3]
      %v1998 = vsel %vm1447, %v1981, 0
      %vm2000 = vcmask 1041408
      %v2002 = vsel %vm2000, %v1989, 0
      %2004 = vmatpush.bf16.msra.mxu0 0
      %2005 = vmatpush.bf16.msra.mxu0 0
      %2006 = vmatpush.bf16.msra.mxu0 0
      %2007 = vmatpush.bf16.msra.mxu0 0
      %2008 = vmatpush.bf16.msra.mxu0 0
      %2009 = vmatpush.bf16.msra.mxu0 0
      %2010 = vmatpush.bf16.msra.mxu0 0
      %2011 = vmatpush.bf16.msra.mxu0 %v2002
      %2012 = vmatmul.bf16.gmra.mxu0 %v1998
      %v2013 = vpop.f32.mrf.mxu0
      %v2014 = vadd.f32 0.0, %v2013
      %v2015 = vpop.f32.mrf.mxu0
      %2016 = vdwg.mxu0
      %v2018 = vsel %vm1447, %v1982, 0
      %v2021 = vsel %vm2000, %v1990, 0
      %2023 = vmatpush.bf16.msra.mxu0 0
      %2024 = vmatpush.bf16.msra.mxu0 0
      %2025 = vmatpush.bf16.msra.mxu0 0
      %2026 = vmatpush.bf16.msra.mxu0 0
      %2027 = vmatpush.bf16.msra.mxu0 0
      %2028 = vmatpush.bf16.msra.mxu0 0
      %2029 = vmatpush.bf16.msra.mxu0 0
      %2030 = vmatpush.bf16.msra.mxu0 %v2021
      %2031 = vmatmul.bf16.gmra.mxu0 %v2018
      %v2032 = vpop.f32.mrf.mxu0
      %v2033 = vadd.f32 0.0, %v2032
      %v2034 = vpop.f32.mrf.mxu0
      %2035 = vdwg.mxu0
      %v2037 = vsel %vm1447, %v1983, 0
      %v2040 = vsel %vm2000, %v1991, 0
      %2042 = vmatpush.bf16.msra.mxu0 0
      %2043 = vmatpush.bf16.msra.mxu0 0
      %2044 = vmatpush.bf16.msra.mxu0 0
      %2045 = vmatpush.bf16.msra.mxu0 0
      %2046 = vmatpush.bf16.msra.mxu0 0
      %2047 = vmatpush.bf16.msra.mxu0 0
      %2048 = vmatpush.bf16.msra.mxu0 0
      %2049 = vmatpush.bf16.msra.mxu0 %v2040
      %2050 = vmatmul.bf16.gmra.mxu0 %v2037
      %v2051 = vpop.f32.mrf.mxu0
      %v2052 = vadd.f32 0.0, %v2051
      %v2053 = vpop.f32.mrf.mxu0
      %2054 = vdwg.mxu0
      %v2056 = vsel %vm1447, %v1984, 0
      %v2059 = vsel %vm2000, %v1992, 0
      %2061 = vmatpush.bf16.msra.mxu0 0
      %2062 = vmatpush.bf16.msra.mxu0 0
      %2063 = vmatpush.bf16.msra.mxu0 0
      %2064 = vmatpush.bf16.msra.mxu0 0
      %2065 = vmatpush.bf16.msra.mxu0 0
      %2066 = vmatpush.bf16.msra.mxu0 0
      %2067 = vmatpush.bf16.msra.mxu0 0
      %2068 = vmatpush.bf16.msra.mxu0 %v2059
      %2069 = vmatmul.bf16.gmra.mxu0 %v2056
      %v2070 = vpop.f32.mrf.mxu0
      %v2071 = vadd.f32 0.0, %v2070
      %v2072 = vpop.f32.mrf.mxu0
      %2073 = vdwg.mxu0
      %v2075 = vsel %vm1447, %v1985, 0
      %v2078 = vsel %vm2000, %v1993, 0
      %2080 = vmatpush.bf16.msra.mxu0 0
      %2081 = vmatpush.bf16.msra.mxu0 0
      %2082 = vmatpush.bf16.msra.mxu0 0
      %2083 = vmatpush.bf16.msra.mxu0 0
      %2084 = vmatpush.bf16.msra.mxu0 0
      %2085 = vmatpush.bf16.msra.mxu0 0
      %2086 = vmatpush.bf16.msra.mxu0 0
      %2087 = vmatpush.bf16.msra.mxu0 %v2078
      %2088 = vmatmul.bf16.gmra.mxu0 %v2075
      %v2089 = vpop.f32.mrf.mxu0
      %v2090 = vadd.f32 0.0, %v2089
      %v2091 = vpop.f32.mrf.mxu0
      %2092 = vdwg.mxu0
      %v2094 = vsel %vm1447, %v1986, 0
      %v2097 = vsel %vm2000, %v1994, 0
      %2099 = vmatpush.bf16.msra.mxu0 0
      %2100 = vmatpush.bf16.msra.mxu0 0
      %2101 = vmatpush.bf16.msra.mxu0 0
      %2102 = vmatpush.bf16.msra.mxu0 0
      %2103 = vmatpush.bf16.msra.mxu0 0
      %2104 = vmatpush.bf16.msra.mxu0 0
      %2105 = vmatpush.bf16.msra.mxu0 0
      %2106 = vmatpush.bf16.msra.mxu0 %v2097
      %2107 = vmatmul.bf16.gmra.mxu0 %v2094
      %v2108 = vpop.f32.mrf.mxu0
      %v2109 = vadd.f32 0.0, %v2108
      %v2110 = vpop.f32.mrf.mxu0
      %2111 = vdwg.mxu0
      %v2113 = vsel %vm1447, %v1987, 0
      %v2116 = vsel %vm2000, %v1995, 0
      %2118 = vmatpush.bf16.msra.mxu0 0
      %2119 = vmatpush.bf16.msra.mxu0 0
      %2120 = vmatpush.bf16.msra.mxu0 0
      %2121 = vmatpush.bf16.msra.mxu0 0
      %2122 = vmatpush.bf16.msra.mxu0 0
      %2123 = vmatpush.bf16.msra.mxu0 0
      %2124 = vmatpush.bf16.msra.mxu0 0
      %2125 = vmatpush.bf16.msra.mxu0 %v2116
      %2126 = vmatmul.bf16.gmra.mxu0 %v2113
      %v2127 = vpop.f32.mrf.mxu0
      %v2128 = vadd.f32 0.0, %v2127
      %v2129 = vpop.f32.mrf.mxu0
      %2130 = vdwg.mxu0
      %v2132 = vsel %vm1447, %v1988, 0
      %v2135 = vsel %vm2000, %v1996, 0
      %2137 = vmatpush.bf16.msra.mxu0 0
      %2138 = vmatpush.bf16.msra.mxu0 0
      %2139 = vmatpush.bf16.msra.mxu0 0
      %2140 = vmatpush.bf16.msra.mxu0 0
      %2141 = vmatpush.bf16.msra.mxu0 0
      %2142 = vmatpush.bf16.msra.mxu0 0
      %2143 = vmatpush.bf16.msra.mxu0 0
      %2144 = vmatpush.bf16.msra.mxu0 %v2135
      %2145 = vmatmul.bf16.gmra.mxu0 %v2132
      %v2146 = vpop.f32.mrf.mxu0
      %v2147 = vadd.f32 0.0, %v2146
      %v2148 = vpop.f32.mrf.mxu0
      %2149 = vdwg.mxu0
      %v2150 = vsel %vm708, %v2014, 0.0
      %v2151 = vsel %vm708, %v2033, 0.0
      %v2152 = vadd.f32 %v2150, %v2151
      %v2153 = vsel %vm708, %v2052, 0.0
      %v2154 = vadd.f32 %v2152, %v2153
      %v2155 = vsel %vm708, %v2071, 0.0
      %v2156 = vadd.f32 %v2154, %v2155
      %v2157 = vsel %vm708, %v2090, 0.0
      %v2158 = vadd.f32 %v2156, %v2157
      %v2159 = vsel %vm708, %v2109, 0.0
      %v2160 = vadd.f32 %v2158, %v2159
      %v2161 = vsel %vm708, %v2128, 0.0
      %v2162 = vadd.f32 %v2160, %v2161
      %v2163 = vsel %vm708, %v2147, 0.0
      %v2164 = vadd.f32 %v2162, %v2163
      %v2165 = vld [vmem:[%s10] sm:$0x1]
      %v2167 = vperm.slane %v2165, 0
      %v2169 = vadd.f32 %v2164, %v2167
      %v2170 = vadd.f32 %v630, %v2169
      %v2171 = vld [vmem:[%s11] sm:$0x1]
      %v2172 = vld [vmem:[%s12] sm:$0x1]
      %v2173 = vsel %vm708, %v2170, 0.0
      %2174 = vadd.xlane.f32.xlu0 %v2173
      %v2175 = vpop.xlane.xlu0 %2174
      %v2176 = vrcp.pop 32.0
      %v2177 = vmul.f32 32.0, %v2176
      %v2178 = vsub.f32 1.0, %v2177
      %v2179 = vmul.f32 %v2176, %v2178
      %v2180 = vadd.f32 %v2176, %v2179
      %vm2181 = vweird.f32 %v2176
      %v2182 = vsel %vm2181, %v2176, %v2180
      %v2183 = vmul.f32 %v2175, %v2182
      %v2184 = vsub.f32 %v2170, %v2183
      %v2185 = vmul.f32 %v2184, %v2184
      %v2186 = vsel %vm708, %v2185, 0.0
      %2187 = vadd.xlane.f32.xlu0 %v2186
      %v2188 = vpop.xlane.xlu0 %2187
      %v2189 = vmul.f32 %v2188, %v2182
      %v2190 = vadd.f32 %v2189, 1e-05
      %v2191 = vrsqrt.pop %v2190
      %v2192 = vmul.f32 %v2191, %v2190
      %v2193 = vmul.f32 %v2192, %v2191
      %v2194 = vmul.f32 0.5, %v2193
      %v2195 = vsub.f32 1.5, %v2194
      %v2196 = vmul.f32 %v2191, %v2195
      %vm2197 = vweird.f32 %v2190
      %vm2198 = vweird.f32 %v2191
      %vm2199 = vmor %vm2197, %vm2198
      %v2200 = vsel %vm2199, %v2191, %v2196
      %v2201 = vmul.f32 %v2184, %v2200
      %v2203 = vperm.slane %v2171, 0
      %v2205 = vmul.f32 %v2201, %v2203
      %v2207 = vperm.slane %v2172, 0
      %v2209 = vadd.f32 %v2205, %v2207
      %v2210 = vpack.c.bf16 %v2209, %v2209
      %v2211 = vld [vmem:[%s13] sm:$0xf]
      %v2212 = vld [vmem:[%s13 + $0x4] sm:$0xf]
      %v2213 = vld [vmem:[%s13 + $0x8] sm:$0xf]
      %v2214 = vld [vmem:[%s13 + $0xc] sm:$0xf]
      %v2215 = vld [vmem:[%s14] sm:$0x1]
      %v2217 = vperm.slane %v2215, 0
      %v2223 = vunpack.c.l.b16 %v2211
      %v2224 = vunpack.c.l.b16 %v2212
      %v2225 = vunpack.c.l.b16 %v2213
      %v2226 = vunpack.c.l.b16 %v2214
      %v2227 = vpack.c.b16 %v2224, %v2223
      %v2228 = vpack.c.b16 %v2226, %v2225
      %v2232 = vsel %vm708, %v2210, 0
      %2234 = vmatpush.bf16.msra.mxu0 0
      %2235 = vmatpush.bf16.msra.mxu0 0
      %2236 = vmatpush.bf16.msra.mxu0 0
      %2237 = vmatpush.bf16.msra.mxu0 0
      %2238 = vmatpush.bf16.msra.mxu0 0
      %2239 = vmatpush.bf16.msra.mxu0 0
      %2240 = vmatpush.bf16.msra.mxu0 %v2228
      %2241 = vmatpush.bf16.msra.mxu0 %v2227
      %2242 = vmatmul.bf16.gmra.mxu0 %v2232
      %v2243 = vpop.f32.mrf.mxu0
      %v2244 = vadd.f32 %v2217, %v2243
      %v2245 = vpop.f32.mrf.mxu0
      %2246 = vdwg.mxu0
      %v2247 = vmul.f32 %v2244, %v2244
      %v2248 = vmul.f32 %v2244, %v2247
      %v2249 = vmul.f32 %v2248, 0.044715
      %v2250 = vadd.f32 %v2244, %v2249
      %v2251 = vmul.f32 %v2250, 0.7978846
      %v2252 = vtanh.pop %v2251
      %v2253 = vadd.f32 %v2252, 1.0
      %v2254 = vmul.f32 %v2253, 0.5
      %v2255 = vmul.f32 %v2244, %v2254
      %v2256 = vpack.c.bf16 %v2255, %v2255
      %v2257 = vld [vmem:[%s15] sm:$0xf]
      %v2258 = vld [vmem:[%s15 + $0x4] sm:$0xf]
      %v2259 = vld [vmem:[%s15 + $0x8] sm:$0xf]
      %v2260 = vld [vmem:[%s15 + $0xc] sm:$0xf]
      %v2261 = vld [vmem:[%s15 + $0x10] sm:$0xf]
      %v2262 = vld [vmem:[%s15 + $0x14] sm:$0xf]
      %v2263 = vld [vmem:[%s15 + $0x18] sm:$0xf]
      %v2264 = vld [vmem:[%s15 + $0x1c] sm:$0xf]
      %v2265 = vld [vmem:[%s16] sm:$0x1]
      %v2267 = vperm.slane %v2265, 0
      %v2277 = vunpack.c.l.b16 %v2257
      %v2278 = vunpack.c.l.b16 %v2258
      %v2279 = vunpack.c.l.b16 %v2259
      %v2280 = vunpack.c.l.b16 %v2260
      %v2281 = vunpack.c.l.b16 %v2261
      %v2282 = vunpack.c.l.b16 %v2262
      %v2283 = vunpack.c.l.b16 %v2263
      %v2284 = vunpack.c.l.b16 %v2264
      %v2285 = vpack.c.b16 %v2278, %v2277
      %v2286 = vpack.c.b16 %v2280, %v2279
      %v2287 = vpack.c.b16 %v2282, %v2281
      %v2288 = vpack.c.b16 %v2284, %v2283
      %vm2293 = vcmask 523264
      %v2295 = vsel %vm2293, %v2256, 0
      %2297 = vmatpush.bf16.msra.mxu0 0
      %2298 = vmatpush.bf16.msra.mxu0 0
      %2299 = vmatpush.bf16.msra.mxu0 0
      %2300 = vmatpush.bf16.msra.mxu0 0
      %2301 = vmatpush.bf16.msra.mxu0 %v2288
      %2302 = vmatpush.bf16.msra.mxu0 %v2287
      %2303 = vmatpush.bf16.msra.mxu0 %v2286
      %2304 = vmatpush.bf16.msra.mxu0 %v2285
      %2305 = vmatmul.bf16.gmra.mxu0 %v2295
      %v2306 = vpop.f32.mrf.mxu0
      %v2307 = vadd.f32 %v2267, %v2306
      %v2308 = vpop.f32.mrf.mxu0
      %2309 = vdwg.mxu0
      %v2310 = vadd.f32 %v2209, %v2307
      %v2311 = vld [vmem:[%s17] sm:$0x1]
      %v2312 = vld [vmem:[%s18] sm:$0x1]
      %v2313 = vsel %vm708, %v2310, 0.0
      %2314 = vadd.xlane.f32.xlu0 %v2313
      %v2315 = vpop.xlane.xlu0 %2314
      %v2316 = vmul.f32 %v2315, %v2182
      %v2317 = vsub.f32 %v2310, %v2316
      %v2318 = vmul.f32 %v2317, %v2317
      %v2319 = vsel %vm708, %v2318, 0.0
      %2320 = vadd.xlane.f32.xlu0 %v2319
      %v2321 = vpop.xlane.xlu0 %2320
      %v2322 = vmul.f32 %v2321, %v2182
      %v2323 = vadd.f32 %v2322, 1e-05
      %v2324 = vrsqrt.pop %v2323
      %v2325 = vmul.f32 %v2324, %v2323
      %v2326 = vmul.f32 %v2325, %v2324
      %v2327 = vmul.f32 0.5, %v2326
      %v2328 = vsub.f32 1.5, %v2327
      %v2329 = vmul.f32 %v2324, %v2328
      %vm2330 = vweird.f32 %v2323
      %vm2331 = vweird.f32 %v2324
      %vm2332 = vmor %vm2330, %vm2331
      %v2333 = vsel %vm2332, %v2324, %v2329
      %v2334 = vmul.f32 %v2317, %v2333
      %v2336 = vperm.slane %v2311, 0
      %v2338 = vmul.f32 %v2334, %v2336
      %v2340 = vperm.slane %v2312, 0
      %v2342 = vadd.f32 %v2338, %v2340
      %v2343 = vmul.f32 %v2342, %v2342
      %v2344 = vmul.f32 %v2342, %v2343
      %v2345 = vmul.f32 %v2344, 0.044715
      %v2346 = vadd.f32 %v2342, %v2345
      %v2347 = vmul.f32 %v2346, 0.7978846
      %v2348 = vtanh.pop %v2347
      %v2349 = vadd.f32 %v2348, 1.0
      %v2350 = vmul.f32 %v2349, 0.5
      %v2351 = vmul.f32 %v2342, %v2350
      %v2352 = vld [vmem:[%s624] sm:$0xff]
      %2354 = vset.pattern.permute.xlu0 0
      %2355 = vperm.xlu0 %2354, %v2352
      %v2356 = vpop.permute.xlu0 %2355
      %v2358 = vmul.f32 %v2351, %v2356
      %2359 = vst.msk [vmem:[%s628] sm:$0xff] %vm708, %v2358
      %p2360 = scmp.lt.s32.totalorder %s30, 1
      %s2361 = scalar_select %p2360, %s30, 1
      %s2362 = smul.addr %s2361, 8
      %s2363 = scalar_lea.vmem %s19, %s2362
      // Predicated region
      $region97: #{forward.6} parent=95 // pred_check
        %p2364 = pneg %p462
      $region98: #{forward.6} parent=95 // pred_check_branch
        %2366 = sbr.rel (%p2364) target = $region100
      $region99: #{forward.6} parent=95 // pred_region
        _
      $region100: #{forward.6} parent=95 // pred_fallthru
        _
    $region96: #{forward.6} parent=5 // pred_fallthru
      _
    %p2367 = scmp.le.s32.totalorder 2, %s25
    // Predicated region
    $region101: #{forward.6} parent=5 // pred_check
      %p2368 = pneg %p2367
    $region102: #{forward.6} parent=5 // pred_check_branch
      %2370 = sbr.rel (%p2368) target = $region104
    $region103: #{forward.6} parent=5 // pred_region
      %s2371 = ssub.s32 %s25, 2
      // Predicated region
      $region105: #{forward.6} parent=103 // pred_check
        %p2372 = pneg %p468
      $region106: #{forward.6} parent=103 // pred_check_branch
        %2374 = sbr.rel (%p2372) target = $region108
      $region107: #{forward.6} parent=103 // pred_region
        %p2375 = scmp.lt.s32.totalorder %s31, 1
        %s2376 = scalar_select %p2375, %s31, 1
        %s2377 = smul.addr %s2376, 8
        %s2378 = scalar_lea.vmem %s19, %s2377
      $region108: #{forward.6} parent=103 // pred_fallthru
        _
    $region104: #{forward.6} parent=5 // pred_fallthru
      _
  $region6: #{forward.6} parent=0 // loop_footer
    %s29 = sadd.s32 1, %s25
  $region7: #{forward.6} parent=0 // loop_footer_branch
    %24 = sbr.rel target = $region3
  $region8: #{forward.6} parent=0 // loop_exit
    _

</llo_original>
